<compile_context>
chip_gen: v7x
topology: tpu7x:2x2x1
jax: 0.10.0
libtpu: 0.0.40
codegen_flags: <defaults>
</compile_context>

<pallas_src>
import functools
import math

import jax
import jax.numpy as jnp
from jax.experimental import pallas as pl
from jax.experimental.pallas import tpu as pltpu


def _round_up(v, m):
    return ((v + m - 1) // m) * m


def _gcn_kernel(a_ref, x_ref, w_ref, o_ref, acc_ref, *, support_len, order):
    """One batch tile of the diffusion graph conv, projection fused per chunk.

    a_ref:   (S, N_pad, N_pad)           supports (constant index map -> resident)
    x_ref:   (N_pad, BT*F_pad)           batch-stacked features for this tile
    w_ref:   (C, BT*F_pad, BT*O_pad)     per-chunk block-diagonal projection weights
    o_ref:   (N_pad, BT*O_pad)           output tile
    acc_ref: (N_pad, BT*O_pad) f32       VMEM scratch accumulator
    """
    xs = x_ref[...]                          # (N_pad, BT*F_pad), compute dtype (bf16)
    chunk = 0
    for s in range(support_len):
        a = a_ref[s]                         # (N_pad, N_pad)
        cur = xs
        for _ in range(order):
            # Batch-stacked diffusion hop: one lane-dense MXU matmul for the whole tile
            # (f32 accumulation, rounded to the compute dtype for the next hop, matching
            # the bf16 reference numerics).
            cur = jnp.dot(a, cur, preferred_element_type=jnp.float32).astype(xs.dtype)
            # Fused projection: block-diagonal weight turns BT small (N,F)@(F,O) matmuls
            # into a single (N, BT*F)@(BT*F, BT*O) MXU pass, accumulated in f32 scratch.
            contrib = jnp.dot(cur, w_ref[chunk], preferred_element_type=jnp.float32)
            if chunk == 0:
                acc_ref[...] = contrib
            else:
                acc_ref[...] += contrib
            chunk += 1
    o_ref[...] = acc_ref[...].astype(o_ref.dtype)


def _plan_tiles(B, F, O_pad, max_lanes=256, max_out_lanes=512, max_pad_ratio=2.0):
    """Pick (batch_tile, F_pad).

    Prefers a >=2-step grid (v7x dual TensorCore + DMA pipelining) with 128-aligned
    x-tile lanes, as long as feature zero-padding does not inflate the diffusion matmul
    by more than `max_pad_ratio`; bounds lane widths so the block-diagonal weight and
    accumulator stay modest.
    """
    best = None
    for bt in range(1, B + 1):
        if B % bt:
            continue
        if bt == B:
            f_pad = F                                  # full-extent block is always legal
        else:
            unit = 128 // math.gcd(bt, 128)            # smallest F_pad with bt*F_pad % 128 == 0
            f_pad = _round_up(F, unit)
        lanes = bt * f_pad
        grid = B // bt
        waste = f_pad / F
        if bt not in (1, B) and (lanes > max_lanes or bt * O_pad > max_out_lanes):
            continue
        key = (grid < 2 or waste > max_pad_ratio,      # prefer multi-step grid, bounded waste
               waste,                                  # then minimal padded FLOPs
               -lanes)                                 # then widest tile (fewest steps)
        if best is None or key < best[0]:
            best = (key, bt, f_pad)
    return best[1], best[2]


def _vmem_limit_bytes(footprint_bytes):
    """Scoped-VMEM limit from the actual kernel footprint + headroom, clamped to the part."""
    try:
        phys = int(pltpu.get_tpu_info().vmem_capacity_bytes)
    except Exception:
        phys = 64 * 1024 * 1024                        # assume the smallest (v7x) part
    want = int(footprint_bytes * 1.5) + (4 << 20)      # Mosaic-internal scratch headroom
    want = max(want, 32 << 20)
    return int(min(want, (phys * 3) // 4))


def gcn_conv(x, support, w_t, *, order, compute_dtype=jnp.bfloat16, batch_tile=None):
    """Diffusion GCN forward.

    x:       [B, N, F]        node features
    support: [S, N, N]        diffusion/adjacency matrices
    w_t:     [S*order*F, O]   nn.Linear(S*order*F, O, bias=False) weight, transposed
    returns  [B, N, O]
    """
    B, N, F = x.shape
    S = support.shape[0]
    K, O = w_t.shape
    C = S * order
    assert K == C * F, "weight in_dim must equal support_len*order*in_dim"

    O_pad = _round_up(O, 128)        # lane-dense output -> unmasked stores
    N_pad = _round_up(N, 16)         # full sublane tiles (bf16 packs 16 rows per vreg)

    if batch_tile is None:
        BT, F_pad = _plan_tiles(B, F, O_pad)
    else:
        BT = batch_tile
        assert B % BT == 0
        F_pad = F if BT == B else _round_up(F, 128 // math.gcd(BT, 128))
    G = B // BT

    # ---- wrapper-side layout: cast once, zero-pad (mathematically exact), batch-stack ----
    sc = jnp.pad(support.astype(compute_dtype),
                 ((0, 0), (0, N_pad - N), (0, N_pad - N)))               # (S, N_pad, N_pad)
    xs = jnp.transpose(x, (1, 0, 2)).astype(compute_dtype)               # (N, B, F)
    xs = jnp.pad(xs, ((0, N_pad - N), (0, 0), (0, F_pad - F)))
    xs = xs.reshape(N_pad, B * F_pad)                                    # (batch, feat) lanes
    wck = jnp.pad(w_t.astype(compute_dtype).reshape(C, F, O),
                  ((0, 0), (0, F_pad - F), (0, O_pad - O)))              # (C, F_pad, O_pad)
    wbd = jnp.einsum("cfo,bd->cbfdo", wck, jnp.eye(BT, dtype=compute_dtype))
    wbd = wbd.reshape(C, BT * F_pad, BT * O_pad)                         # block-diagonal

    # ---- cost / VMEM planning -------------------------------------------------------------
    cb = jnp.dtype(compute_dtype).itemsize
    ob = jnp.dtype(x.dtype).itemsize
    footprint = (S * N_pad * N_pad * cb                  # supports (single-buffered)
                 + C * BT * F_pad * BT * O_pad * cb      # block-diag weights (single-buffered)
                 + 2 * N_pad * BT * F_pad * cb           # x tile (double-buffered)
                 + 2 * N_pad * BT * O_pad * ob           # out tile (double-buffered)
                 + N_pad * BT * O_pad * 4)               # f32 accumulator scratch
    vmem_limit = _vmem_limit_bytes(footprint)
    flops = 2 * G * C * (N_pad * N_pad * BT * F_pad + N_pad * BT * F_pad * BT * O_pad)
    bytes_accessed = (S * N_pad * N_pad * cb + N_pad * B * F_pad * cb
                      + C * BT * F_pad * BT * O_pad * cb + N_pad * B * O_pad * ob)
    try:
        cost = pl.CostEstimate(flops=flops, transcendentals=0, bytes_accessed=bytes_accessed)
    except Exception:
        cost = None

    kernel = functools.partial(_gcn_kernel, support_len=S, order=order)

    def build(single_buffer_constants):
        def const_spec(shape):
            kwargs = {}
            if single_buffer_constants:
                # Constant index map -> DMA'd once; double buffering buys nothing.
                kwargs["pipeline_mode"] = pl.Buffered(1)
            return pl.BlockSpec(shape, lambda *_: (0,) * len(shape), **kwargs)

        return pl.pallas_call(
            kernel,
            out_shape=jax.ShapeDtypeStruct((N_pad, B * O_pad), x.dtype),
            grid=(G,),
            in_specs=[
                const_spec((S, N_pad, N_pad)),                        # supports (resident)
                pl.BlockSpec((N_pad, BT * F_pad), lambda i: (0, i)),  # x batch tile
                const_spec((C, BT * F_pad, BT * O_pad)),              # block-diag weights
            ],
            out_specs=pl.BlockSpec((N_pad, BT * O_pad), lambda i: (0, i)),
            scratch_shapes=[pltpu.VMEM((N_pad, BT * O_pad), jnp.float32)],
            compiler_params=pltpu.CompilerParams(
                dimension_semantics=("parallel",),     # batch tiles shard across TCs
                vmem_limit_bytes=vmem_limit,
            ),
            cost_estimate=cost,
        )

    try:
        out = build(single_buffer_constants=True)(sc, xs, wbd)
    except Exception:
        # Fallback for Pallas builds that reject pipeline_mode=pl.Buffered(1) on inputs.
        out = build(single_buffer_constants=False)(sc, xs, wbd)

    # (N_pad, B*O_pad) -> (B, N, O): drop zero padding, restore batch-major layout.
    out = out.reshape(N_pad, B, O_pad)[:N, :, :O]
    return jnp.transpose(out, (1, 0, 2))


def gcn_conv_ref(x, support, w_t, *, order, compute_dtype=jnp.bfloat16):
    """Pure-JAX reference mirroring the PyTorch forward (eval-mode dropout) with the same
    bf16-input / f32-accumulation numerics as the kernel."""
    xc = x.astype(compute_dtype)
    sc = support.astype(compute_dtype)
    wc = w_t.astype(compute_dtype)
    res = []
    for s in range(support.shape[0]):
        out = xc
        for _ in range(order):
            out = jnp.einsum("nm,bmf->bnf", sc[s], out,
                             preferred_element_type=jnp.float32).astype(compute_dtype)
            res.append(out)
    cat = jnp.concatenate(res, axis=2)                     # (B, N, S*order*F)
    y = jnp.einsum("bnk,ko->bno", cat, wc, preferred_element_type=jnp.float32)
    return y.astype(x.dtype)


if __name__ == "__main__":
    # Small shapes consistent with the module: 8 batches of a 20-node graph, 32 input
    # features, diffusion order 2 over 2 supports, 32 output features.
    B, N, F = 8, 20, 32
    order, support_len = 2, 2
    out_dim = 32
    K = order * support_len * F

    key = jax.random.PRNGKey(0)
    kx, ka, kw = jax.random.split(key, 3)

    x = jax.random.normal(kx, (B, N, F), dtype=jnp.float32)

    # Deterministic row-normalized random "adjacency" supports.
    a_raw = jax.random.uniform(ka, (support_len, N, N), dtype=jnp.float32)
    support = a_raw / jnp.sum(a_raw, axis=-1, keepdims=True)

    # nn.Linear(K, out_dim, bias=False) weight is [out_dim, K]; pass its transpose.
    bound = 1.0 / jnp.sqrt(jnp.float32(K))
    w = jax.random.uniform(kw, (out_dim, K), dtype=jnp.float32, minval=-bound, maxval=bound)
    w_t = w.T

    out = jax.block_until_ready(gcn_conv(x, support, w_t, order=order))
    ref = gcn_conv_ref(x, support, w_t, order=order)

    assert out.shape == (B, N, out_dim)
    err = float(jnp.max(jnp.abs(out - ref)))
    assert jnp.allclose(out, ref, atol=5e-3, rtol=1e-2), f"max abs err {err}"
    print("KERNEL_OK")
</pallas_src>

<mosaic_0001>
module attributes {stable_mosaic.version = 11 : i64} {
  func.func @_gcn_kernel(%arg0: i32, %arg1: memref<2x32x32xbf16, #tpu.memory_space<vmem>>, %arg2: memref<32x128xbf16, #tpu.memory_space<vmem>>, %arg3: memref<4x128x512xbf16, #tpu.memory_space<vmem>>, %arg4: memref<32x512xf32, #tpu.memory_space<vmem>>, %arg5: memref<32x512xf32, #tpu.memory_space<vmem>>) attributes {dimension_semantics = [#tpu.dimension_semantics<parallel>], iteration_bounds = array<i64: 2>, scalar_prefetch = 0 : i64, scratch_operands = 1 : i64, tpu.core_type = #tpu.core_type<tc>, window_params = [{pipeline_mode = #tpu.pipeline_mode<synchronous>, transform_indices = @transform_0, window_bounds = array<i64: 2, 32, 32>}, {transform_indices = @transform_1, window_bounds = array<i64: 32, 128>}, {pipeline_mode = #tpu.pipeline_mode<synchronous>, transform_indices = @transform_2, window_bounds = array<i64: 4, 128, 512>}, {transform_indices = @transform_3, window_bounds = array<i64: 32, 512>}]} {
    %c0 = arith.constant 0 : index
    %c0_0 = arith.constant 0 : index
    %0 = vector.load %arg2[%c0, %c0_0] : memref<32x128xbf16, #tpu.memory_space<vmem>>, vector<32x128xbf16>
    %c0_1 = arith.constant 0 : index
    %c0_2 = arith.constant 0 : index
    %c0_3 = arith.constant 0 : index
    %1 = vector.load %arg1[%c0_1, %c0_2, %c0_3] : memref<2x32x32xbf16, #tpu.memory_space<vmem>>, vector<1x32x32xbf16>
    %2 = vector.shape_cast %1 : vector<1x32x32xbf16> to vector<32x32xbf16>
    %cst = arith.constant dense<0.000000e+00> : vector<32x128xf32>
    %3 = tpu.matmul %2, %0, %cst {dimension_numbers = #tpu.dot_dimension_numbers<[1], [0], [0], [1], [0, 0, 1, 1], [], []>} : vector<32x32xbf16>, vector<32x128xbf16>, vector<32x128xf32> -> vector<32x128xf32>
    %4 = arith.truncf %3 : vector<32x128xf32> to vector<32x128xbf16>
    %c0_4 = arith.constant 0 : index
    %c0_5 = arith.constant 0 : index
    %c0_6 = arith.constant 0 : index
    %5 = vector.load %arg3[%c0_4, %c0_5, %c0_6] : memref<4x128x512xbf16, #tpu.memory_space<vmem>>, vector<1x128x512xbf16>
    %6 = vector.shape_cast %5 : vector<1x128x512xbf16> to vector<128x512xbf16>
    %cst_7 = arith.constant dense<0.000000e+00> : vector<32x512xf32>
    %7 = tpu.matmul %4, %6, %cst_7 {dimension_numbers = #tpu.dot_dimension_numbers<[1], [0], [0], [1], [0, 0, 1, 1], [], []>} : vector<32x128xbf16>, vector<128x512xbf16>, vector<32x512xf32> -> vector<32x512xf32>
    %c0_8 = arith.constant 0 : index
    %c0_9 = arith.constant 0 : index
    %8 = vector.load %arg5[%c0_8, %c0_9] : memref<32x512xf32, #tpu.memory_space<vmem>>, vector<32x512xf32>
    tpu.vector_store %arg5[%c0_8, %c0_9], %7 {strides = array<i32>} : memref<32x512xf32, #tpu.memory_space<vmem>>, vector<32x512xf32>,
    %cst_10 = arith.constant dense<0.000000e+00> : vector<32x128xf32>
    %9 = tpu.matmul %2, %4, %cst_10 {dimension_numbers = #tpu.dot_dimension_numbers<[1], [0], [0], [1], [0, 0, 1, 1], [], []>} : vector<32x32xbf16>, vector<32x128xbf16>, vector<32x128xf32> -> vector<32x128xf32>
    %10 = arith.truncf %9 : vector<32x128xf32> to vector<32x128xbf16>
    %c1 = arith.constant 1 : index
    %c0_11 = arith.constant 0 : index
    %c0_12 = arith.constant 0 : index
    %11 = vector.load %arg3[%c1, %c0_11, %c0_12] : memref<4x128x512xbf16, #tpu.memory_space<vmem>>, vector<1x128x512xbf16>
    %12 = vector.shape_cast %11 : vector<1x128x512xbf16> to vector<128x512xbf16>
    %cst_13 = arith.constant dense<0.000000e+00> : vector<32x512xf32>
    %13 = tpu.matmul %10, %12, %cst_13 {dimension_numbers = #tpu.dot_dimension_numbers<[1], [0], [0], [1], [0, 0, 1, 1], [], []>} : vector<32x128xbf16>, vector<128x512xbf16>, vector<32x512xf32> -> vector<32x512xf32>
    %c0_14 = arith.constant 0 : index
    %c0_15 = arith.constant 0 : index
    %14 = vector.load %arg5[%c0_14, %c0_15] : memref<32x512xf32, #tpu.memory_space<vmem>>, vector<32x512xf32>
    %15 = arith.addf %14, %13 : vector<32x512xf32>
    %c0_16 = arith.constant 0 : index
    %c0_17 = arith.constant 0 : index
    %16 = vector.load %arg5[%c0_16, %c0_17] : memref<32x512xf32, #tpu.memory_space<vmem>>, vector<32x512xf32>
    tpu.vector_store %arg5[%c0_16, %c0_17], %15 {strides = array<i32>} : memref<32x512xf32, #tpu.memory_space<vmem>>, vector<32x512xf32>,
    %c1_18 = arith.constant 1 : index
    %c0_19 = arith.constant 0 : index
    %c0_20 = arith.constant 0 : index
    %17 = vector.load %arg1[%c1_18, %c0_19, %c0_20] : memref<2x32x32xbf16, #tpu.memory_space<vmem>>, vector<1x32x32xbf16>
    %18 = vector.shape_cast %17 : vector<1x32x32xbf16> to vector<32x32xbf16>
    %cst_21 = arith.constant dense<0.000000e+00> : vector<32x128xf32>
    %19 = tpu.matmul %18, %0, %cst_21 {dimension_numbers = #tpu.dot_dimension_numbers<[1], [0], [0], [1], [0, 0, 1, 1], [], []>} : vector<32x32xbf16>, vector<32x128xbf16>, vector<32x128xf32> -> vector<32x128xf32>
    %20 = arith.truncf %19 : vector<32x128xf32> to vector<32x128xbf16>
    %c2 = arith.constant 2 : index
    %c0_22 = arith.constant 0 : index
    %c0_23 = arith.constant 0 : index
    %21 = vector.load %arg3[%c2, %c0_22, %c0_23] : memref<4x128x512xbf16, #tpu.memory_space<vmem>>, vector<1x128x512xbf16>
    %22 = vector.shape_cast %21 : vector<1x128x512xbf16> to vector<128x512xbf16>
    %cst_24 = arith.constant dense<0.000000e+00> : vector<32x512xf32>
    %23 = tpu.matmul %20, %22, %cst_24 {dimension_numbers = #tpu.dot_dimension_numbers<[1], [0], [0], [1], [0, 0, 1, 1], [], []>} : vector<32x128xbf16>, vector<128x512xbf16>, vector<32x512xf32> -> vector<32x512xf32>
    %c0_25 = arith.constant 0 : index
    %c0_26 = arith.constant 0 : index
    %24 = vector.load %arg5[%c0_25, %c0_26] : memref<32x512xf32, #tpu.memory_space<vmem>>, vector<32x512xf32>
    %25 = arith.addf %24, %23 : vector<32x512xf32>
    %c0_27 = arith.constant 0 : index
    %c0_28 = arith.constant 0 : index
    %26 = vector.load %arg5[%c0_27, %c0_28] : memref<32x512xf32, #tpu.memory_space<vmem>>, vector<32x512xf32>
    tpu.vector_store %arg5[%c0_27, %c0_28], %25 {strides = array<i32>} : memref<32x512xf32, #tpu.memory_space<vmem>>, vector<32x512xf32>,
    %cst_29 = arith.constant dense<0.000000e+00> : vector<32x128xf32>
    %27 = tpu.matmul %18, %20, %cst_29 {dimension_numbers = #tpu.dot_dimension_numbers<[1], [0], [0], [1], [0, 0, 1, 1], [], []>} : vector<32x32xbf16>, vector<32x128xbf16>, vector<32x128xf32> -> vector<32x128xf32>
    %28 = arith.truncf %27 : vector<32x128xf32> to vector<32x128xbf16>
    %c3 = arith.constant 3 : index
    %c0_30 = arith.constant 0 : index
    %c0_31 = arith.constant 0 : index
    %29 = vector.load %arg3[%c3, %c0_30, %c0_31] : memref<4x128x512xbf16, #tpu.memory_space<vmem>>, vector<1x128x512xbf16>
    %30 = vector.shape_cast %29 : vector<1x128x512xbf16> to vector<128x512xbf16>
    %cst_32 = arith.constant dense<0.000000e+00> : vector<32x512xf32>
    %31 = tpu.matmul %28, %30, %cst_32 {dimension_numbers = #tpu.dot_dimension_numbers<[1], [0], [0], [1], [0, 0, 1, 1], [], []>} : vector<32x128xbf16>, vector<128x512xbf16>, vector<32x512xf32> -> vector<32x512xf32>
    %c0_33 = arith.constant 0 : index
    %c0_34 = arith.constant 0 : index
    %32 = vector.load %arg5[%c0_33, %c0_34] : memref<32x512xf32, #tpu.memory_space<vmem>>, vector<32x512xf32>
    %33 = arith.addf %32, %31 : vector<32x512xf32>
    %c0_35 = arith.constant 0 : index
    %c0_36 = arith.constant 0 : index
    %34 = vector.load %arg5[%c0_35, %c0_36] : memref<32x512xf32, #tpu.memory_space<vmem>>, vector<32x512xf32>
    tpu.vector_store %arg5[%c0_35, %c0_36], %33 {strides = array<i32>} : memref<32x512xf32, #tpu.memory_space<vmem>>, vector<32x512xf32>,
    %c0_37 = arith.constant 0 : index
    %c0_38 = arith.constant 0 : index
    %35 = vector.load %arg5[%c0_37, %c0_38] : memref<32x512xf32, #tpu.memory_space<vmem>>, vector<32x512xf32>
    %c0_39 = arith.constant 0 : index
    %c0_40 = arith.constant 0 : index
    %36 = vector.load %arg4[%c0_39, %c0_40] : memref<32x512xf32, #tpu.memory_space<vmem>>, vector<32x512xf32>
    tpu.vector_store %arg4[%c0_39, %c0_40], %35 {strides = array<i32>} : memref<32x512xf32, #tpu.memory_space<vmem>>, vector<32x512xf32>,
    return
  }
  func.func @transform_0(%arg0: i32) -> (i32, i32, i32) {
    %c0_i32 = arith.constant 0 : i32
    %c0_i32_0 = arith.constant 0 : i32
    %c0_i32_1 = arith.constant 0 : i32
    %c0_i32_2 = arith.constant 0 : i32
    return %c0_i32, %c0_i32_0, %c0_i32_1 : i32, i32, i32
  }
  func.func @transform_1(%arg0: i32) -> (i32, i32) {
    %c0_i32 = arith.constant 0 : i32
    %c0_i32_0 = arith.constant 0 : i32
    return %c0_i32, %arg0 : i32, i32
  }
  func.func @transform_2(%arg0: i32) -> (i32, i32, i32) {
    %c0_i32 = arith.constant 0 : i32
    %c0_i32_0 = arith.constant 0 : i32
    %c0_i32_1 = arith.constant 0 : i32
    %c0_i32_2 = arith.constant 0 : i32
    return %c0_i32, %c0_i32_0, %c0_i32_1 : i32, i32, i32
  }
  func.func @transform_3(%arg0: i32) -> (i32, i32) {
    %c0_i32 = arith.constant 0 : i32
    %c0_i32_0 = arith.constant 0 : i32
    return %c0_i32, %arg0 : i32, i32
  }
}

module attributes {stable_mosaic.version = 11 : i64} {
  func.func @_gcn_kernel(%arg0: i32, %arg1: memref<2x32x32xbf16, #tpu.memory_space<vmem>>, %arg2: memref<32x128xbf16, #tpu.memory_space<vmem>>, %arg3: memref<4x128x512xbf16, #tpu.memory_space<vmem>>, %arg4: memref<32x512xf32, #tpu.memory_space<vmem>>, %arg5: memref<32x512xf32, #tpu.memory_space<vmem>>) attributes {dimension_semantics = [#tpu.dimension_semantics<parallel>], iteration_bounds = array<i64: 2>, scalar_prefetch = 0 : i64, scratch_operands = 1 : i64, tpu.core_type = #tpu.core_type<tc>, window_params = [{pipeline_mode = #tpu.pipeline_mode<synchronous>, transform_indices = @transform_0, window_bounds = array<i64: 2, 32, 32>}, {transform_indices = @transform_1, window_bounds = array<i64: 32, 128>}, {pipeline_mode = #tpu.pipeline_mode<synchronous>, transform_indices = @transform_2, window_bounds = array<i64: 4, 128, 512>}, {transform_indices = @transform_3, window_bounds = array<i64: 32, 512>}]} {
    %c0 = arith.constant 0 : index
    %c0_0 = arith.constant 0 : index
    %0 = vector.load %arg2[%c0, %c0_0] : memref<32x128xbf16, #tpu.memory_space<vmem>>, vector<32x128xbf16>
    %c0_1 = arith.constant 0 : index
    %c0_2 = arith.constant 0 : index
    %c0_3 = arith.constant 0 : index
    %1 = vector.load %arg1[%c0_1, %c0_2, %c0_3] : memref<2x32x32xbf16, #tpu.memory_space<vmem>>, vector<1x32x32xbf16>
    %2 = vector.shape_cast %1 : vector<1x32x32xbf16> to vector<32x32xbf16>
    %cst = arith.constant dense<0.000000e+00> : vector<32x128xf32>
    %3 = tpu.matmul %2, %0, %cst {dimension_numbers = #tpu.dot_dimension_numbers<[1], [0], [0], [1], [0, 0, 1, 1], [], []>} : vector<32x32xbf16>, vector<32x128xbf16>, vector<32x128xf32> -> vector<32x128xf32>
    %4 = arith.truncf %3 : vector<32x128xf32> to vector<32x128xbf16>
    %c0_4 = arith.constant 0 : index
    %c0_5 = arith.constant 0 : index
    %c0_6 = arith.constant 0 : index
    %5 = vector.load %arg3[%c0_4, %c0_5, %c0_6] : memref<4x128x512xbf16, #tpu.memory_space<vmem>>, vector<1x128x512xbf16>
    %6 = vector.shape_cast %5 : vector<1x128x512xbf16> to vector<128x512xbf16>
    %cst_7 = arith.constant dense<0.000000e+00> : vector<32x512xf32>
    %7 = tpu.matmul %4, %6, %cst_7 {dimension_numbers = #tpu.dot_dimension_numbers<[1], [0], [0], [1], [0, 0, 1, 1], [], []>} : vector<32x128xbf16>, vector<128x512xbf16>, vector<32x512xf32> -> vector<32x512xf32>
    %c0_8 = arith.constant 0 : index
    %c0_9 = arith.constant 0 : index
    %8 = vector.load %arg5[%c0_8, %c0_9] : memref<32x512xf32, #tpu.memory_space<vmem>>, vector<32x512xf32>
    tpu.vector_store %arg5[%c0_8, %c0_9], %7 {strides = array<i32>} : memref<32x512xf32, #tpu.memory_space<vmem>>, vector<32x512xf32>,
    %cst_10 = arith.constant dense<0.000000e+00> : vector<32x128xf32>
    %9 = tpu.matmul %2, %4, %cst_10 {dimension_numbers = #tpu.dot_dimension_numbers<[1], [0], [0], [1], [0, 0, 1, 1], [], []>} : vector<32x32xbf16>, vector<32x128xbf16>, vector<32x128xf32> -> vector<32x128xf32>
    %10 = arith.truncf %9 : vector<32x128xf32> to vector<32x128xbf16>
    %c1 = arith.constant 1 : index
    %c0_11 = arith.constant 0 : index
    %c0_12 = arith.constant 0 : index
    %11 = vector.load %arg3[%c1, %c0_11, %c0_12] : memref<4x128x512xbf16, #tpu.memory_space<vmem>>, vector<1x128x512xbf16>
    %12 = vector.shape_cast %11 : vector<1x128x512xbf16> to vector<128x512xbf16>
    %cst_13 = arith.constant dense<0.000000e+00> : vector<32x512xf32>
    %13 = tpu.matmul %10, %12, %cst_13 {dimension_numbers = #tpu.dot_dimension_numbers<[1], [0], [0], [1], [0, 0, 1, 1], [], []>} : vector<32x128xbf16>, vector<128x512xbf16>, vector<32x512xf32> -> vector<32x512xf32>
    %c0_14 = arith.constant 0 : index
    %c0_15 = arith.constant 0 : index
    %14 = vector.load %arg5[%c0_14, %c0_15] : memref<32x512xf32, #tpu.memory_space<vmem>>, vector<32x512xf32>
    %15 = arith.addf %14, %13 : vector<32x512xf32>
    %c0_16 = arith.constant 0 : index
    %c0_17 = arith.constant 0 : index
    %16 = vector.load %arg5[%c0_16, %c0_17] : memref<32x512xf32, #tpu.memory_space<vmem>>, vector<32x512xf32>
    tpu.vector_store %arg5[%c0_16, %c0_17], %15 {strides = array<i32>} : memref<32x512xf32, #tpu.memory_space<vmem>>, vector<32x512xf32>,
    %c1_18 = arith.constant 1 : index
    %c0_19 = arith.constant 0 : index
    %c0_20 = arith.constant 0 : index
    %17 = vector.load %arg1[%c1_18, %c0_19, %c0_20] : memref<2x32x32xbf16, #tpu.memory_space<vmem>>, vector<1x32x32xbf16>
    %18 = vector.shape_cast %17 : vector<1x32x32xbf16> to vector<32x32xbf16>
    %cst_21 = arith.constant dense<0.000000e+00> : vector<32x128xf32>
    %19 = tpu.matmul %18, %0, %cst_21 {dimension_numbers = #tpu.dot_dimension_numbers<[1], [0], [0], [1], [0, 0, 1, 1], [], []>} : vector<32x32xbf16>, vector<32x128xbf16>, vector<32x128xf32> -> vector<32x128xf32>
    %20 = arith.truncf %19 : vector<32x128xf32> to vector<32x128xbf16>
    %c2 = arith.constant 2 : index
    %c0_22 = arith.constant 0 : index
    %c0_23 = arith.constant 0 : index
    %21 = vector.load %arg3[%c2, %c0_22, %c0_23] : memref<4x128x512xbf16, #tpu.memory_space<vmem>>, vector<1x128x512xbf16>
    %22 = vector.shape_cast %21 : vector<1x128x512xbf16> to vector<128x512xbf16>
    %cst_24 = arith.constant dense<0.000000e+00> : vector<32x512xf32>
    %23 = tpu.matmul %20, %22, %cst_24 {dimension_numbers = #tpu.dot_dimension_numbers<[1], [0], [0], [1], [0, 0, 1, 1], [], []>} : vector<32x128xbf16>, vector<128x512xbf16>, vector<32x512xf32> -> vector<32x512xf32>
    %c0_25 = arith.constant 0 : index
    %c0_26 = arith.constant 0 : index
    %24 = vector.load %arg5[%c0_25, %c0_26] : memref<32x512xf32, #tpu.memory_space<vmem>>, vector<32x512xf32>
    %25 = arith.addf %24, %23 : vector<32x512xf32>
    %c0_27 = arith.constant 0 : index
    %c0_28 = arith.constant 0 : index
    %26 = vector.load %arg5[%c0_27, %c0_28] : memref<32x512xf32, #tpu.memory_space<vmem>>, vector<32x512xf32>
    tpu.vector_store %arg5[%c0_27, %c0_28], %25 {strides = array<i32>} : memref<32x512xf32, #tpu.memory_space<vmem>>, vector<32x512xf32>,
    %cst_29 = arith.constant dense<0.000000e+00> : vector<32x128xf32>
    %27 = tpu.matmul %18, %20, %cst_29 {dimension_numbers = #tpu.dot_dimension_numbers<[1], [0], [0], [1], [0, 0, 1, 1], [], []>} : vector<32x32xbf16>, vector<32x128xbf16>, vector<32x128xf32> -> vector<32x128xf32>
    %28 = arith.truncf %27 : vector<32x128xf32> to vector<32x128xbf16>
    %c3 = arith.constant 3 : index
    %c0_30 = arith.constant 0 : index
    %c0_31 = arith.constant 0 : index
    %29 = vector.load %arg3[%c3, %c0_30, %c0_31] : memref<4x128x512xbf16, #tpu.memory_space<vmem>>, vector<1x128x512xbf16>
    %30 = vector.shape_cast %29 : vector<1x128x512xbf16> to vector<128x512xbf16>
    %cst_32 = arith.constant dense<0.000000e+00> : vector<32x512xf32>
    %31 = tpu.matmul %28, %30, %cst_32 {dimension_numbers = #tpu.dot_dimension_numbers<[1], [0], [0], [1], [0, 0, 1, 1], [], []>} : vector<32x128xbf16>, vector<128x512xbf16>, vector<32x512xf32> -> vector<32x512xf32>
    %c0_33 = arith.constant 0 : index
    %c0_34 = arith.constant 0 : index
    %32 = vector.load %arg5[%c0_33, %c0_34] : memref<32x512xf32, #tpu.memory_space<vmem>>, vector<32x512xf32>
    %33 = arith.addf %32, %31 : vector<32x512xf32>
    %c0_35 = arith.constant 0 : index
    %c0_36 = arith.constant 0 : index
    %34 = vector.load %arg5[%c0_35, %c0_36] : memref<32x512xf32, #tpu.memory_space<vmem>>, vector<32x512xf32>
    tpu.vector_store %arg5[%c0_35, %c0_36], %33 {strides = array<i32>} : memref<32x512xf32, #tpu.memory_space<vmem>>, vector<32x512xf32>,
    %c0_37 = arith.constant 0 : index
    %c0_38 = arith.constant 0 : index
    %35 = vector.load %arg5[%c0_37, %c0_38] : memref<32x512xf32, #tpu.memory_space<vmem>>, vector<32x512xf32>
    %c0_39 = arith.constant 0 : index
    %c0_40 = arith.constant 0 : index
    %36 = vector.load %arg4[%c0_39, %c0_40] : memref<32x512xf32, #tpu.memory_space<vmem>>, vector<32x512xf32>
    tpu.vector_store %arg4[%c0_39, %c0_40], %35 {strides = array<i32>} : memref<32x512xf32, #tpu.memory_space<vmem>>, vector<32x512xf32>,
    return
  }
  func.func @transform_0(%arg0: i32) -> (i32, i32, i32) {
    %c0_i32 = arith.constant 0 : i32
    %c0_i32_0 = arith.constant 0 : i32
    %c0_i32_1 = arith.constant 0 : i32
    %c0_i32_2 = arith.constant 0 : i32
    return %c0_i32, %c0_i32_0, %c0_i32_1 : i32, i32, i32
  }
  func.func @transform_1(%arg0: i32) -> (i32, i32) {
    %c0_i32 = arith.constant 0 : i32
    %c0_i32_0 = arith.constant 0 : i32
    return %c0_i32, %arg0 : i32, i32
  }
  func.func @transform_2(%arg0: i32) -> (i32, i32, i32) {
    %c0_i32 = arith.constant 0 : i32
    %c0_i32_0 = arith.constant 0 : i32
    %c0_i32_1 = arith.constant 0 : i32
    %c0_i32_2 = arith.constant 0 : i32
    return %c0_i32, %c0_i32_0, %c0_i32_1 : i32, i32, i32
  }
  func.func @transform_3(%arg0: i32) -> (i32, i32) {
    %c0_i32 = arith.constant 0 : i32
    %c0_i32_0 = arith.constant 0 : i32
    return %c0_i32, %arg0 : i32, i32
  }
}

</mosaic_0001>

<llo_original>
// kernel: tpu_custom_call.1
$region0: #{tpu_custom_call.1}
  #allocation0 [shape = 'u32[]', space=smem, size = 0x4, offset = 0x4, fixed_abs, tag = 'smem constant byte address 0x4 - core index']
  #allocation1 [shape = 'u32[144,128]{1,0:T(1,128)}', space=vmem, size = 0x12000, scoped, tag = 'internal scratch']
  #allocation2 [shape = 'f32[32,512]{1,0:T(8,128)}', space=vmem, size = 0x10000, scoped, tag = 'scratch operand']
  %s0 = inlined_call_operand.hbm [shape: bf16[2,32,32], index: 0, kind: input, shape index: {}]
  %s1 = inlined_call_operand.hbm [shape: bf16[32,256], index: 1, kind: input, shape index: {}]
  %s2 = inlined_call_operand.hbm [shape: bf16[4,128,512], index: 2, kind: input, shape index: {}]
  %s3 = inlined_call_operand.hbm [shape: f32[32,1024], index: 3, kind: output, shape index: {}]
  %s4 = sld [smem:[#allocation0]]
  $region57: #{tpu_custom_call.1} parent=0
    _
  %s6 = ssub.s32 1, %s4
  %s7 = scalar_select 0, %s6, %s4
  $region1: #{tpu_custom_call.1} parent=0
    #allocation3 [shape = 'u8[16384]{0}', space=vmem, size = 0x4000, scoped, tag = 'input window, operand 0, single buffered']
    #allocation4 [shape = 's32[2]{0}', space=sflag, size = 0x8, scoped, tag = 'scoped memory for tpu_custom_call.1']
    #allocation5 [shape = 's32[2]{0}', space=sflag, size = 0x8, scoped, tag = 'scoped memory for tpu_custom_call.1']
    #allocation6 [shape = 'u8[16384]{0}', space=vmem, size = 0x4000, scoped, tag = 'input window, operand 1']
    #allocation7 [shape = 's32[2]{0}', space=sflag, size = 0x8, scoped, tag = 'scoped memory for tpu_custom_call.1']
    #allocation8 [shape = 'u8[524288]{0}', space=vmem, size = 0x80000, scoped, tag = 'input window, operand 2, single buffered']
    #allocation9 [shape = 'u8[131072]{0}', space=vmem, size = 0x20000, scoped, tag = 'output window, operand 0']
    %8 = vsyncpa [#allocation4], 0
    %9 = vsyncpa [#allocation7], 0
    %s10 = scalar_lea.sflag [#allocation7], 1
    %11 = vsyncpa %s10, 0
    %12 = vsyncpa [#allocation5], 0
    %s13 = scalar_lea.sflag [#allocation5], 1
    %14 = vsyncpa %s13, 0
    loop: start=0, step=1, limit=4
    $region2: #{tpu_custom_call.1} parent=1 // loop_pre_header
      _
    $region3: #{tpu_custom_call.1} parent=1 // loop_header
      %s16 = sphi 0, %s20
      %p17 = scmp.ge.s32.totalorder %s16, 4
      %s24 = sphi 0, %s24
      %s26 = sphi 0, %s24
      %s27 = sphi 0, %s26
      %s41 = sphi 0, %s27
      %s47 = sphi 0, %s49
      %s50 = sphi 0, %s47
      %s51 = sphi 0, %s50
      %s67 = sphi 0, %s51
      %s71 = sphi 0, %s71
      %s73 = sphi 0, %s71
      %s74 = sphi 0, %s73
      %s88 = sphi 0, %s74
      %s94 = sphi 0, %s96
      %s97 = sphi 0, %s94
      %s98 = sphi 0, %s97
      %s114 = sphi 0, %s98
    $region4: #{tpu_custom_call.1} parent=1 // loop_header_branch
      %19 = sbr.rel (%p17) target = $region8
    $region5: #{tpu_custom_call.1} parent=1 // loop_body
      %s21 = ssub.s32 %s16, 1
      %s22 = ssub.s32 %s16, 2
      %s23 = sadd.s32 %s16, 1
      %s25 = sadd.s32 %s24, 1
      %p28 = scmp.eq.s32.totalorder %s16, 1
      %p29 = scmp.ne.s32.totalorder %s24, %s26
      %p30 = scmp.eq.s32.totalorder %s16, 0
      %p31 = por %p29, %p30
      %p32 = scmp.ne.s32.totalorder %s24, %s26
      %p33 = scmp.eq.s32.totalorder %s21, 1
      %p34 = por %p32, %p33
      %p35 = scmp.ne.s32.totalorder %s26, %s27
      %p36 = scmp.eq.s32.totalorder %s21, 0
      %p37 = por %p35, %p36
      %p38 = scmp.ne.s32.totalorder %s26, %s27
      %p39 = scmp.eq.s32.totalorder %s22, 1
      %p40 = por %p38, %p39
      %p42 = scmp.ne.s32.totalorder %s27, %s41
      %p43 = scmp.eq.s32.totalorder %s22, 0
      %p44 = por %p42, %p43
      %s45 = ssub.s32 %s16, %s23
      %p46 = scmp.eq.s32.totalorder %s45, 0
      %s48 = sadd.s32 %s47, 1
      %s49 = scalar_select %p46, %s47, %s48
      %p52 = pneg %p46
      %p53 = scmp.eq.s32.totalorder %s16, 1
      %p54 = por %p52, %p53
      %p55 = scmp.ne.s32.totalorder %s47, %s50
      %p56 = scmp.eq.s32.totalorder %s16, 0
      %p57 = por %p55, %p56
      %p58 = scmp.ne.s32.totalorder %s47, %s50
      %p59 = scmp.eq.s32.totalorder %s21, 1
      %p60 = por %p58, %p59
      %p61 = scmp.ne.s32.totalorder %s50, %s51
      %p62 = scmp.eq.s32.totalorder %s21, 0
      %p63 = por %p61, %p62
      %p64 = scmp.ne.s32.totalorder %s50, %s51
      %p65 = scmp.eq.s32.totalorder %s22, 1
      %p66 = por %p64, %p65
      %p68 = scmp.ne.s32.totalorder %s51, %s67
      %p69 = scmp.eq.s32.totalorder %s22, 0
      %p70 = por %p68, %p69
      %s72 = sadd.s32 %s71, 1
      %p75 = scmp.eq.s32.totalorder %s16, 1
      %p76 = scmp.ne.s32.totalorder %s71, %s73
      %p77 = scmp.eq.s32.totalorder %s16, 0
      %p78 = por %p76, %p77
      %p79 = scmp.ne.s32.totalorder %s71, %s73
      %p80 = scmp.eq.s32.totalorder %s21, 1
      %p81 = por %p79, %p80
      %p82 = scmp.ne.s32.totalorder %s73, %s74
      %p83 = scmp.eq.s32.totalorder %s21, 0
      %p84 = por %p82, %p83
      %p85 = scmp.ne.s32.totalorder %s73, %s74
      %p86 = scmp.eq.s32.totalorder %s22, 1
      %p87 = por %p85, %p86
      %p89 = scmp.ne.s32.totalorder %s74, %s88
      %p90 = scmp.eq.s32.totalorder %s22, 0
      %p91 = por %p89, %p90
      %s92 = ssub.s32 %s16, %s23
      %p93 = scmp.eq.s32.totalorder %s92, 0
      %s95 = sadd.s32 %s94, 1
      %s96 = scalar_select %p93, %s94, %s95
      %p99 = pneg %p93
      %p100 = scmp.eq.s32.totalorder %s16, 1
      %p101 = por %p99, %p100
      %p102 = scmp.ne.s32.totalorder %s94, %s97
      %p103 = scmp.eq.s32.totalorder %s16, 0
      %p104 = por %p102, %p103
      %p105 = scmp.ne.s32.totalorder %s94, %s97
      %p106 = scmp.eq.s32.totalorder %s21, 1
      %p107 = por %p105, %p106
      %p108 = scmp.ne.s32.totalorder %s97, %s98
      %p109 = scmp.eq.s32.totalorder %s21, 0
      %p110 = por %p108, %p109
      %p111 = scmp.ne.s32.totalorder %s97, %s98
      %p112 = scmp.eq.s32.totalorder %s22, 1
      %p113 = por %p111, %p112
      %p115 = scmp.ne.s32.totalorder %s98, %s114
      %p116 = scmp.eq.s32.totalorder %s22, 0
      %p117 = por %p115, %p116
      %p118 = scmp.le.s32.totalorder 1, %s16
      %p119 = scmp.lt.s32.totalorder %s16, 3
      %p120 = pnand %p118, %p119
      %p121 = pneg %p120
      // Predicated region
      $region9: #{tpu_custom_call.1} parent=5 // pred_check
        _
      $region10: #{tpu_custom_call.1} parent=5 // pred_check_branch
        %123 = sbr.rel (%p120) target = $region12
      $region11: #{tpu_custom_call.1} parent=5 // pred_region
        %s124 = ssub.s32 %s16, 1
        // Predicated region
        $region13: #{tpu_custom_call.1} parent=11 // pred_check
          %p125 = pneg %p37
        $region14: #{tpu_custom_call.1} parent=11 // pred_check_branch
          %127 = sbr.rel (%p125) target = $region16
        $region15: #{tpu_custom_call.1} parent=11 // pred_region
          %s129 = ssub.s32 512, 512
          %130 = vsyncadd [#allocation4], %s129
          %s131 = sshll.u32 [#allocation3], 4
          %s132 = int_to_ptr.vmem [resolvable:$true] %s131
          %137 = dma.hbm_to_vmem [thread:$0]  %s0, 512, %s132, [#allocation4], 64, 64, 4
        $region16: #{tpu_custom_call.1} parent=11 // pred_fallthru
          _
        // Predicated region
        $region17: #{tpu_custom_call.1} parent=11 // pred_check
          %p138 = pneg %p84
        $region18: #{tpu_custom_call.1} parent=11 // pred_check_branch
          %140 = sbr.rel (%p138) target = $region20
        $region19: #{tpu_custom_call.1} parent=11 // pred_region
          %s142 = ssub.s32 16384, 16384
          %143 = vsyncadd [#allocation7], %s142
          %s144 = sshll.u32 [#allocation8], 4
          %s145 = int_to_ptr.vmem [resolvable:$true] %s144
          %150 = dma.hbm_to_vmem [thread:$0]  %s2, 16384, %s145, [#allocation7], 256, 256, 16
        $region20: #{tpu_custom_call.1} parent=11 // pred_fallthru
          _
      $region12: #{tpu_custom_call.1} parent=5 // pred_fallthru
        _
      %p151 = scmp.lt.s32.totalorder %s16, 2
      // Predicated region
      $region21: #{tpu_custom_call.1} parent=5 // pred_check
        %p152 = pneg %p151
      $region22: #{tpu_custom_call.1} parent=5 // pred_check_branch
        %154 = sbr.rel (%p152) target = $region24
      $region23: #{tpu_custom_call.1} parent=5 // pred_region
        // Predicated region
        $region25: #{tpu_custom_call.1} parent=23 // pred_check
          %p155 = pneg %p57
        $region26: #{tpu_custom_call.1} parent=23 // pred_check_branch
          %157 = sbr.rel (%p155) target = $region28
        $region27: #{tpu_custom_call.1} parent=23 // pred_region
          %s158 = sand.u32 %s16, 1
          %s159 = scalar_lea.sflag [#allocation7], %s158
          %s160 = sand.u32 %s47, 1
          %s161 = smul.addr %s160, 16
          %s162 = scalar_lea.vmem [#allocation6], %s161
          %s164 = ssub.s32 256, 256
          %165 = vsyncadd %s159, %s164
          %s166 = smul.addr %s16, 64
          %s167 = scalar_lea.hbm %s1, %s166
          %s168 = sshll.u32 %s162, 4
          %s169 = int_to_ptr.vmem [resolvable:$true] %s168
          %174 = dma.hbm_to_vmem [thread:$0]  %s167, 256, %s169, %s159, 128, 64, 4
        $region28: #{tpu_custom_call.1} parent=23 // pred_fallthru
          _
      $region24: #{tpu_custom_call.1} parent=5 // pred_fallthru
        _
      %p175 = scmp.le.s32.totalorder 1, %s16
      %p176 = scmp.lt.s32.totalorder %s16, 3
      %p177 = pnand %p175, %p176
      %p178 = pneg %p177
      // Predicated region
      $region29: #{tpu_custom_call.1} parent=5 // pred_check
        _
      $region30: #{tpu_custom_call.1} parent=5 // pred_check_branch
        %180 = sbr.rel (%p177) target = $region32
      $region31: #{tpu_custom_call.1} parent=5 // pred_region
        %s181 = ssub.s32 %s16, 1
        // Predicated region
        $region33: #{tpu_custom_call.1} parent=31 // pred_check
          %p182 = pneg %p37
        $region34: #{tpu_custom_call.1} parent=31 // pred_check_branch
          %184 = sbr.rel (%p182) target = $region36
        $region35: #{tpu_custom_call.1} parent=31 // pred_region
          %185 = dma.done [#allocation4], 512
        $region36: #{tpu_custom_call.1} parent=31 // pred_fallthru
          _
        %s186 = sand.u32 %s21, 1
        %s187 = scalar_lea.sflag [#allocation7], %s186
        %s188 = sand.u32 %s50, 1
        %s189 = smul.addr %s188, 16
        %s190 = scalar_lea.vmem [#allocation6], %s189
        // Predicated region
        $region37: #{tpu_custom_call.1} parent=31 // pred_check
          %p191 = pneg %p63
        $region38: #{tpu_custom_call.1} parent=31 // pred_check_branch
          %193 = sbr.rel (%p191) target = $region40
        $region39: #{tpu_custom_call.1} parent=31 // pred_region
          %194 = dma.done %s187, 256
        $region40: #{tpu_custom_call.1} parent=31 // pred_fallthru
          _
        // Predicated region
        $region41: #{tpu_custom_call.1} parent=31 // pred_check
          %p195 = pneg %p84
        $region42: #{tpu_custom_call.1} parent=31 // pred_check_branch
          %197 = sbr.rel (%p195) target = $region44
        $region43: #{tpu_custom_call.1} parent=31 // pred_region
          %198 = dma.done [#allocation7], 16384
        $region44: #{tpu_custom_call.1} parent=31 // pred_fallthru
          _
        %p199 = pneg %p37
        %p200 = pneg %p34
        %s201 = sand.u32 %s21, 1
        %s202 = scalar_lea.sflag [#allocation7], %s201
        %s203 = sand.u32 %s50, 1
        %s204 = smul.addr %s203, 16
        %s205 = scalar_lea.vmem [#allocation6], %s204
        %p206 = pneg %p63
        %p207 = pneg %p60
        %p208 = pneg %p84
        %p209 = pneg %p81
        %p210 = pneg %p110
        %p211 = pneg %p107
        %s212 = sand.u32 %s97, 1
        %s213 = scalar_lea.sflag [#allocation5], %s212
        %s214 = sand.u32 %s97, 1
        %s215 = smul.addr %s214, 128
        %s216 = scalar_lea.vmem [#allocation9], %s215
        %s217 = smul.u32 4, %s21
        %v219 = vld [vmem:[%s190] sm:$0xf]
        %v220 = vld [vmem:[%s190 + $0x4] sm:$0xf]
        %v221 = vld [vmem:[%s190 + $0x8] sm:$0xf]
        %v222 = vld [vmem:[%s190 + $0xc] sm:$0xf]
        %v223 = vld [vmem:[#allocation3] sm:$0xf]
        %v224 = vld [vmem:[#allocation3 + $0x4] sm:$0xf]
        %v225 = vld [vmem:[#allocation3 + $0x8] sm:$0xf]
        %v226 = vld [vmem:[#allocation3 + $0xc] sm:$0xf]
        %v231 = vunpack.c.l.b16 %v223
        %v232 = vunpack.c.l.b16 %v224
        %v233 = vunpack.c.l.b16 %v225
        %v234 = vunpack.c.l.b16 %v226
        %v235 = vpack.c.b16 %v232, %v231
        %v236 = vpack.c.b16 %v234, %v233
        %v241 = vunpack.c.l.b16 %v219
        %v242 = vunpack.c.l.b16 %v220
        %v243 = vunpack.c.l.b16 %v221
        %v244 = vunpack.c.l.b16 %v222
        %v245 = vpack.c.b16 %v242, %v241
        %v246 = vpack.c.b16 %v244, %v243
        %vm249 = vcmask 261120
        %v251 = vsel %vm249, %v235, 0
        %v254 = vsel %vm249, %v236, 0
        %256 = vmatprep.subr.bf16.mxu0 0
        %257 = vmatpush1.bf16.msra.mxu0 %v245
        %258 = vmatprep.subr.bf16.mxu0 0
        %259 = vmatpush1.bf16.msra.mxu0 %v246
        %260 = vmatprep.subr.bf16.mxu0 0
        %261 = vmatpush1.bf16.msra.mxu0 0
        %262 = vmatprep.subr.bf16.mxu0 0
        %263 = vmatpush1.bf16.msra.mxu0 0
        %264 = vmatprep.subr.bf16.mxu0 0
        %265 = vmatpush1.bf16.msra.mxu0 0
        %266 = vmatprep.subr.bf16.mxu0 0
        %267 = vmatpush1.bf16.msra.mxu0 0
        %268 = vmatprep.subr.bf16.mxu0 0
        %269 = vmatpush1.bf16.msra.mxu0 0
        %270 = vmatprep.subr.bf16.mxu0 0
        %271 = vmatpush1.bf16.msra.mxu0 0
        %272 = vmatprep.subr.bf16.mxu0 0
        %273 = vmatpush1.bf16.msra.mxu0 0
        %274 = vmatprep.subr.bf16.mxu0 0
        %275 = vmatpush1.bf16.msra.mxu0 0
        %276 = vmatprep.subr.bf16.mxu0 0
        %277 = vmatpush1.bf16.msra.mxu0 0
        %278 = vmatprep.subr.bf16.mxu0 0
        %279 = vmatpush1.bf16.msra.mxu0 0
        %280 = vmatprep.subr.bf16.mxu0 0
        %281 = vmatpush1.bf16.msra.mxu0 0
        %282 = vmatprep.subr.bf16.mxu0 0
        %283 = vmatpush1.bf16.msra.mxu0 0
        %284 = vmatprep.subr.bf16.mxu0 0
        %285 = vmatpush1.bf16.msra.mxu0 0
        %286 = vmatprep.subr.bf16.mxu0 0
        %287 = vmatpush1.bf16.msra.mxu0 0
        %288 = vmatprep.mubr.bf16.mxu0 0
        %289 = vmatmul.mubr.bf16.gmra.mrb[0].mxu0 %v251
        %v290 = vpop.f32.mrb[0].mxu0
        %v291 = vadd.f32 0.0, %v290
        %v292 = vpop.f32.mrb[0].mxu0
        %v293 = vpop.f32.mrb[0].mxu0
        %v294 = vadd.f32 0.0, %v293
        %v295 = vpop.f32.mrb[0].mxu0
        %296 = vmatprep.mubr.bf16.mxu0 0
        %297 = vmatmul.mubr.bf16.gmra.mrb[0].mxu0 %v254
        %v298 = vpop.f32.mrb[0].mxu0
        %v299 = vadd.f32 0.0, %v298
        %v300 = vpop.f32.mrb[0].mxu0
        %v301 = vpop.f32.mrb[0].mxu0
        %v302 = vadd.f32 0.0, %v301
        %v303 = vpop.f32.mrb[0].mxu0
        %304 = vdwg.mxu0
        %v305 = vpack.c.bf16 %v294, %v291
        %v306 = vpack.c.bf16 %v302, %v299
        %v307 = vld [vmem:[#allocation8] sm:$0xff]
        %v308 = vld [vmem:[#allocation8 + $0x8] sm:$0xff]
        %v309 = vld [vmem:[#allocation8 + $0x10] sm:$0xff]
        %v310 = vld [vmem:[#allocation8 + $0x18] sm:$0xff]
        %v311 = vld [vmem:[#allocation8 + $0x20] sm:$0xff]
        %v312 = vld [vmem:[#allocation8 + $0x28] sm:$0xff]
        %v313 = vld [vmem:[#allocation8 + $0x30] sm:$0xff]
        %v314 = vld [vmem:[#allocation8 + $0x38] sm:$0xff]
        %v315 = vld [vmem:[#allocation8 + $0x40] sm:$0xff]
        %v316 = vld [vmem:[#allocation8 + $0x48] sm:$0xff]
        %v317 = vld [vmem:[#allocation8 + $0x50] sm:$0xff]
        %v318 = vld [vmem:[#allocation8 + $0x58] sm:$0xff]
        %v319 = vld [vmem:[#allocation8 + $0x60] sm:$0xff]
        %v320 = vld [vmem:[#allocation8 + $0x68] sm:$0xff]
        %v321 = vld [vmem:[#allocation8 + $0x70] sm:$0xff]
        %v322 = vld [vmem:[#allocation8 + $0x78] sm:$0xff]
        %v323 = vld [vmem:[#allocation8 + $0x80] sm:$0xff]
        %v324 = vld [vmem:[#allocation8 + $0x88] sm:$0xff]
        %v325 = vld [vmem:[#allocation8 + $0x90] sm:$0xff]
        %v326 = vld [vmem:[#allocation8 + $0x98] sm:$0xff]
        %v327 = vld [vmem:[#allocation8 + $0xa0] sm:$0xff]
        %v328 = vld [vmem:[#allocation8 + $0xa8] sm:$0xff]
        %v329 = vld [vmem:[#allocation8 + $0xb0] sm:$0xff]
        %v330 = vld [vmem:[#allocation8 + $0xb8] sm:$0xff]
        %v331 = vld [vmem:[#allocation8 + $0xc0] sm:$0xff]
        %v332 = vld [vmem:[#allocation8 + $0xc8] sm:$0xff]
        %v333 = vld [vmem:[#allocation8 + $0xd0] sm:$0xff]
        %v334 = vld [vmem:[#allocation8 + $0xd8] sm:$0xff]
        %v335 = vld [vmem:[#allocation8 + $0xe0] sm:$0xff]
        %v336 = vld [vmem:[#allocation8 + $0xe8] sm:$0xff]
        %v337 = vld [vmem:[#allocation8 + $0xf0] sm:$0xff]
        %v338 = vld [vmem:[#allocation8 + $0xf8] sm:$0xff]
        %v371 = vunpack.c.l.b16 %v307
        %v372 = vunpack.c.h.b16 %v307
        %v373 = vunpack.c.l.b16 %v308
        %v374 = vunpack.c.h.b16 %v308
        %v375 = vunpack.c.l.b16 %v309
        %v376 = vunpack.c.h.b16 %v309
        %v377 = vunpack.c.l.b16 %v310
        %v378 = vunpack.c.h.b16 %v310
        %v379 = vunpack.c.l.b16 %v311
        %v380 = vunpack.c.h.b16 %v311
        %v381 = vunpack.c.l.b16 %v312
        %v382 = vunpack.c.h.b16 %v312
        %v383 = vunpack.c.l.b16 %v313
        %v384 = vunpack.c.h.b16 %v313
        %v385 = vunpack.c.l.b16 %v314
        %v386 = vunpack.c.h.b16 %v314
        %v387 = vunpack.c.l.b16 %v315
        %v388 = vunpack.c.h.b16 %v315
        %v389 = vunpack.c.l.b16 %v316
        %v390 = vunpack.c.h.b16 %v316
        %v391 = vunpack.c.l.b16 %v317
        %v392 = vunpack.c.h.b16 %v317
        %v393 = vunpack.c.l.b16 %v318
        %v394 = vunpack.c.h.b16 %v318
        %v395 = vunpack.c.l.b16 %v319
        %v396 = vunpack.c.h.b16 %v319
        %v397 = vunpack.c.l.b16 %v320
        %v398 = vunpack.c.h.b16 %v320
        %v399 = vunpack.c.l.b16 %v321
        %v400 = vunpack.c.h.b16 %v321
        %v401 = vunpack.c.l.b16 %v322
        %v402 = vunpack.c.h.b16 %v322
        %v403 = vunpack.c.l.b16 %v323
        %v404 = vunpack.c.h.b16 %v323
        %v405 = vunpack.c.l.b16 %v324
        %v406 = vunpack.c.h.b16 %v324
        %v407 = vunpack.c.l.b16 %v325
        %v408 = vunpack.c.h.b16 %v325
        %v409 = vunpack.c.l.b16 %v326
        %v410 = vunpack.c.h.b16 %v326
        %v411 = vunpack.c.l.b16 %v327
        %v412 = vunpack.c.h.b16 %v327
        %v413 = vunpack.c.l.b16 %v328
        %v414 = vunpack.c.h.b16 %v328
        %v415 = vunpack.c.l.b16 %v329
        %v416 = vunpack.c.h.b16 %v329
        %v417 = vunpack.c.l.b16 %v330
        %v418 = vunpack.c.h.b16 %v330
        %v419 = vunpack.c.l.b16 %v331
        %v420 = vunpack.c.h.b16 %v331
        %v421 = vunpack.c.l.b16 %v332
        %v422 = vunpack.c.h.b16 %v332
        %v423 = vunpack.c.l.b16 %v333
        %v424 = vunpack.c.h.b16 %v333
        %v425 = vunpack.c.l.b16 %v334
        %v426 = vunpack.c.h.b16 %v334
        %v427 = vunpack.c.l.b16 %v335
        %v428 = vunpack.c.h.b16 %v335
        %v429 = vunpack.c.l.b16 %v336
        %v430 = vunpack.c.h.b16 %v336
        %v431 = vunpack.c.l.b16 %v337
        %v432 = vunpack.c.h.b16 %v337
        %v433 = vunpack.c.l.b16 %v338
        %v434 = vunpack.c.h.b16 %v338
        %v435 = vpack.c.b16 %v375, %v371
        %v436 = vpack.c.b16 %v376, %v372
        %v437 = vpack.c.b16 %v377, %v373
        %v438 = vpack.c.b16 %v378, %v374
        %v439 = vpack.c.b16 %v383, %v379
        %v440 = vpack.c.b16 %v384, %v380
        %v441 = vpack.c.b16 %v385, %v381
        %v442 = vpack.c.b16 %v386, %v382
        %v443 = vpack.c.b16 %v391, %v387
        %v444 = vpack.c.b16 %v392, %v388
        %v445 = vpack.c.b16 %v393, %v389
        %v446 = vpack.c.b16 %v394, %v390
        %v447 = vpack.c.b16 %v399, %v395
        %v448 = vpack.c.b16 %v400, %v396
        %v449 = vpack.c.b16 %v401, %v397
        %v450 = vpack.c.b16 %v402, %v398
        %v451 = vpack.c.b16 %v407, %v403
        %v452 = vpack.c.b16 %v408, %v404
        %v453 = vpack.c.b16 %v409, %v405
        %v454 = vpack.c.b16 %v410, %v406
        %v455 = vpack.c.b16 %v415, %v411
        %v456 = vpack.c.b16 %v416, %v412
        %v457 = vpack.c.b16 %v417, %v413
        %v458 = vpack.c.b16 %v418, %v414
        %v459 = vpack.c.b16 %v423, %v419
        %v460 = vpack.c.b16 %v424, %v420
        %v461 = vpack.c.b16 %v425, %v421
        %v462 = vpack.c.b16 %v426, %v422
        %v463 = vpack.c.b16 %v431, %v427
        %v464 = vpack.c.b16 %v432, %v428
        %v465 = vpack.c.b16 %v433, %v429
        %v466 = vpack.c.b16 %v434, %v430
        %499 = vmatprep.subr.bf16.mxu0 %v436
        %500 = vmatpush1.bf16.msra.mxu0 %v435
        %501 = vmatprep.subr.bf16.mxu0 %v440
        %502 = vmatpush1.bf16.msra.mxu0 %v439
        %503 = vmatprep.subr.bf16.mxu0 %v444
        %504 = vmatpush1.bf16.msra.mxu0 %v443
        %505 = vmatprep.subr.bf16.mxu0 %v448
        %506 = vmatpush1.bf16.msra.mxu0 %v447
        %507 = vmatprep.subr.bf16.mxu0 %v452
        %508 = vmatpush1.bf16.msra.mxu0 %v451
        %509 = vmatprep.subr.bf16.mxu0 %v456
        %510 = vmatpush1.bf16.msra.mxu0 %v455
        %511 = vmatprep.subr.bf16.mxu0 %v460
        %512 = vmatpush1.bf16.msra.mxu0 %v459
        %513 = vmatprep.subr.bf16.mxu0 %v464
        %514 = vmatpush1.bf16.msra.mxu0 %v463
        %515 = vmatprep.subr.bf16.mxu0 0
        %516 = vmatpush1.bf16.msra.mxu0 0
        %517 = vmatprep.subr.bf16.mxu0 0
        %518 = vmatpush1.bf16.msra.mxu0 0
        %519 = vmatprep.subr.bf16.mxu0 0
        %520 = vmatpush1.bf16.msra.mxu0 0
        %521 = vmatprep.subr.bf16.mxu0 0
        %522 = vmatpush1.bf16.msra.mxu0 0
        %523 = vmatprep.subr.bf16.mxu0 0
        %524 = vmatpush1.bf16.msra.mxu0 0
        %525 = vmatprep.subr.bf16.mxu0 0
        %526 = vmatpush1.bf16.msra.mxu0 0
        %527 = vmatprep.subr.bf16.mxu0 0
        %528 = vmatpush1.bf16.msra.mxu0 0
        %529 = vmatprep.subr.bf16.mxu0 0
        %530 = vmatpush1.bf16.msra.mxu0 0
        %531 = vmatprep.mubr.bf16.mxu0 0
        %532 = vmatmul.mubr.bf16.gmra.mrb[0].mxu0 %v305
        %v533 = vpop.f32.mrb[0].mxu0
        %v534 = vadd.f32 0.0, %v533
        %v535 = vpop.f32.mrb[0].mxu0
        %v536 = vadd.f32 0.0, %v535
        %v537 = vpop.f32.mrb[0].mxu0
        %v538 = vadd.f32 0.0, %v537
        %v539 = vpop.f32.mrb[0].mxu0
        %v540 = vadd.f32 0.0, %v539
        %541 = vmatprep.mubr.bf16.mxu0 0
        %542 = vmatmul.mubr.bf16.gmra.mrb[0].mxu0 %v306
        %v543 = vpop.f32.mrb[0].mxu0
        %v544 = vadd.f32 0.0, %v543
        %v545 = vpop.f32.mrb[0].mxu0
        %v546 = vadd.f32 0.0, %v545
        %v547 = vpop.f32.mrb[0].mxu0
        %v548 = vadd.f32 0.0, %v547
        %v549 = vpop.f32.mrb[0].mxu0
        %v550 = vadd.f32 0.0, %v549
        %551 = vdwg.mxu0
        %552 = vmatprep.subr.bf16.mxu0 %v438
        %553 = vmatpush1.bf16.msra.mxu0 %v437
        %554 = vmatprep.subr.bf16.mxu0 %v442
        %555 = vmatpush1.bf16.msra.mxu0 %v441
        %556 = vmatprep.subr.bf16.mxu0 %v446
        %557 = vmatpush1.bf16.msra.mxu0 %v445
        %558 = vmatprep.subr.bf16.mxu0 %v450
        %559 = vmatpush1.bf16.msra.mxu0 %v449
        %560 = vmatprep.subr.bf16.mxu0 %v454
        %561 = vmatpush1.bf16.msra.mxu0 %v453
        %562 = vmatprep.subr.bf16.mxu0 %v458
        %563 = vmatpush1.bf16.msra.mxu0 %v457
        %564 = vmatprep.subr.bf16.mxu0 %v462
        %565 = vmatpush1.bf16.msra.mxu0 %v461
        %566 = vmatprep.subr.bf16.mxu0 %v466
        %567 = vmatpush1.bf16.msra.mxu0 %v465
        %568 = vmatprep.subr.bf16.mxu0 0
        %569 = vmatpush1.bf16.msra.mxu0 0
        %570 = vmatprep.subr.bf16.mxu0 0
        %571 = vmatpush1.bf16.msra.mxu0 0
        %572 = vmatprep.subr.bf16.mxu0 0
        %573 = vmatpush1.bf16.msra.mxu0 0
        %574 = vmatprep.subr.bf16.mxu0 0
        %575 = vmatpush1.bf16.msra.mxu0 0
        %576 = vmatprep.subr.bf16.mxu0 0
        %577 = vmatpush1.bf16.msra.mxu0 0
        %578 = vmatprep.subr.bf16.mxu0 0
        %579 = vmatpush1.bf16.msra.mxu0 0
        %580 = vmatprep.subr.bf16.mxu0 0
        %581 = vmatpush1.bf16.msra.mxu0 0
        %582 = vmatprep.subr.bf16.mxu0 0
        %583 = vmatpush1.bf16.msra.mxu0 0
        %584 = vmatprep.mubr.bf16.mxu0 0
        %585 = vmatmul.mubr.bf16.gmra.mrb[0].mxu0 %v305
        %v586 = vpop.f32.mrb[0].mxu0
        %v587 = vadd.f32 0.0, %v586
        %v588 = vpop.f32.mrb[0].mxu0
        %v589 = vadd.f32 0.0, %v588
        %v590 = vpop.f32.mrb[0].mxu0
        %v591 = vadd.f32 0.0, %v590
        %v592 = vpop.f32.mrb[0].mxu0
        %v593 = vadd.f32 0.0, %v592
        %594 = vmatprep.mubr.bf16.mxu0 0
        %595 = vmatmul.mubr.bf16.gmra.mrb[0].mxu0 %v306
        %v596 = vpop.f32.mrb[0].mxu0
        %v597 = vadd.f32 0.0, %v596
        %v598 = vpop.f32.mrb[0].mxu0
        %v599 = vadd.f32 0.0, %v598
        %v600 = vpop.f32.mrb[0].mxu0
        %v601 = vadd.f32 0.0, %v600
        %v602 = vpop.f32.mrb[0].mxu0
        %v603 = vadd.f32 0.0, %v602
        %604 = vdwg.mxu0
        %605 = vst [vmem:[#allocation2] sm:$0xff] %v534
        %606 = vst [vmem:[#allocation2 + $0x8] sm:$0xff] %v536
        %607 = vst [vmem:[#allocation2 + $0x10] sm:$0xff] %v587
        %608 = vst [vmem:[#allocation2 + $0x18] sm:$0xff] %v589
        %609 = vst [vmem:[#allocation2 + $0x20] sm:$0xff] %v538
        %610 = vst [vmem:[#allocation2 + $0x28] sm:$0xff] %v540
        %611 = vst [vmem:[#allocation2 + $0x30] sm:$0xff] %v591
        %612 = vst [vmem:[#allocation2 + $0x38] sm:$0xff] %v593
        %613 = vst [vmem:[#allocation2 + $0x40] sm:$0xff] %v544
        %614 = vst [vmem:[#allocation2 + $0x48] sm:$0xff] %v546
        %615 = vst [vmem:[#allocation2 + $0x50] sm:$0xff] %v597
        %616 = vst [vmem:[#allocation2 + $0x58] sm:$0xff] %v599
        %617 = vst [vmem:[#allocation2 + $0x60] sm:$0xff] %v548
        %618 = vst [vmem:[#allocation2 + $0x68] sm:$0xff] %v550
        %619 = vst [vmem:[#allocation2 + $0x70] sm:$0xff] %v601
        %620 = vst [vmem:[#allocation2 + $0x78] sm:$0xff] %v603
        %621 = vmatprep.subr.bf16.mxu0 0
        %622 = vmatpush1.bf16.msra.mxu0 %v305
        %623 = vmatprep.subr.bf16.mxu0 0
        %624 = vmatpush1.bf16.msra.mxu0 %v306
        %625 = vmatprep.subr.bf16.mxu0 0
        %626 = vmatpush1.bf16.msra.mxu0 0
        %627 = vmatprep.subr.bf16.mxu0 0
        %628 = vmatpush1.bf16.msra.mxu0 0
        %629 = vmatprep.subr.bf16.mxu0 0
        %630 = vmatpush1.bf16.msra.mxu0 0
        %631 = vmatprep.subr.bf16.mxu0 0
        %632 = vmatpush1.bf16.msra.mxu0 0
        %633 = vmatprep.subr.bf16.mxu0 0
        %634 = vmatpush1.bf16.msra.mxu0 0
        %635 = vmatprep.subr.bf16.mxu0 0
        %636 = vmatpush1.bf16.msra.mxu0 0
        %637 = vmatprep.subr.bf16.mxu0 0
        %638 = vmatpush1.bf16.msra.mxu0 0
        %639 = vmatprep.subr.bf16.mxu0 0
        %640 = vmatpush1.bf16.msra.mxu0 0
        %641 = vmatprep.subr.bf16.mxu0 0
        %642 = vmatpush1.bf16.msra.mxu0 0
        %643 = vmatprep.subr.bf16.mxu0 0
        %644 = vmatpush1.bf16.msra.mxu0 0
        %645 = vmatprep.subr.bf16.mxu0 0
        %646 = vmatpush1.bf16.msra.mxu0 0
        %647 = vmatprep.subr.bf16.mxu0 0
        %648 = vmatpush1.bf16.msra.mxu0 0
        %649 = vmatprep.subr.bf16.mxu0 0
        %650 = vmatpush1.bf16.msra.mxu0 0
        %651 = vmatprep.subr.bf16.mxu0 0
        %652 = vmatpush1.bf16.msra.mxu0 0
        %653 = vmatprep.mubr.bf16.mxu0 0
        %654 = vmatmul.mubr.bf16.gmra.mrb[0].mxu0 %v251
        %v655 = vpop.f32.mrb[0].mxu0
        %v656 = vadd.f32 0.0, %v655
        %v657 = vpop.f32.mrb[0].mxu0
        %v658 = vpop.f32.mrb[0].mxu0
        %v659 = vadd.f32 0.0, %v658
        %v660 = vpop.f32.mrb[0].mxu0
        %661 = vmatprep.mubr.bf16.mxu0 0
        %662 = vmatmul.mubr.bf16.gmra.mrb[0].mxu0 %v254
        %v663 = vpop.f32.mrb[0].mxu0
        %v664 = vadd.f32 0.0, %v663
        %v665 = vpop.f32.mrb[0].mxu0
        %v666 = vpop.f32.mrb[0].mxu0
        %v667 = vadd.f32 0.0, %v666
        %v668 = vpop.f32.mrb[0].mxu0
        %669 = vdwg.mxu0
        %v670 = vpack.c.bf16 %v659, %v656
        %v671 = vpack.c.bf16 %v667, %v664
        %s672 = scalar_lea.vmem [#allocation8], 256
        %v673 = vld [vmem:[%s672] sm:$0xff]
        %v674 = vld [vmem:[%s672 + $0x8] sm:$0xff]
        %v675 = vld [vmem:[%s672 + $0x10] sm:$0xff]
        %v676 = vld [vmem:[%s672 + $0x18] sm:$0xff]
        %v677 = vld [vmem:[%s672 + $0x20] sm:$0xff]
        %v678 = vld [vmem:[%s672 + $0x28] sm:$0xff]
        %v679 = vld [vmem:[%s672 + $0x30] sm:$0xff]
        %v680 = vld [vmem:[%s672 + $0x38] sm:$0xff]
        %v681 = vld [vmem:[%s672 + $0x40] sm:$0xff]
        %v682 = vld [vmem:[%s672 + $0x48] sm:$0xff]
        %v683 = vld [vmem:[%s672 + $0x50] sm:$0xff]
        %v684 = vld [vmem:[%s672 + $0x58] sm:$0xff]
        %v685 = vld [vmem:[%s672 + $0x60] sm:$0xff]
        %v686 = vld [vmem:[%s672 + $0x68] sm:$0xff]
        %v687 = vld [vmem:[%s672 + $0x70] sm:$0xff]
        %v688 = vld [vmem:[%s672 + $0x78] sm:$0xff]
        %v689 = vld [vmem:[%s672 + $0x80] sm:$0xff]
        %v690 = vld [vmem:[%s672 + $0x88] sm:$0xff]
        %v691 = vld [vmem:[%s672 + $0x90] sm:$0xff]
        %v692 = vld [vmem:[%s672 + $0x98] sm:$0xff]
        %v693 = vld [vmem:[%s672 + $0xa0] sm:$0xff]
        %v694 = vld [vmem:[%s672 + $0xa8] sm:$0xff]
        %v695 = vld [vmem:[%s672 + $0xb0] sm:$0xff]
        %v696 = vld [vmem:[%s672 + $0xb8] sm:$0xff]
        %v697 = vld [vmem:[%s672 + $0xc0] sm:$0xff]
        %v698 = vld [vmem:[%s672 + $0xc8] sm:$0xff]
        %v699 = vld [vmem:[%s672 + $0xd0] sm:$0xff]
        %v700 = vld [vmem:[%s672 + $0xd8] sm:$0xff]
        %v701 = vld [vmem:[%s672 + $0xe0] sm:$0xff]
        %v702 = vld [vmem:[%s672 + $0xe8] sm:$0xff]
        %v703 = vld [vmem:[%s672 + $0xf0] sm:$0xff]
        %v704 = vld [vmem:[%s672 + $0xf8] sm:$0xff]
        %v737 = vunpack.c.l.b16 %v673
        %v738 = vunpack.c.h.b16 %v673
        %v739 = vunpack.c.l.b16 %v674
        %v740 = vunpack.c.h.b16 %v674
        %v741 = vunpack.c.l.b16 %v675
        %v742 = vunpack.c.h.b16 %v675
        %v743 = vunpack.c.l.b16 %v676
        %v744 = vunpack.c.h.b16 %v676
        %v745 = vunpack.c.l.b16 %v677
        %v746 = vunpack.c.h.b16 %v677
        %v747 = vunpack.c.l.b16 %v678
        %v748 = vunpack.c.h.b16 %v678
        %v749 = vunpack.c.l.b16 %v679
        %v750 = vunpack.c.h.b16 %v679
        %v751 = vunpack.c.l.b16 %v680
        %v752 = vunpack.c.h.b16 %v680
        %v753 = vunpack.c.l.b16 %v681
        %v754 = vunpack.c.h.b16 %v681
        %v755 = vunpack.c.l.b16 %v682
        %v756 = vunpack.c.h.b16 %v682
        %v757 = vunpack.c.l.b16 %v683
        %v758 = vunpack.c.h.b16 %v683
        %v759 = vunpack.c.l.b16 %v684
        %v760 = vunpack.c.h.b16 %v684
        %v761 = vunpack.c.l.b16 %v685
        %v762 = vunpack.c.h.b16 %v685
        %v763 = vunpack.c.l.b16 %v686
        %v764 = vunpack.c.h.b16 %v686
        %v765 = vunpack.c.l.b16 %v687
        %v766 = vunpack.c.h.b16 %v687
        %v767 = vunpack.c.l.b16 %v688
        %v768 = vunpack.c.h.b16 %v688
        %v769 = vunpack.c.l.b16 %v689
        %v770 = vunpack.c.h.b16 %v689
        %v771 = vunpack.c.l.b16 %v690
        %v772 = vunpack.c.h.b16 %v690
        %v773 = vunpack.c.l.b16 %v691
        %v774 = vunpack.c.h.b16 %v691
        %v775 = vunpack.c.l.b16 %v692
        %v776 = vunpack.c.h.b16 %v692
        %v777 = vunpack.c.l.b16 %v693
        %v778 = vunpack.c.h.b16 %v693
        %v779 = vunpack.c.l.b16 %v694
        %v780 = vunpack.c.h.b16 %v694
        %v781 = vunpack.c.l.b16 %v695
        %v782 = vunpack.c.h.b16 %v695
        %v783 = vunpack.c.l.b16 %v696
        %v784 = vunpack.c.h.b16 %v696
        %v785 = vunpack.c.l.b16 %v697
        %v786 = vunpack.c.h.b16 %v697
        %v787 = vunpack.c.l.b16 %v698
        %v788 = vunpack.c.h.b16 %v698
        %v789 = vunpack.c.l.b16 %v699
        %v790 = vunpack.c.h.b16 %v699
        %v791 = vunpack.c.l.b16 %v700
        %v792 = vunpack.c.h.b16 %v700
        %v793 = vunpack.c.l.b16 %v701
        %v794 = vunpack.c.h.b16 %v701
        %v795 = vunpack.c.l.b16 %v702
        %v796 = vunpack.c.h.b16 %v702
        %v797 = vunpack.c.l.b16 %v703
        %v798 = vunpack.c.h.b16 %v703
        %v799 = vunpack.c.l.b16 %v704
        %v800 = vunpack.c.h.b16 %v704
        %v801 = vpack.c.b16 %v741, %v737
        %v802 = vpack.c.b16 %v742, %v738
        %v803 = vpack.c.b16 %v743, %v739
        %v804 = vpack.c.b16 %v744, %v740
        %v805 = vpack.c.b16 %v749, %v745
        %v806 = vpack.c.b16 %v750, %v746
        %v807 = vpack.c.b16 %v751, %v747
        %v808 = vpack.c.b16 %v752, %v748
        %v809 = vpack.c.b16 %v757, %v753
        %v810 = vpack.c.b16 %v758, %v754
        %v811 = vpack.c.b16 %v759, %v755
        %v812 = vpack.c.b16 %v760, %v756
        %v813 = vpack.c.b16 %v765, %v761
        %v814 = vpack.c.b16 %v766, %v762
        %v815 = vpack.c.b16 %v767, %v763
        %v816 = vpack.c.b16 %v768, %v764
        %v817 = vpack.c.b16 %v773, %v769
        %v818 = vpack.c.b16 %v774, %v770
        %v819 = vpack.c.b16 %v775, %v771
        %v820 = vpack.c.b16 %v776, %v772
        %v821 = vpack.c.b16 %v781, %v777
        %v822 = vpack.c.b16 %v782, %v778
        %v823 = vpack.c.b16 %v783, %v779
        %v824 = vpack.c.b16 %v784, %v780
        %v825 = vpack.c.b16 %v789, %v785
        %v826 = vpack.c.b16 %v790, %v786
        %v827 = vpack.c.b16 %v791, %v787
        %v828 = vpack.c.b16 %v792, %v788
        %v829 = vpack.c.b16 %v797, %v793
        %v830 = vpack.c.b16 %v798, %v794
        %v831 = vpack.c.b16 %v799, %v795
        %v832 = vpack.c.b16 %v800, %v796
        %865 = vmatprep.subr.bf16.mxu0 %v802
        %866 = vmatpush1.bf16.msra.mxu0 %v801
        %867 = vmatprep.subr.bf16.mxu0 %v806
        %868 = vmatpush1.bf16.msra.mxu0 %v805
        %869 = vmatprep.subr.bf16.mxu0 %v810
        %870 = vmatpush1.bf16.msra.mxu0 %v809
        %871 = vmatprep.subr.bf16.mxu0 %v814
        %872 = vmatpush1.bf16.msra.mxu0 %v813
        %873 = vmatprep.subr.bf16.mxu0 %v818
        %874 = vmatpush1.bf16.msra.mxu0 %v817
        %875 = vmatprep.subr.bf16.mxu0 %v822
        %876 = vmatpush1.bf16.msra.mxu0 %v821
        %877 = vmatprep.subr.bf16.mxu0 %v826
        %878 = vmatpush1.bf16.msra.mxu0 %v825
        %879 = vmatprep.subr.bf16.mxu0 %v830
        %880 = vmatpush1.bf16.msra.mxu0 %v829
        %881 = vmatprep.subr.bf16.mxu0 0
        %882 = vmatpush1.bf16.msra.mxu0 0
        %883 = vmatprep.subr.bf16.mxu0 0
        %884 = vmatpush1.bf16.msra.mxu0 0
        %885 = vmatprep.subr.bf16.mxu0 0
        %886 = vmatpush1.bf16.msra.mxu0 0
        %887 = vmatprep.subr.bf16.mxu0 0
        %888 = vmatpush1.bf16.msra.mxu0 0
        %889 = vmatprep.subr.bf16.mxu0 0
        %890 = vmatpush1.bf16.msra.mxu0 0
        %891 = vmatprep.subr.bf16.mxu0 0
        %892 = vmatpush1.bf16.msra.mxu0 0
        %893 = vmatprep.subr.bf16.mxu0 0
        %894 = vmatpush1.bf16.msra.mxu0 0
        %895 = vmatprep.subr.bf16.mxu0 0
        %896 = vmatpush1.bf16.msra.mxu0 0
        %897 = vmatprep.mubr.bf16.mxu0 0
        %898 = vmatmul.mubr.bf16.gmra.mrb[0].mxu0 %v670
        %v899 = vpop.f32.mrb[0].mxu0
        %v900 = vadd.f32 0.0, %v899
        %v901 = vpop.f32.mrb[0].mxu0
        %v902 = vadd.f32 0.0, %v901
        %v903 = vpop.f32.mrb[0].mxu0
        %v904 = vadd.f32 0.0, %v903
        %v905 = vpop.f32.mrb[0].mxu0
        %v906 = vadd.f32 0.0, %v905
        %907 = vmatprep.mubr.bf16.mxu0 0
        %908 = vmatmul.mubr.bf16.gmra.mrb[0].mxu0 %v671
        %v909 = vpop.f32.mrb[0].mxu0
        %v910 = vadd.f32 0.0, %v909
        %v911 = vpop.f32.mrb[0].mxu0
        %v912 = vadd.f32 0.0, %v911
        %v913 = vpop.f32.mrb[0].mxu0
        %v914 = vadd.f32 0.0, %v913
        %v915 = vpop.f32.mrb[0].mxu0
        %v916 = vadd.f32 0.0, %v915
        %917 = vdwg.mxu0
        %918 = vmatprep.subr.bf16.mxu0 %v804
        %919 = vmatpush1.bf16.msra.mxu0 %v803
        %920 = vmatprep.subr.bf16.mxu0 %v808
        %921 = vmatpush1.bf16.msra.mxu0 %v807
        %922 = vmatprep.subr.bf16.mxu0 %v812
        %923 = vmatpush1.bf16.msra.mxu0 %v811
        %924 = vmatprep.subr.bf16.mxu0 %v816
        %925 = vmatpush1.bf16.msra.mxu0 %v815
        %926 = vmatprep.subr.bf16.mxu0 %v820
        %927 = vmatpush1.bf16.msra.mxu0 %v819
        %928 = vmatprep.subr.bf16.mxu0 %v824
        %929 = vmatpush1.bf16.msra.mxu0 %v823
        %930 = vmatprep.subr.bf16.mxu0 %v828
        %931 = vmatpush1.bf16.msra.mxu0 %v827
        %932 = vmatprep.subr.bf16.mxu0 %v832
        %933 = vmatpush1.bf16.msra.mxu0 %v831
        %934 = vmatprep.subr.bf16.mxu0 0
        %935 = vmatpush1.bf16.msra.mxu0 0
        %936 = vmatprep.subr.bf16.mxu0 0
        %937 = vmatpush1.bf16.msra.mxu0 0
        %938 = vmatprep.subr.bf16.mxu0 0
        %939 = vmatpush1.bf16.msra.mxu0 0
        %940 = vmatprep.subr.bf16.mxu0 0
        %941 = vmatpush1.bf16.msra.mxu0 0
        %942 = vmatprep.subr.bf16.mxu0 0
        %943 = vmatpush1.bf16.msra.mxu0 0
        %944 = vmatprep.subr.bf16.mxu0 0
        %945 = vmatpush1.bf16.msra.mxu0 0
        %946 = vmatprep.subr.bf16.mxu0 0
        %947 = vmatpush1.bf16.msra.mxu0 0
        %948 = vmatprep.subr.bf16.mxu0 0
        %949 = vmatpush1.bf16.msra.mxu0 0
        %950 = vmatprep.mubr.bf16.mxu0 0
        %951 = vmatmul.mubr.bf16.gmra.mrb[0].mxu0 %v670
        %v952 = vpop.f32.mrb[0].mxu0
        %v953 = vadd.f32 0.0, %v952
        %v954 = vpop.f32.mrb[0].mxu0
        %v955 = vadd.f32 0.0, %v954
        %v956 = vpop.f32.mrb[0].mxu0
        %v957 = vadd.f32 0.0, %v956
        %v958 = vpop.f32.mrb[0].mxu0
        %v959 = vadd.f32 0.0, %v958
        %960 = vmatprep.mubr.bf16.mxu0 0
        %961 = vmatmul.mubr.bf16.gmra.mrb[0].mxu0 %v671
        %v962 = vpop.f32.mrb[0].mxu0
        %v963 = vadd.f32 0.0, %v962
        %v964 = vpop.f32.mrb[0].mxu0
        %v965 = vadd.f32 0.0, %v964
        %v966 = vpop.f32.mrb[0].mxu0
        %v967 = vadd.f32 0.0, %v966
        %v968 = vpop.f32.mrb[0].mxu0
        %v969 = vadd.f32 0.0, %v968
        %970 = vdwg.mxu0
        %v971 = vld [vmem:[#allocation2] sm:$0xff]
        %v972 = vld [vmem:[#allocation2 + $0x8] sm:$0xff]
        %v973 = vld [vmem:[#allocation2 + $0x10] sm:$0xff]
        %v974 = vld [vmem:[#allocation2 + $0x18] sm:$0xff]
        %v975 = vld [vmem:[#allocation2 + $0x20] sm:$0xff]
        %v976 = vld [vmem:[#allocation2 + $0x28] sm:$0xff]
        %v977 = vld [vmem:[#allocation2 + $0x30] sm:$0xff]
        %v978 = vld [vmem:[#allocation2 + $0x38] sm:$0xff]
        %v979 = vld [vmem:[#allocation2 + $0x40] sm:$0xff]
        %v980 = vld [vmem:[#allocation2 + $0x48] sm:$0xff]
        %v981 = vld [vmem:[#allocation2 + $0x50] sm:$0xff]
        %v982 = vld [vmem:[#allocation2 + $0x58] sm:$0xff]
        %v983 = vld [vmem:[#allocation2 + $0x60] sm:$0xff]
        %v984 = vld [vmem:[#allocation2 + $0x68] sm:$0xff]
        %v985 = vld [vmem:[#allocation2 + $0x70] sm:$0xff]
        %v986 = vld [vmem:[#allocation2 + $0x78] sm:$0xff]
        %v987 = vadd.f32 %v971, %v900
        %v988 = vadd.f32 %v972, %v902
        %v989 = vadd.f32 %v973, %v953
        %v990 = vadd.f32 %v974, %v955
        %v991 = vadd.f32 %v975, %v904
        %v992 = vadd.f32 %v976, %v906
        %v993 = vadd.f32 %v977, %v957
        %v994 = vadd.f32 %v978, %v959
        %v995 = vadd.f32 %v979, %v910
        %v996 = vadd.f32 %v980, %v912
        %v997 = vadd.f32 %v981, %v963
        %v998 = vadd.f32 %v982, %v965
        %v999 = vadd.f32 %v983, %v914
        %v1000 = vadd.f32 %v984, %v916
        %v1001 = vadd.f32 %v985, %v967
        %v1002 = vadd.f32 %v986, %v969
        %1003 = vst [vmem:[#allocation2] sm:$0xff] %v987
        %1004 = vst [vmem:[#allocation2 + $0x8] sm:$0xff] %v988
        %1005 = vst [vmem:[#allocation2 + $0x10] sm:$0xff] %v989
        %1006 = vst [vmem:[#allocation2 + $0x18] sm:$0xff] %v990
        %1007 = vst [vmem:[#allocation2 + $0x20] sm:$0xff] %v991
        %1008 = vst [vmem:[#allocation2 + $0x28] sm:$0xff] %v992
        %1009 = vst [vmem:[#allocation2 + $0x30] sm:$0xff] %v993
        %1010 = vst [vmem:[#allocation2 + $0x38] sm:$0xff] %v994
        %1011 = vst [vmem:[#allocation2 + $0x40] sm:$0xff] %v995
        %1012 = vst [vmem:[#allocation2 + $0x48] sm:$0xff] %v996
        %1013 = vst [vmem:[#allocation2 + $0x50] sm:$0xff] %v997
        %1014 = vst [vmem:[#allocation2 + $0x58] sm:$0xff] %v998
        %1015 = vst [vmem:[#allocation2 + $0x60] sm:$0xff] %v999
        %1016 = vst [vmem:[#allocation2 + $0x68] sm:$0xff] %v1000
        %1017 = vst [vmem:[#allocation2 + $0x70] sm:$0xff] %v1001
        %1018 = vst [vmem:[#allocation2 + $0x78] sm:$0xff] %v1002
        %s1019 = scalar_lea.vmem [#allocation3], 16
        %v1020 = vld [vmem:[%s1019] sm:$0xf]
        %v1021 = vld [vmem:[%s1019 + $0x4] sm:$0xf]
        %v1022 = vld [vmem:[%s1019 + $0x8] sm:$0xf]
        %v1023 = vld [vmem:[%s1019 + $0xc] sm:$0xf]
        %v1028 = vunpack.c.l.b16 %v1020
        %v1029 = vunpack.c.l.b16 %v1021
        %v1030 = vunpack.c.l.b16 %v1022
        %v1031 = vunpack.c.l.b16 %v1023
        %v1032 = vpack.c.b16 %v1029, %v1028
        %v1033 = vpack.c.b16 %v1031, %v1030
        %v1035 = vsel %vm249, %v1032, 0
        %v1038 = vsel %vm249, %v1033, 0
        %1040 = vmatprep.subr.bf16.mxu0 0
        %1041 = vmatpush1.bf16.msra.mxu0 %v245
        %1042 = vmatprep.subr.bf16.mxu0 0
        %1043 = vmatpush1.bf16.msra.mxu0 %v246
        %1044 = vmatprep.subr.bf16.mxu0 0
        %1045 = vmatpush1.bf16.msra.mxu0 0
        %1046 = vmatprep.subr.bf16.mxu0 0
        %1047 = vmatpush1.bf16.msra.mxu0 0
        %1048 = vmatprep.subr.bf16.mxu0 0
        %1049 = vmatpush1.bf16.msra.mxu0 0
        %1050 = vmatprep.subr.bf16.mxu0 0
        %1051 = vmatpush1.bf16.msra.mxu0 0
        %1052 = vmatprep.subr.bf16.mxu0 0
        %1053 = vmatpush1.bf16.msra.mxu0 0
        %1054 = vmatprep.subr.bf16.mxu0 0
        %1055 = vmatpush1.bf16.msra.mxu0 0
        %1056 = vmatprep.subr.bf16.mxu0 0
        %1057 = vmatpush1.bf16.msra.mxu0 0
        %1058 = vmatprep.subr.bf16.mxu0 0
        %1059 = vmatpush1.bf16.msra.mxu0 0
        %1060 = vmatprep.subr.bf16.mxu0 0
        %1061 = vmatpush1.bf16.msra.mxu0 0
        %1062 = vmatprep.subr.bf16.mxu0 0
        %1063 = vmatpush1.bf16.msra.mxu0 0
        %1064 = vmatprep.subr.bf16.mxu0 0
        %1065 = vmatpush1.bf16.msra.mxu0 0
        %1066 = vmatprep.subr.bf16.mxu0 0
        %1067 = vmatpush1.bf16.msra.mxu0 0
        %1068 = vmatprep.subr.bf16.mxu0 0
        %1069 = vmatpush1.bf16.msra.mxu0 0
        %1070 = vmatprep.subr.bf16.mxu0 0
        %1071 = vmatpush1.bf16.msra.mxu0 0
        %1072 = vmatprep.mubr.bf16.mxu0 0
        %1073 = vmatmul.mubr.bf16.gmra.mrb[0].mxu0 %v1035
        %v1074 = vpop.f32.mrb[0].mxu0
        %v1075 = vadd.f32 0.0, %v1074
        %v1076 = vpop.f32.mrb[0].mxu0
        %v1077 = vpop.f32.mrb[0].mxu0
        %v1078 = vadd.f32 0.0, %v1077
        %v1079 = vpop.f32.mrb[0].mxu0
        %1080 = vmatprep.mubr.bf16.mxu0 0
        %1081 = vmatmul.mubr.bf16.gmra.mrb[0].mxu0 %v1038
        %v1082 = vpop.f32.mrb[0].mxu0
        %v1083 = vadd.f32 0.0, %v1082
        %v1084 = vpop.f32.mrb[0].mxu0
        %v1085 = vpop.f32.mrb[0].mxu0
        %v1086 = vadd.f32 0.0, %v1085
        %v1087 = vpop.f32.mrb[0].mxu0
        %1088 = vdwg.mxu0
        %v1089 = vpack.c.bf16 %v1078, %v1075
        %v1090 = vpack.c.bf16 %v1086, %v1083
        %s1091 = scalar_lea.vmem [#allocation8], 512
        %v1092 = vld [vmem:[%s1091] sm:$0xff]
        %v1093 = vld [vmem:[%s1091 + $0x8] sm:$0xff]
        %v1094 = vld [vmem:[%s1091 + $0x10] sm:$0xff]
        %v1095 = vld [vmem:[%s1091 + $0x18] sm:$0xff]
        %v1096 = vld [vmem:[%s1091 + $0x20] sm:$0xff]
        %v1097 = vld [vmem:[%s1091 + $0x28] sm:$0xff]
        %v1098 = vld [vmem:[%s1091 + $0x30] sm:$0xff]
        %v1099 = vld [vmem:[%s1091 + $0x38] sm:$0xff]
        %v1100 = vld [vmem:[%s1091 + $0x40] sm:$0xff]
        %v1101 = vld [vmem:[%s1091 + $0x48] sm:$0xff]
        %v1102 = vld [vmem:[%s1091 + $0x50] sm:$0xff]
        %v1103 = vld [vmem:[%s1091 + $0x58] sm:$0xff]
        %v1104 = vld [vmem:[%s1091 + $0x60] sm:$0xff]
        %v1105 = vld [vmem:[%s1091 + $0x68] sm:$0xff]
        %v1106 = vld [vmem:[%s1091 + $0x70] sm:$0xff]
        %v1107 = vld [vmem:[%s1091 + $0x78] sm:$0xff]
        %v1108 = vld [vmem:[%s1091 + $0x80] sm:$0xff]
        %v1109 = vld [vmem:[%s1091 + $0x88] sm:$0xff]
        %v1110 = vld [vmem:[%s1091 + $0x90] sm:$0xff]
        %v1111 = vld [vmem:[%s1091 + $0x98] sm:$0xff]
        %v1112 = vld [vmem:[%s1091 + $0xa0] sm:$0xff]
        %v1113 = vld [vmem:[%s1091 + $0xa8] sm:$0xff]
        %v1114 = vld [vmem:[%s1091 + $0xb0] sm:$0xff]
        %v1115 = vld [vmem:[%s1091 + $0xb8] sm:$0xff]
        %v1116 = vld [vmem:[%s1091 + $0xc0] sm:$0xff]
        %v1117 = vld [vmem:[%s1091 + $0xc8] sm:$0xff]
        %v1118 = vld [vmem:[%s1091 + $0xd0] sm:$0xff]
        %v1119 = vld [vmem:[%s1091 + $0xd8] sm:$0xff]
        %v1120 = vld [vmem:[%s1091 + $0xe0] sm:$0xff]
        %v1121 = vld [vmem:[%s1091 + $0xe8] sm:$0xff]
        %v1122 = vld [vmem:[%s1091 + $0xf0] sm:$0xff]
        %v1123 = vld [vmem:[%s1091 + $0xf8] sm:$0xff]
        %v1156 = vunpack.c.l.b16 %v1092
        %v1157 = vunpack.c.h.b16 %v1092
        %v1158 = vunpack.c.l.b16 %v1093
        %v1159 = vunpack.c.h.b16 %v1093
        %v1160 = vunpack.c.l.b16 %v1094
        %v1161 = vunpack.c.h.b16 %v1094
        %v1162 = vunpack.c.l.b16 %v1095
        %v1163 = vunpack.c.h.b16 %v1095
        %v1164 = vunpack.c.l.b16 %v1096
        %v1165 = vunpack.c.h.b16 %v1096
        %v1166 = vunpack.c.l.b16 %v1097
        %v1167 = vunpack.c.h.b16 %v1097
        %v1168 = vunpack.c.l.b16 %v1098
        %v1169 = vunpack.c.h.b16 %v1098
        %v1170 = vunpack.c.l.b16 %v1099
        %v1171 = vunpack.c.h.b16 %v1099
        %v1172 = vunpack.c.l.b16 %v1100
        %v1173 = vunpack.c.h.b16 %v1100
        %v1174 = vunpack.c.l.b16 %v1101
        %v1175 = vunpack.c.h.b16 %v1101
        %v1176 = vunpack.c.l.b16 %v1102
        %v1177 = vunpack.c.h.b16 %v1102
        %v1178 = vunpack.c.l.b16 %v1103
        %v1179 = vunpack.c.h.b16 %v1103
        %v1180 = vunpack.c.l.b16 %v1104
        %v1181 = vunpack.c.h.b16 %v1104
        %v1182 = vunpack.c.l.b16 %v1105
        %v1183 = vunpack.c.h.b16 %v1105
        %v1184 = vunpack.c.l.b16 %v1106
        %v1185 = vunpack.c.h.b16 %v1106
        %v1186 = vunpack.c.l.b16 %v1107
        %v1187 = vunpack.c.h.b16 %v1107
        %v1188 = vunpack.c.l.b16 %v1108
        %v1189 = vunpack.c.h.b16 %v1108
        %v1190 = vunpack.c.l.b16 %v1109
        %v1191 = vunpack.c.h.b16 %v1109
        %v1192 = vunpack.c.l.b16 %v1110
        %v1193 = vunpack.c.h.b16 %v1110
        %v1194 = vunpack.c.l.b16 %v1111
        %v1195 = vunpack.c.h.b16 %v1111
        %v1196 = vunpack.c.l.b16 %v1112
        %v1197 = vunpack.c.h.b16 %v1112
        %v1198 = vunpack.c.l.b16 %v1113
        %v1199 = vunpack.c.h.b16 %v1113
        %v1200 = vunpack.c.l.b16 %v1114
        %v1201 = vunpack.c.h.b16 %v1114
        %v1202 = vunpack.c.l.b16 %v1115
        %v1203 = vunpack.c.h.b16 %v1115
        %v1204 = vunpack.c.l.b16 %v1116
        %v1205 = vunpack.c.h.b16 %v1116
        %v1206 = vunpack.c.l.b16 %v1117
        %v1207 = vunpack.c.h.b16 %v1117
        %v1208 = vunpack.c.l.b16 %v1118
        %v1209 = vunpack.c.h.b16 %v1118
        %v1210 = vunpack.c.l.b16 %v1119
        %v1211 = vunpack.c.h.b16 %v1119
        %v1212 = vunpack.c.l.b16 %v1120
        %v1213 = vunpack.c.h.b16 %v1120
        %v1214 = vunpack.c.l.b16 %v1121
        %v1215 = vunpack.c.h.b16 %v1121
        %v1216 = vunpack.c.l.b16 %v1122
        %v1217 = vunpack.c.h.b16 %v1122
        %v1218 = vunpack.c.l.b16 %v1123
        %v1219 = vunpack.c.h.b16 %v1123
        %v1220 = vpack.c.b16 %v1160, %v1156
        %v1221 = vpack.c.b16 %v1161, %v1157
        %v1222 = vpack.c.b16 %v1162, %v1158
        %v1223 = vpack.c.b16 %v1163, %v1159
        %v1224 = vpack.c.b16 %v1168, %v1164
        %v1225 = vpack.c.b16 %v1169, %v1165
        %v1226 = vpack.c.b16 %v1170, %v1166
        %v1227 = vpack.c.b16 %v1171, %v1167
        %v1228 = vpack.c.b16 %v1176, %v1172
        %v1229 = vpack.c.b16 %v1177, %v1173
        %v1230 = vpack.c.b16 %v1178, %v1174
        %v1231 = vpack.c.b16 %v1179, %v1175
        %v1232 = vpack.c.b16 %v1184, %v1180
        %v1233 = vpack.c.b16 %v1185, %v1181
        %v1234 = vpack.c.b16 %v1186, %v1182
        %v1235 = vpack.c.b16 %v1187, %v1183
        %v1236 = vpack.c.b16 %v1192, %v1188
        %v1237 = vpack.c.b16 %v1193, %v1189
        %v1238 = vpack.c.b16 %v1194, %v1190
        %v1239 = vpack.c.b16 %v1195, %v1191
        %v1240 = vpack.c.b16 %v1200, %v1196
        %v1241 = vpack.c.b16 %v1201, %v1197
        %v1242 = vpack.c.b16 %v1202, %v1198
        %v1243 = vpack.c.b16 %v1203, %v1199
        %v1244 = vpack.c.b16 %v1208, %v1204
        %v1245 = vpack.c.b16 %v1209, %v1205
        %v1246 = vpack.c.b16 %v1210, %v1206
        %v1247 = vpack.c.b16 %v1211, %v1207
        %v1248 = vpack.c.b16 %v1216, %v1212
        %v1249 = vpack.c.b16 %v1217, %v1213
        %v1250 = vpack.c.b16 %v1218, %v1214
        %v1251 = vpack.c.b16 %v1219, %v1215
        %1284 = vmatprep.subr.bf16.mxu0 %v1221
        %1285 = vmatpush1.bf16.msra.mxu0 %v1220
        %1286 = vmatprep.subr.bf16.mxu0 %v1225
        %1287 = vmatpush1.bf16.msra.mxu0 %v1224
        %1288 = vmatprep.subr.bf16.mxu0 %v1229
        %1289 = vmatpush1.bf16.msra.mxu0 %v1228
        %1290 = vmatprep.subr.bf16.mxu0 %v1233
        %1291 = vmatpush1.bf16.msra.mxu0 %v1232
        %1292 = vmatprep.subr.bf16.mxu0 %v1237
        %1293 = vmatpush1.bf16.msra.mxu0 %v1236
        %1294 = vmatprep.subr.bf16.mxu0 %v1241
        %1295 = vmatpush1.bf16.msra.mxu0 %v1240
        %1296 = vmatprep.subr.bf16.mxu0 %v1245
        %1297 = vmatpush1.bf16.msra.mxu0 %v1244
        %1298 = vmatprep.subr.bf16.mxu0 %v1249
        %1299 = vmatpush1.bf16.msra.mxu0 %v1248
        %1300 = vmatprep.subr.bf16.mxu0 0
        %1301 = vmatpush1.bf16.msra.mxu0 0
        %1302 = vmatprep.subr.bf16.mxu0 0
        %1303 = vmatpush1.bf16.msra.mxu0 0
        %1304 = vmatprep.subr.bf16.mxu0 0
        %1305 = vmatpush1.bf16.msra.mxu0 0
        %1306 = vmatprep.subr.bf16.mxu0 0
        %1307 = vmatpush1.bf16.msra.mxu0 0
        %1308 = vmatprep.subr.bf16.mxu0 0
        %1309 = vmatpush1.bf16.msra.mxu0 0
        %1310 = vmatprep.subr.bf16.mxu0 0
        %1311 = vmatpush1.bf16.msra.mxu0 0
        %1312 = vmatprep.subr.bf16.mxu0 0
        %1313 = vmatpush1.bf16.msra.mxu0 0
        %1314 = vmatprep.subr.bf16.mxu0 0
        %1315 = vmatpush1.bf16.msra.mxu0 0
        %1316 = vmatprep.mubr.bf16.mxu0 0
        %1317 = vmatmul.mubr.bf16.gmra.mrb[0].mxu0 %v1089
        %v1318 = vpop.f32.mrb[0].mxu0
        %v1319 = vadd.f32 0.0, %v1318
        %v1320 = vpop.f32.mrb[0].mxu0
        %v1321 = vadd.f32 0.0, %v1320
        %v1322 = vpop.f32.mrb[0].mxu0
        %v1323 = vadd.f32 0.0, %v1322
        %v1324 = vpop.f32.mrb[0].mxu0
        %v1325 = vadd.f32 0.0, %v1324
        %1326 = vmatprep.mubr.bf16.mxu0 0
        %1327 = vmatmul.mubr.bf16.gmra.mrb[0].mxu0 %v1090
        %v1328 = vpop.f32.mrb[0].mxu0
        %v1329 = vadd.f32 0.0, %v1328
        %v1330 = vpop.f32.mrb[0].mxu0
        %v1331 = vadd.f32 0.0, %v1330
        %v1332 = vpop.f32.mrb[0].mxu0
        %v1333 = vadd.f32 0.0, %v1332
        %v1334 = vpop.f32.mrb[0].mxu0
        %v1335 = vadd.f32 0.0, %v1334
        %1336 = vdwg.mxu0
        %1337 = vmatprep.subr.bf16.mxu0 %v1223
        %1338 = vmatpush1.bf16.msra.mxu0 %v1222
        %1339 = vmatprep.subr.bf16.mxu0 %v1227
        %1340 = vmatpush1.bf16.msra.mxu0 %v1226
        %1341 = vmatprep.subr.bf16.mxu0 %v1231
        %1342 = vmatpush1.bf16.msra.mxu0 %v1230
        %1343 = vmatprep.subr.bf16.mxu0 %v1235
        %1344 = vmatpush1.bf16.msra.mxu0 %v1234
        %1345 = vmatprep.subr.bf16.mxu0 %v1239
        %1346 = vmatpush1.bf16.msra.mxu0 %v1238
        %1347 = vmatprep.subr.bf16.mxu0 %v1243
        %1348 = vmatpush1.bf16.msra.mxu0 %v1242
        %1349 = vmatprep.subr.bf16.mxu0 %v1247
        %1350 = vmatpush1.bf16.msra.mxu0 %v1246
        %1351 = vmatprep.subr.bf16.mxu0 %v1251
        %1352 = vmatpush1.bf16.msra.mxu0 %v1250
        %1353 = vmatprep.subr.bf16.mxu0 0
        %1354 = vmatpush1.bf16.msra.mxu0 0
        %1355 = vmatprep.subr.bf16.mxu0 0
        %1356 = vmatpush1.bf16.msra.mxu0 0
        %1357 = vmatprep.subr.bf16.mxu0 0
        %1358 = vmatpush1.bf16.msra.mxu0 0
        %1359 = vmatprep.subr.bf16.mxu0 0
        %1360 = vmatpush1.bf16.msra.mxu0 0
        %1361 = vmatprep.subr.bf16.mxu0 0
        %1362 = vmatpush1.bf16.msra.mxu0 0
        %1363 = vmatprep.subr.bf16.mxu0 0
        %1364 = vmatpush1.bf16.msra.mxu0 0
        %1365 = vmatprep.subr.bf16.mxu0 0
        %1366 = vmatpush1.bf16.msra.mxu0 0
        %1367 = vmatprep.subr.bf16.mxu0 0
        %1368 = vmatpush1.bf16.msra.mxu0 0
        %1369 = vmatprep.mubr.bf16.mxu0 0
        %1370 = vmatmul.mubr.bf16.gmra.mrb[0].mxu0 %v1089
        %v1371 = vpop.f32.mrb[0].mxu0
        %v1372 = vadd.f32 0.0, %v1371
        %v1373 = vpop.f32.mrb[0].mxu0
        %v1374 = vadd.f32 0.0, %v1373
        %v1375 = vpop.f32.mrb[0].mxu0
        %v1376 = vadd.f32 0.0, %v1375
        %v1377 = vpop.f32.mrb[0].mxu0
        %v1378 = vadd.f32 0.0, %v1377
        %1379 = vmatprep.mubr.bf16.mxu0 0
        %1380 = vmatmul.mubr.bf16.gmra.mrb[0].mxu0 %v1090
        %v1381 = vpop.f32.mrb[0].mxu0
        %v1382 = vadd.f32 0.0, %v1381
        %v1383 = vpop.f32.mrb[0].mxu0
        %v1384 = vadd.f32 0.0, %v1383
        %v1385 = vpop.f32.mrb[0].mxu0
        %v1386 = vadd.f32 0.0, %v1385
        %v1387 = vpop.f32.mrb[0].mxu0
        %v1388 = vadd.f32 0.0, %v1387
        %1389 = vdwg.mxu0
        %v1390 = vld [vmem:[#allocation2] sm:$0xff]
        %v1391 = vld [vmem:[#allocation2 + $0x8] sm:$0xff]
        %v1392 = vld [vmem:[#allocation2 + $0x10] sm:$0xff]
        %v1393 = vld [vmem:[#allocation2 + $0x18] sm:$0xff]
        %v1394 = vld [vmem:[#allocation2 + $0x20] sm:$0xff]
        %v1395 = vld [vmem:[#allocation2 + $0x28] sm:$0xff]
        %v1396 = vld [vmem:[#allocation2 + $0x30] sm:$0xff]
        %v1397 = vld [vmem:[#allocation2 + $0x38] sm:$0xff]
        %v1398 = vld [vmem:[#allocation2 + $0x40] sm:$0xff]
        %v1399 = vld [vmem:[#allocation2 + $0x48] sm:$0xff]
        %v1400 = vld [vmem:[#allocation2 + $0x50] sm:$0xff]
        %v1401 = vld [vmem:[#allocation2 + $0x58] sm:$0xff]
        %v1402 = vld [vmem:[#allocation2 + $0x60] sm:$0xff]
        %v1403 = vld [vmem:[#allocation2 + $0x68] sm:$0xff]
        %v1404 = vld [vmem:[#allocation2 + $0x70] sm:$0xff]
        %v1405 = vld [vmem:[#allocation2 + $0x78] sm:$0xff]
        %v1406 = vadd.f32 %v1390, %v1319
        %v1407 = vadd.f32 %v1391, %v1321
        %v1408 = vadd.f32 %v1392, %v1372
        %v1409 = vadd.f32 %v1393, %v1374
        %v1410 = vadd.f32 %v1394, %v1323
        %v1411 = vadd.f32 %v1395, %v1325
        %v1412 = vadd.f32 %v1396, %v1376
        %v1413 = vadd.f32 %v1397, %v1378
        %v1414 = vadd.f32 %v1398, %v1329
        %v1415 = vadd.f32 %v1399, %v1331
        %v1416 = vadd.f32 %v1400, %v1382
        %v1417 = vadd.f32 %v1401, %v1384
        %v1418 = vadd.f32 %v1402, %v1333
        %v1419 = vadd.f32 %v1403, %v1335
        %v1420 = vadd.f32 %v1404, %v1386
        %v1421 = vadd.f32 %v1405, %v1388
        %1422 = vst [vmem:[#allocation2] sm:$0xff] %v1406
        %1423 = vst [vmem:[#allocation2 + $0x8] sm:$0xff] %v1407
        %1424 = vst [vmem:[#allocation2 + $0x10] sm:$0xff] %v1408
        %1425 = vst [vmem:[#allocation2 + $0x18] sm:$0xff] %v1409
        %1426 = vst [vmem:[#allocation2 + $0x20] sm:$0xff] %v1410
        %1427 = vst [vmem:[#allocation2 + $0x28] sm:$0xff] %v1411
        %1428 = vst [vmem:[#allocation2 + $0x30] sm:$0xff] %v1412
        %1429 = vst [vmem:[#allocation2 + $0x38] sm:$0xff] %v1413
        %1430 = vst [vmem:[#allocation2 + $0x40] sm:$0xff] %v1414
        %1431 = vst [vmem:[#allocation2 + $0x48] sm:$0xff] %v1415
        %1432 = vst [vmem:[#allocation2 + $0x50] sm:$0xff] %v1416
        %1433 = vst [vmem:[#allocation2 + $0x58] sm:$0xff] %v1417
        %1434 = vst [vmem:[#allocation2 + $0x60] sm:$0xff] %v1418
        %1435 = vst [vmem:[#allocation2 + $0x68] sm:$0xff] %v1419
        %1436 = vst [vmem:[#allocation2 + $0x70] sm:$0xff] %v1420
        %1437 = vst [vmem:[#allocation2 + $0x78] sm:$0xff] %v1421
        %1438 = vmatprep.subr.bf16.mxu0 0
        %1439 = vmatpush1.bf16.msra.mxu0 %v1089
        %1440 = vmatprep.subr.bf16.mxu0 0
        %1441 = vmatpush1.bf16.msra.mxu0 %v1090
        %1442 = vmatprep.subr.bf16.mxu0 0
        %1443 = vmatpush1.bf16.msra.mxu0 0
        %1444 = vmatprep.subr.bf16.mxu0 0
        %1445 = vmatpush1.bf16.msra.mxu0 0
        %1446 = vmatprep.subr.bf16.mxu0 0
        %1447 = vmatpush1.bf16.msra.mxu0 0
        %1448 = vmatprep.subr.bf16.mxu0 0
        %1449 = vmatpush1.bf16.msra.mxu0 0
        %1450 = vmatprep.subr.bf16.mxu0 0
        %1451 = vmatpush1.bf16.msra.mxu0 0
        %1452 = vmatprep.subr.bf16.mxu0 0
        %1453 = vmatpush1.bf16.msra.mxu0 0
        %1454 = vmatprep.subr.bf16.mxu0 0
        %1455 = vmatpush1.bf16.msra.mxu0 0
        %1456 = vmatprep.subr.bf16.mxu0 0
        %1457 = vmatpush1.bf16.msra.mxu0 0
        %1458 = vmatprep.subr.bf16.mxu0 0
        %1459 = vmatpush1.bf16.msra.mxu0 0
        %1460 = vmatprep.subr.bf16.mxu0 0
        %1461 = vmatpush1.bf16.msra.mxu0 0
        %1462 = vmatprep.subr.bf16.mxu0 0
        %1463 = vmatpush1.bf16.msra.mxu0 0
        %1464 = vmatprep.subr.bf16.mxu0 0
        %1465 = vmatpush1.bf16.msra.mxu0 0
        %1466 = vmatprep.subr.bf16.mxu0 0
        %1467 = vmatpush1.bf16.msra.mxu0 0
        %1468 = vmatprep.subr.bf16.mxu0 0
        %1469 = vmatpush1.bf16.msra.mxu0 0
        %1470 = vmatprep.mubr.bf16.mxu0 0
        %1471 = vmatmul.mubr.bf16.gmra.mrb[0].mxu0 %v1035
        %v1472 = vpop.f32.mrb[0].mxu0
        %v1473 = vadd.f32 0.0, %v1472
        %v1474 = vpop.f32.mrb[0].mxu0
        %v1475 = vpop.f32.mrb[0].mxu0
        %v1476 = vadd.f32 0.0, %v1475
        %v1477 = vpop.f32.mrb[0].mxu0
        %1478 = vmatprep.mubr.bf16.mxu0 0
        %1479 = vmatmul.mubr.bf16.gmra.mrb[0].mxu0 %v1038
        %v1480 = vpop.f32.mrb[0].mxu0
        %v1481 = vadd.f32 0.0, %v1480
        %v1482 = vpop.f32.mrb[0].mxu0
        %v1483 = vpop.f32.mrb[0].mxu0
        %v1484 = vadd.f32 0.0, %v1483
        %v1485 = vpop.f32.mrb[0].mxu0
        %1486 = vdwg.mxu0
        %v1487 = vpack.c.bf16 %v1476, %v1473
        %v1488 = vpack.c.bf16 %v1484, %v1481
        %s1489 = scalar_lea.vmem [#allocation8], 768
        %v1490 = vld [vmem:[%s1489] sm:$0xff]
        %v1491 = vld [vmem:[%s1489 + $0x8] sm:$0xff]
        %v1492 = vld [vmem:[%s1489 + $0x10] sm:$0xff]
        %v1493 = vld [vmem:[%s1489 + $0x18] sm:$0xff]
        %v1494 = vld [vmem:[%s1489 + $0x20] sm:$0xff]
        %v1495 = vld [vmem:[%s1489 + $0x28] sm:$0xff]
        %v1496 = vld [vmem:[%s1489 + $0x30] sm:$0xff]
        %v1497 = vld [vmem:[%s1489 + $0x38] sm:$0xff]
        %v1498 = vld [vmem:[%s1489 + $0x40] sm:$0xff]
        %v1499 = vld [vmem:[%s1489 + $0x48] sm:$0xff]
        %v1500 = vld [vmem:[%s1489 + $0x50] sm:$0xff]
        %v1501 = vld [vmem:[%s1489 + $0x58] sm:$0xff]
        %v1502 = vld [vmem:[%s1489 + $0x60] sm:$0xff]
        %v1503 = vld [vmem:[%s1489 + $0x68] sm:$0xff]
        %v1504 = vld [vmem:[%s1489 + $0x70] sm:$0xff]
        %v1505 = vld [vmem:[%s1489 + $0x78] sm:$0xff]
        %v1506 = vld [vmem:[%s1489 + $0x80] sm:$0xff]
        %v1507 = vld [vmem:[%s1489 + $0x88] sm:$0xff]
        %v1508 = vld [vmem:[%s1489 + $0x90] sm:$0xff]
        %v1509 = vld [vmem:[%s1489 + $0x98] sm:$0xff]
        %v1510 = vld [vmem:[%s1489 + $0xa0] sm:$0xff]
        %v1511 = vld [vmem:[%s1489 + $0xa8] sm:$0xff]
        %v1512 = vld [vmem:[%s1489 + $0xb0] sm:$0xff]
        %v1513 = vld [vmem:[%s1489 + $0xb8] sm:$0xff]
        %v1514 = vld [vmem:[%s1489 + $0xc0] sm:$0xff]
        %v1515 = vld [vmem:[%s1489 + $0xc8] sm:$0xff]
        %v1516 = vld [vmem:[%s1489 + $0xd0] sm:$0xff]
        %v1517 = vld [vmem:[%s1489 + $0xd8] sm:$0xff]
        %v1518 = vld [vmem:[%s1489 + $0xe0] sm:$0xff]
        %v1519 = vld [vmem:[%s1489 + $0xe8] sm:$0xff]
        %v1520 = vld [vmem:[%s1489 + $0xf0] sm:$0xff]
        %v1521 = vld [vmem:[%s1489 + $0xf8] sm:$0xff]
        %v1554 = vunpack.c.l.b16 %v1490
        %v1555 = vunpack.c.h.b16 %v1490
        %v1556 = vunpack.c.l.b16 %v1491
        %v1557 = vunpack.c.h.b16 %v1491
        %v1558 = vunpack.c.l.b16 %v1492
        %v1559 = vunpack.c.h.b16 %v1492
        %v1560 = vunpack.c.l.b16 %v1493
        %v1561 = vunpack.c.h.b16 %v1493
        %v1562 = vunpack.c.l.b16 %v1494
        %v1563 = vunpack.c.h.b16 %v1494
        %v1564 = vunpack.c.l.b16 %v1495
        %v1565 = vunpack.c.h.b16 %v1495
        %v1566 = vunpack.c.l.b16 %v1496
        %v1567 = vunpack.c.h.b16 %v1496
        %v1568 = vunpack.c.l.b16 %v1497
        %v1569 = vunpack.c.h.b16 %v1497
        %v1570 = vunpack.c.l.b16 %v1498
        %v1571 = vunpack.c.h.b16 %v1498
        %v1572 = vunpack.c.l.b16 %v1499
        %v1573 = vunpack.c.h.b16 %v1499
        %v1574 = vunpack.c.l.b16 %v1500
        %v1575 = vunpack.c.h.b16 %v1500
        %v1576 = vunpack.c.l.b16 %v1501
        %v1577 = vunpack.c.h.b16 %v1501
        %v1578 = vunpack.c.l.b16 %v1502
        %v1579 = vunpack.c.h.b16 %v1502
        %v1580 = vunpack.c.l.b16 %v1503
        %v1581 = vunpack.c.h.b16 %v1503
        %v1582 = vunpack.c.l.b16 %v1504
        %v1583 = vunpack.c.h.b16 %v1504
        %v1584 = vunpack.c.l.b16 %v1505
        %v1585 = vunpack.c.h.b16 %v1505
        %v1586 = vunpack.c.l.b16 %v1506
        %v1587 = vunpack.c.h.b16 %v1506
        %v1588 = vunpack.c.l.b16 %v1507
        %v1589 = vunpack.c.h.b16 %v1507
        %v1590 = vunpack.c.l.b16 %v1508
        %v1591 = vunpack.c.h.b16 %v1508
        %v1592 = vunpack.c.l.b16 %v1509
        %v1593 = vunpack.c.h.b16 %v1509
        %v1594 = vunpack.c.l.b16 %v1510
        %v1595 = vunpack.c.h.b16 %v1510
        %v1596 = vunpack.c.l.b16 %v1511
        %v1597 = vunpack.c.h.b16 %v1511
        %v1598 = vunpack.c.l.b16 %v1512
        %v1599 = vunpack.c.h.b16 %v1512
        %v1600 = vunpack.c.l.b16 %v1513
        %v1601 = vunpack.c.h.b16 %v1513
        %v1602 = vunpack.c.l.b16 %v1514
        %v1603 = vunpack.c.h.b16 %v1514
        %v1604 = vunpack.c.l.b16 %v1515
        %v1605 = vunpack.c.h.b16 %v1515
        %v1606 = vunpack.c.l.b16 %v1516
        %v1607 = vunpack.c.h.b16 %v1516
        %v1608 = vunpack.c.l.b16 %v1517
        %v1609 = vunpack.c.h.b16 %v1517
        %v1610 = vunpack.c.l.b16 %v1518
        %v1611 = vunpack.c.h.b16 %v1518
        %v1612 = vunpack.c.l.b16 %v1519
        %v1613 = vunpack.c.h.b16 %v1519
        %v1614 = vunpack.c.l.b16 %v1520
        %v1615 = vunpack.c.h.b16 %v1520
        %v1616 = vunpack.c.l.b16 %v1521
        %v1617 = vunpack.c.h.b16 %v1521
        %v1618 = vpack.c.b16 %v1558, %v1554
        %v1619 = vpack.c.b16 %v1559, %v1555
        %v1620 = vpack.c.b16 %v1560, %v1556
        %v1621 = vpack.c.b16 %v1561, %v1557
        %v1622 = vpack.c.b16 %v1566, %v1562
        %v1623 = vpack.c.b16 %v1567, %v1563
        %v1624 = vpack.c.b16 %v1568, %v1564
        %v1625 = vpack.c.b16 %v1569, %v1565
        %v1626 = vpack.c.b16 %v1574, %v1570
        %v1627 = vpack.c.b16 %v1575, %v1571
        %v1628 = vpack.c.b16 %v1576, %v1572
        %v1629 = vpack.c.b16 %v1577, %v1573
        %v1630 = vpack.c.b16 %v1582, %v1578
        %v1631 = vpack.c.b16 %v1583, %v1579
        %v1632 = vpack.c.b16 %v1584, %v1580
        %v1633 = vpack.c.b16 %v1585, %v1581
        %v1634 = vpack.c.b16 %v1590, %v1586
        %v1635 = vpack.c.b16 %v1591, %v1587
        %v1636 = vpack.c.b16 %v1592, %v1588
        %v1637 = vpack.c.b16 %v1593, %v1589
        %v1638 = vpack.c.b16 %v1598, %v1594
        %v1639 = vpack.c.b16 %v1599, %v1595
        %v1640 = vpack.c.b16 %v1600, %v1596
        %v1641 = vpack.c.b16 %v1601, %v1597
        %v1642 = vpack.c.b16 %v1606, %v1602
        %v1643 = vpack.c.b16 %v1607, %v1603
        %v1644 = vpack.c.b16 %v1608, %v1604
        %v1645 = vpack.c.b16 %v1609, %v1605
        %v1646 = vpack.c.b16 %v1614, %v1610
        %v1647 = vpack.c.b16 %v1615, %v1611
        %v1648 = vpack.c.b16 %v1616, %v1612
        %v1649 = vpack.c.b16 %v1617, %v1613
        %1682 = vmatprep.subr.bf16.mxu0 %v1619
        %1683 = vmatpush1.bf16.msra.mxu0 %v1618
        %1684 = vmatprep.subr.bf16.mxu0 %v1623
        %1685 = vmatpush1.bf16.msra.mxu0 %v1622
        %1686 = vmatprep.subr.bf16.mxu0 %v1627
        %1687 = vmatpush1.bf16.msra.mxu0 %v1626
        %1688 = vmatprep.subr.bf16.mxu0 %v1631
        %1689 = vmatpush1.bf16.msra.mxu0 %v1630
        %1690 = vmatprep.subr.bf16.mxu0 %v1635
        %1691 = vmatpush1.bf16.msra.mxu0 %v1634
        %1692 = vmatprep.subr.bf16.mxu0 %v1639
        %1693 = vmatpush1.bf16.msra.mxu0 %v1638
        %1694 = vmatprep.subr.bf16.mxu0 %v1643
        %1695 = vmatpush1.bf16.msra.mxu0 %v1642
        %1696 = vmatprep.subr.bf16.mxu0 %v1647
        %1697 = vmatpush1.bf16.msra.mxu0 %v1646
        %1698 = vmatprep.subr.bf16.mxu0 0
        %1699 = vmatpush1.bf16.msra.mxu0 0
        %1700 = vmatprep.subr.bf16.mxu0 0
        %1701 = vmatpush1.bf16.msra.mxu0 0
        %1702 = vmatprep.subr.bf16.mxu0 0
        %1703 = vmatpush1.bf16.msra.mxu0 0
        %1704 = vmatprep.subr.bf16.mxu0 0
        %1705 = vmatpush1.bf16.msra.mxu0 0
        %1706 = vmatprep.subr.bf16.mxu0 0
        %1707 = vmatpush1.bf16.msra.mxu0 0
        %1708 = vmatprep.subr.bf16.mxu0 0
        %1709 = vmatpush1.bf16.msra.mxu0 0
        %1710 = vmatprep.subr.bf16.mxu0 0
        %1711 = vmatpush1.bf16.msra.mxu0 0
        %1712 = vmatprep.subr.bf16.mxu0 0
        %1713 = vmatpush1.bf16.msra.mxu0 0
        %1714 = vmatprep.mubr.bf16.mxu0 0
        %1715 = vmatmul.mubr.bf16.gmra.mrb[0].mxu0 %v1487
        %v1716 = vpop.f32.mrb[0].mxu0
        %v1717 = vadd.f32 0.0, %v1716
        %v1718 = vpop.f32.mrb[0].mxu0
        %v1719 = vadd.f32 0.0, %v1718
        %v1720 = vpop.f32.mrb[0].mxu0
        %v1721 = vadd.f32 0.0, %v1720
        %v1722 = vpop.f32.mrb[0].mxu0
        %v1723 = vadd.f32 0.0, %v1722
        %1724 = vmatprep.mubr.bf16.mxu0 0
        %1725 = vmatmul.mubr.bf16.gmra.mrb[0].mxu0 %v1488
        %v1726 = vpop.f32.mrb[0].mxu0
        %v1727 = vadd.f32 0.0, %v1726
        %v1728 = vpop.f32.mrb[0].mxu0
        %v1729 = vadd.f32 0.0, %v1728
        %v1730 = vpop.f32.mrb[0].mxu0
        %v1731 = vadd.f32 0.0, %v1730
        %v1732 = vpop.f32.mrb[0].mxu0
        %v1733 = vadd.f32 0.0, %v1732
        %1734 = vdwg.mxu0
        %1735 = vmatprep.subr.bf16.mxu0 %v1621
        %1736 = vmatpush1.bf16.msra.mxu0 %v1620
        %1737 = vmatprep.subr.bf16.mxu0 %v1625
        %1738 = vmatpush1.bf16.msra.mxu0 %v1624
        %1739 = vmatprep.subr.bf16.mxu0 %v1629
        %1740 = vmatpush1.bf16.msra.mxu0 %v1628
        %1741 = vmatprep.subr.bf16.mxu0 %v1633
        %1742 = vmatpush1.bf16.msra.mxu0 %v1632
        %1743 = vmatprep.subr.bf16.mxu0 %v1637
        %1744 = vmatpush1.bf16.msra.mxu0 %v1636
        %1745 = vmatprep.subr.bf16.mxu0 %v1641
        %1746 = vmatpush1.bf16.msra.mxu0 %v1640
        %1747 = vmatprep.subr.bf16.mxu0 %v1645
        %1748 = vmatpush1.bf16.msra.mxu0 %v1644
        %1749 = vmatprep.subr.bf16.mxu0 %v1649
        %1750 = vmatpush1.bf16.msra.mxu0 %v1648
        %1751 = vmatprep.subr.bf16.mxu0 0
        %1752 = vmatpush1.bf16.msra.mxu0 0
        %1753 = vmatprep.subr.bf16.mxu0 0
        %1754 = vmatpush1.bf16.msra.mxu0 0
        %1755 = vmatprep.subr.bf16.mxu0 0
        %1756 = vmatpush1.bf16.msra.mxu0 0
        %1757 = vmatprep.subr.bf16.mxu0 0
        %1758 = vmatpush1.bf16.msra.mxu0 0
        %1759 = vmatprep.subr.bf16.mxu0 0
        %1760 = vmatpush1.bf16.msra.mxu0 0
        %1761 = vmatprep.subr.bf16.mxu0 0
        %1762 = vmatpush1.bf16.msra.mxu0 0
        %1763 = vmatprep.subr.bf16.mxu0 0
        %1764 = vmatpush1.bf16.msra.mxu0 0
        %1765 = vmatprep.subr.bf16.mxu0 0
        %1766 = vmatpush1.bf16.msra.mxu0 0
        %1767 = vmatprep.mubr.bf16.mxu0 0
        %1768 = vmatmul.mubr.bf16.gmra.mrb[0].mxu0 %v1487
        %v1769 = vpop.f32.mrb[0].mxu0
        %v1770 = vadd.f32 0.0, %v1769
        %v1771 = vpop.f32.mrb[0].mxu0
        %v1772 = vadd.f32 0.0, %v1771
        %v1773 = vpop.f32.mrb[0].mxu0
        %v1774 = vadd.f32 0.0, %v1773
        %v1775 = vpop.f32.mrb[0].mxu0
        %v1776 = vadd.f32 0.0, %v1775
        %1777 = vmatprep.mubr.bf16.mxu0 0
        %1778 = vmatmul.mubr.bf16.gmra.mrb[0].mxu0 %v1488
        %v1779 = vpop.f32.mrb[0].mxu0
        %v1780 = vadd.f32 0.0, %v1779
        %v1781 = vpop.f32.mrb[0].mxu0
        %v1782 = vadd.f32 0.0, %v1781
        %v1783 = vpop.f32.mrb[0].mxu0
        %v1784 = vadd.f32 0.0, %v1783
        %v1785 = vpop.f32.mrb[0].mxu0
        %v1786 = vadd.f32 0.0, %v1785
        %1787 = vdwg.mxu0
        %v1788 = vld [vmem:[#allocation2] sm:$0xff]
        %v1789 = vld [vmem:[#allocation2 + $0x8] sm:$0xff]
        %v1790 = vld [vmem:[#allocation2 + $0x10] sm:$0xff]
        %v1791 = vld [vmem:[#allocation2 + $0x18] sm:$0xff]
        %v1792 = vld [vmem:[#allocation2 + $0x20] sm:$0xff]
        %v1793 = vld [vmem:[#allocation2 + $0x28] sm:$0xff]
        %v1794 = vld [vmem:[#allocation2 + $0x30] sm:$0xff]
        %v1795 = vld [vmem:[#allocation2 + $0x38] sm:$0xff]
        %v1796 = vld [vmem:[#allocation2 + $0x40] sm:$0xff]
        %v1797 = vld [vmem:[#allocation2 + $0x48] sm:$0xff]
        %v1798 = vld [vmem:[#allocation2 + $0x50] sm:$0xff]
        %v1799 = vld [vmem:[#allocation2 + $0x58] sm:$0xff]
        %v1800 = vld [vmem:[#allocation2 + $0x60] sm:$0xff]
        %v1801 = vld [vmem:[#allocation2 + $0x68] sm:$0xff]
        %v1802 = vld [vmem:[#allocation2 + $0x70] sm:$0xff]
        %v1803 = vld [vmem:[#allocation2 + $0x78] sm:$0xff]
        %v1804 = vadd.f32 %v1788, %v1717
        %v1805 = vadd.f32 %v1789, %v1719
        %v1806 = vadd.f32 %v1790, %v1770
        %v1807 = vadd.f32 %v1791, %v1772
        %v1808 = vadd.f32 %v1792, %v1721
        %v1809 = vadd.f32 %v1793, %v1723
        %v1810 = vadd.f32 %v1794, %v1774
        %v1811 = vadd.f32 %v1795, %v1776
        %v1812 = vadd.f32 %v1796, %v1727
        %v1813 = vadd.f32 %v1797, %v1729
        %v1814 = vadd.f32 %v1798, %v1780
        %v1815 = vadd.f32 %v1799, %v1782
        %v1816 = vadd.f32 %v1800, %v1731
        %v1817 = vadd.f32 %v1801, %v1733
        %v1818 = vadd.f32 %v1802, %v1784
        %v1819 = vadd.f32 %v1803, %v1786
        %1820 = vst [vmem:[#allocation2] sm:$0xff] %v1804
        %1821 = vst [vmem:[#allocation2 + $0x8] sm:$0xff] %v1805
        %1822 = vst [vmem:[#allocation2 + $0x10] sm:$0xff] %v1806
        %1823 = vst [vmem:[#allocation2 + $0x18] sm:$0xff] %v1807
        %1824 = vst [vmem:[#allocation2 + $0x20] sm:$0xff] %v1808
        %1825 = vst [vmem:[#allocation2 + $0x28] sm:$0xff] %v1809
        %1826 = vst [vmem:[#allocation2 + $0x30] sm:$0xff] %v1810
        %1827 = vst [vmem:[#allocation2 + $0x38] sm:$0xff] %v1811
        %1828 = vst [vmem:[#allocation2 + $0x40] sm:$0xff] %v1812
        %1829 = vst [vmem:[#allocation2 + $0x48] sm:$0xff] %v1813
        %1830 = vst [vmem:[#allocation2 + $0x50] sm:$0xff] %v1814
        %1831 = vst [vmem:[#allocation2 + $0x58] sm:$0xff] %v1815
        %1832 = vst [vmem:[#allocation2 + $0x60] sm:$0xff] %v1816
        %1833 = vst [vmem:[#allocation2 + $0x68] sm:$0xff] %v1817
        %1834 = vst [vmem:[#allocation2 + $0x70] sm:$0xff] %v1818
        %1835 = vst [vmem:[#allocation2 + $0x78] sm:$0xff] %v1819
        %v1836 = vld [vmem:[#allocation2] sm:$0xff]
        %v1837 = vld [vmem:[#allocation2 + $0x8] sm:$0xff]
        %v1838 = vld [vmem:[#allocation2 + $0x10] sm:$0xff]
        %v1839 = vld [vmem:[#allocation2 + $0x18] sm:$0xff]
        %v1840 = vld [vmem:[#allocation2 + $0x20] sm:$0xff]
        %v1841 = vld [vmem:[#allocation2 + $0x28] sm:$0xff]
        %v1842 = vld [vmem:[#allocation2 + $0x30] sm:$0xff]
        %v1843 = vld [vmem:[#allocation2 + $0x38] sm:$0xff]
        %v1844 = vld [vmem:[#allocation2 + $0x40] sm:$0xff]
        %v1845 = vld [vmem:[#allocation2 + $0x48] sm:$0xff]
        %v1846 = vld [vmem:[#allocation2 + $0x50] sm:$0xff]
        %v1847 = vld [vmem:[#allocation2 + $0x58] sm:$0xff]
        %v1848 = vld [vmem:[#allocation2 + $0x60] sm:$0xff]
        %v1849 = vld [vmem:[#allocation2 + $0x68] sm:$0xff]
        %v1850 = vld [vmem:[#allocation2 + $0x70] sm:$0xff]
        %v1851 = vld [vmem:[#allocation2 + $0x78] sm:$0xff]
        %1852 = vst [vmem:[%s216] sm:$0xff] %v1836
        %1853 = vst [vmem:[%s216 + $0x8] sm:$0xff] %v1837
        %1854 = vst [vmem:[%s216 + $0x10] sm:$0xff] %v1838
        %1855 = vst [vmem:[%s216 + $0x18] sm:$0xff] %v1839
        %1856 = vst [vmem:[%s216 + $0x20] sm:$0xff] %v1840
        %1857 = vst [vmem:[%s216 + $0x28] sm:$0xff] %v1841
        %1858 = vst [vmem:[%s216 + $0x30] sm:$0xff] %v1842
        %1859 = vst [vmem:[%s216 + $0x38] sm:$0xff] %v1843
        %1860 = vst [vmem:[%s216 + $0x40] sm:$0xff] %v1844
        %1861 = vst [vmem:[%s216 + $0x48] sm:$0xff] %v1845
        %1862 = vst [vmem:[%s216 + $0x50] sm:$0xff] %v1846
        %1863 = vst [vmem:[%s216 + $0x58] sm:$0xff] %v1847
        %1864 = vst [vmem:[%s216 + $0x60] sm:$0xff] %v1848
        %1865 = vst [vmem:[%s216 + $0x68] sm:$0xff] %v1849
        %1866 = vst [vmem:[%s216 + $0x70] sm:$0xff] %v1850
        %1867 = vst [vmem:[%s216 + $0x78] sm:$0xff] %v1851
        %s1868 = sand.u32 %s97, 1
        %s1869 = scalar_lea.sflag [#allocation5], %s1868
        %s1870 = sand.u32 %s97, 1
        %s1871 = smul.addr %s1870, 128
        %s1872 = scalar_lea.vmem [#allocation9], %s1871
        // Predicated region
        $region45: #{tpu_custom_call.1} parent=31 // pred_check
          %p1873 = pneg %p107
        $region46: #{tpu_custom_call.1} parent=31 // pred_check_branch
          %1875 = sbr.rel (%p1873) target = $region48
        $region47: #{tpu_custom_call.1} parent=31 // pred_region
          %s1876 = smul.u32 4, %s21
          %s1878 = ssub.s32 2048, 2048
          %1879 = vsyncadd %s1869, %s1878
          %s1880 = smul.addr %s1876, 128
          %s1881 = scalar_lea.hbm %s3, %s1880
          %s1882 = sshll.u32 %s1872, 4
          %s1883 = int_to_ptr.vmem [resolvable:$true] %s1882
          %1888 = dma.vmem_to_hbm [thread:$0]  %s1883, 2048, %s1881, %s1869, 512, 1024, 32
        $region48: #{tpu_custom_call.1} parent=31 // pred_fallthru
          _
      $region32: #{tpu_custom_call.1} parent=5 // pred_fallthru
        _
      %p1889 = scmp.le.s32.totalorder 2, %s16
      // Predicated region
      $region49: #{tpu_custom_call.1} parent=5 // pred_check
        %p1890 = pneg %p1889
      $region50: #{tpu_custom_call.1} parent=5 // pred_check_branch
        %1892 = sbr.rel (%p1890) target = $region52
      $region51: #{tpu_custom_call.1} parent=5 // pred_region
        %s1893 = ssub.s32 %s16, 2
        // Predicated region
        $region53: #{tpu_custom_call.1} parent=51 // pred_check
          %p1894 = pneg %p113
        $region54: #{tpu_custom_call.1} parent=51 // pred_check_branch
          %1896 = sbr.rel (%p1894) target = $region56
        $region55: #{tpu_custom_call.1} parent=51 // pred_region
          %s1897 = sand.u32 %s98, 1
          %s1898 = scalar_lea.sflag [#allocation5], %s1897
          %s1899 = sand.u32 %s98, 1
          %s1900 = smul.addr %s1899, 128
          %s1901 = scalar_lea.vmem [#allocation9], %s1900
          %1902 = dma.done %s1898, 2048
        $region56: #{tpu_custom_call.1} parent=51 // pred_fallthru
          _
      $region52: #{tpu_custom_call.1} parent=5 // pred_fallthru
        _
    $region6: #{tpu_custom_call.1} parent=1 // loop_footer
      %s20 = sadd.s32 1, %s16
    $region7: #{tpu_custom_call.1} parent=1 // loop_footer_branch
      %15 = sbr.rel target = $region3
    $region8: #{tpu_custom_call.1} parent=1 // loop_exit
      _
    %1903 = vsyncpa [#allocation4], 1
    %s1904 = scalar_lea.sflag [#allocation4], 1
    %1905 = vsyncpa %s1904, 1
    %1906 = vsyncpa [#allocation7], 1
    %s1907 = scalar_lea.sflag [#allocation7], 1
    %1908 = vsyncpa %s1907, 1
    %1909 = vsyncpa [#allocation5], 1
    %s1910 = scalar_lea.sflag [#allocation5], 1
    %1911 = vsyncpa %s1910, 1

// kernel: tpu_custom_call.1
$region0: #{tpu_custom_call.1}
  #allocation0 [shape = 'u32[]', space=smem, size = 0x4, offset = 0x4, fixed_abs, tag = 'smem constant byte address 0x4 - core index']
  #allocation1 [shape = 'u32[144,128]{1,0:T(1,128)}', space=vmem, size = 0x12000, scoped, tag = 'internal scratch']
  #allocation2 [shape = 'f32[32,512]{1,0:T(8,128)}', space=vmem, size = 0x10000, scoped, tag = 'scratch operand']
  %s0 = inlined_call_operand.hbm [shape: bf16[2,32,32], index: 0, kind: input, shape index: {}]
  %s1 = inlined_call_operand.hbm [shape: bf16[32,256], index: 1, kind: input, shape index: {}]
  %s2 = inlined_call_operand.hbm [shape: bf16[4,128,512], index: 2, kind: input, shape index: {}]
  %s3 = inlined_call_operand.hbm [shape: f32[32,1024], index: 3, kind: output, shape index: {}]
  %s4 = sld [smem:[#allocation0]]
  $region57: #{tpu_custom_call.1} parent=0
    _
  %s6 = ssub.s32 1, %s4
  %s7 = scalar_select 0, %s6, %s4
  $region1: #{tpu_custom_call.1} parent=0
    #allocation3 [shape = 'u8[16384]{0}', space=vmem, size = 0x4000, scoped, tag = 'input window, operand 0, single buffered']
    #allocation4 [shape = 's32[2]{0}', space=sflag, size = 0x8, scoped, tag = 'scoped memory for tpu_custom_call.1']
    #allocation5 [shape = 's32[2]{0}', space=sflag, size = 0x8, scoped, tag = 'scoped memory for tpu_custom_call.1']
    #allocation6 [shape = 'u8[16384]{0}', space=vmem, size = 0x4000, scoped, tag = 'input window, operand 1']
    #allocation7 [shape = 's32[2]{0}', space=sflag, size = 0x8, scoped, tag = 'scoped memory for tpu_custom_call.1']
    #allocation8 [shape = 'u8[524288]{0}', space=vmem, size = 0x80000, scoped, tag = 'input window, operand 2, single buffered']
    #allocation9 [shape = 'u8[131072]{0}', space=vmem, size = 0x20000, scoped, tag = 'output window, operand 0']
    %8 = vsyncpa [#allocation4], 0
    %9 = vsyncpa [#allocation7], 0
    %s10 = scalar_lea.sflag [#allocation7], 1
    %11 = vsyncpa %s10, 0
    %12 = vsyncpa [#allocation5], 0
    %s13 = scalar_lea.sflag [#allocation5], 1
    %14 = vsyncpa %s13, 0
    loop: start=0, step=1, limit=4
    $region2: #{tpu_custom_call.1} parent=1 // loop_pre_header
      _
    $region3: #{tpu_custom_call.1} parent=1 // loop_header
      %s16 = sphi 0, %s20
      %p17 = scmp.ge.s32.totalorder %s16, 4
      %s24 = sphi 0, %s24
      %s26 = sphi 0, %s24
      %s27 = sphi 0, %s26
      %s41 = sphi 0, %s27
      %s47 = sphi 0, %s49
      %s50 = sphi 0, %s47
      %s51 = sphi 0, %s50
      %s67 = sphi 0, %s51
      %s71 = sphi 0, %s71
      %s73 = sphi 0, %s71
      %s74 = sphi 0, %s73
      %s88 = sphi 0, %s74
      %s94 = sphi 0, %s96
      %s97 = sphi 0, %s94
      %s98 = sphi 0, %s97
      %s114 = sphi 0, %s98
    $region4: #{tpu_custom_call.1} parent=1 // loop_header_branch
      %19 = sbr.rel (%p17) target = $region8
    $region5: #{tpu_custom_call.1} parent=1 // loop_body
      %s21 = ssub.s32 %s16, 1
      %s22 = ssub.s32 %s16, 2
      %s23 = sadd.s32 %s16, 1
      %s25 = sadd.s32 %s24, 1
      %p28 = scmp.eq.s32.totalorder %s16, 1
      %p29 = scmp.ne.s32.totalorder %s24, %s26
      %p30 = scmp.eq.s32.totalorder %s16, 0
      %p31 = por %p29, %p30
      %p32 = scmp.ne.s32.totalorder %s24, %s26
      %p33 = scmp.eq.s32.totalorder %s21, 1
      %p34 = por %p32, %p33
      %p35 = scmp.ne.s32.totalorder %s26, %s27
      %p36 = scmp.eq.s32.totalorder %s21, 0
      %p37 = por %p35, %p36
      %p38 = scmp.ne.s32.totalorder %s26, %s27
      %p39 = scmp.eq.s32.totalorder %s22, 1
      %p40 = por %p38, %p39
      %p42 = scmp.ne.s32.totalorder %s27, %s41
      %p43 = scmp.eq.s32.totalorder %s22, 0
      %p44 = por %p42, %p43
      %s45 = ssub.s32 %s16, %s23
      %p46 = scmp.eq.s32.totalorder %s45, 0
      %s48 = sadd.s32 %s47, 1
      %s49 = scalar_select %p46, %s47, %s48
      %p52 = pneg %p46
      %p53 = scmp.eq.s32.totalorder %s16, 1
      %p54 = por %p52, %p53
      %p55 = scmp.ne.s32.totalorder %s47, %s50
      %p56 = scmp.eq.s32.totalorder %s16, 0
      %p57 = por %p55, %p56
      %p58 = scmp.ne.s32.totalorder %s47, %s50
      %p59 = scmp.eq.s32.totalorder %s21, 1
      %p60 = por %p58, %p59
      %p61 = scmp.ne.s32.totalorder %s50, %s51
      %p62 = scmp.eq.s32.totalorder %s21, 0
      %p63 = por %p61, %p62
      %p64 = scmp.ne.s32.totalorder %s50, %s51
      %p65 = scmp.eq.s32.totalorder %s22, 1
      %p66 = por %p64, %p65
      %p68 = scmp.ne.s32.totalorder %s51, %s67
      %p69 = scmp.eq.s32.totalorder %s22, 0
      %p70 = por %p68, %p69
      %s72 = sadd.s32 %s71, 1
      %p75 = scmp.eq.s32.totalorder %s16, 1
      %p76 = scmp.ne.s32.totalorder %s71, %s73
      %p77 = scmp.eq.s32.totalorder %s16, 0
      %p78 = por %p76, %p77
      %p79 = scmp.ne.s32.totalorder %s71, %s73
      %p80 = scmp.eq.s32.totalorder %s21, 1
      %p81 = por %p79, %p80
      %p82 = scmp.ne.s32.totalorder %s73, %s74
      %p83 = scmp.eq.s32.totalorder %s21, 0
      %p84 = por %p82, %p83
      %p85 = scmp.ne.s32.totalorder %s73, %s74
      %p86 = scmp.eq.s32.totalorder %s22, 1
      %p87 = por %p85, %p86
      %p89 = scmp.ne.s32.totalorder %s74, %s88
      %p90 = scmp.eq.s32.totalorder %s22, 0
      %p91 = por %p89, %p90
      %s92 = ssub.s32 %s16, %s23
      %p93 = scmp.eq.s32.totalorder %s92, 0
      %s95 = sadd.s32 %s94, 1
      %s96 = scalar_select %p93, %s94, %s95
      %p99 = pneg %p93
      %p100 = scmp.eq.s32.totalorder %s16, 1
      %p101 = por %p99, %p100
      %p102 = scmp.ne.s32.totalorder %s94, %s97
      %p103 = scmp.eq.s32.totalorder %s16, 0
      %p104 = por %p102, %p103
      %p105 = scmp.ne.s32.totalorder %s94, %s97
      %p106 = scmp.eq.s32.totalorder %s21, 1
      %p107 = por %p105, %p106
      %p108 = scmp.ne.s32.totalorder %s97, %s98
      %p109 = scmp.eq.s32.totalorder %s21, 0
      %p110 = por %p108, %p109
      %p111 = scmp.ne.s32.totalorder %s97, %s98
      %p112 = scmp.eq.s32.totalorder %s22, 1
      %p113 = por %p111, %p112
      %p115 = scmp.ne.s32.totalorder %s98, %s114
      %p116 = scmp.eq.s32.totalorder %s22, 0
      %p117 = por %p115, %p116
      %p118 = scmp.le.s32.totalorder 1, %s16
      %p119 = scmp.lt.s32.totalorder %s16, 3
      %p120 = pnand %p118, %p119
      %p121 = pneg %p120
      // Predicated region
      $region9: #{tpu_custom_call.1} parent=5 // pred_check
        _
      $region10: #{tpu_custom_call.1} parent=5 // pred_check_branch
        %123 = sbr.rel (%p120) target = $region12
      $region11: #{tpu_custom_call.1} parent=5 // pred_region
        %s124 = ssub.s32 %s16, 1
        // Predicated region
        $region13: #{tpu_custom_call.1} parent=11 // pred_check
          %p125 = pneg %p37
        $region14: #{tpu_custom_call.1} parent=11 // pred_check_branch
          %127 = sbr.rel (%p125) target = $region16
        $region15: #{tpu_custom_call.1} parent=11 // pred_region
          %s129 = ssub.s32 512, 512
          %130 = vsyncadd [#allocation4], %s129
          %s131 = sshll.u32 [#allocation3], 4
          %s132 = int_to_ptr.vmem [resolvable:$true] %s131
          %137 = dma.hbm_to_vmem [thread:$0]  %s0, 512, %s132, [#allocation4], 64, 64, 4
        $region16: #{tpu_custom_call.1} parent=11 // pred_fallthru
          _
        // Predicated region
        $region17: #{tpu_custom_call.1} parent=11 // pred_check
          %p138 = pneg %p84
        $region18: #{tpu_custom_call.1} parent=11 // pred_check_branch
          %140 = sbr.rel (%p138) target = $region20
        $region19: #{tpu_custom_call.1} parent=11 // pred_region
          %s142 = ssub.s32 16384, 16384
          %143 = vsyncadd [#allocation7], %s142
          %s144 = sshll.u32 [#allocation8], 4
          %s145 = int_to_ptr.vmem [resolvable:$true] %s144
          %150 = dma.hbm_to_vmem [thread:$0]  %s2, 16384, %s145, [#allocation7], 256, 256, 16
        $region20: #{tpu_custom_call.1} parent=11 // pred_fallthru
          _
      $region12: #{tpu_custom_call.1} parent=5 // pred_fallthru
        _
      %p151 = scmp.lt.s32.totalorder %s16, 2
      // Predicated region
      $region21: #{tpu_custom_call.1} parent=5 // pred_check
        %p152 = pneg %p151
      $region22: #{tpu_custom_call.1} parent=5 // pred_check_branch
        %154 = sbr.rel (%p152) target = $region24
      $region23: #{tpu_custom_call.1} parent=5 // pred_region
        // Predicated region
        $region25: #{tpu_custom_call.1} parent=23 // pred_check
          %p155 = pneg %p57
        $region26: #{tpu_custom_call.1} parent=23 // pred_check_branch
          %157 = sbr.rel (%p155) target = $region28
        $region27: #{tpu_custom_call.1} parent=23 // pred_region
          %s158 = sand.u32 %s16, 1
          %s159 = scalar_lea.sflag [#allocation7], %s158
          %s160 = sand.u32 %s47, 1
          %s161 = smul.addr %s160, 16
          %s162 = scalar_lea.vmem [#allocation6], %s161
          %s164 = ssub.s32 256, 256
          %165 = vsyncadd %s159, %s164
          %s166 = smul.addr %s16, 64
          %s167 = scalar_lea.hbm %s1, %s166
          %s168 = sshll.u32 %s162, 4
          %s169 = int_to_ptr.vmem [resolvable:$true] %s168
          %174 = dma.hbm_to_vmem [thread:$0]  %s167, 256, %s169, %s159, 128, 64, 4
        $region28: #{tpu_custom_call.1} parent=23 // pred_fallthru
          _
      $region24: #{tpu_custom_call.1} parent=5 // pred_fallthru
        _
      %p175 = scmp.le.s32.totalorder 1, %s16
      %p176 = scmp.lt.s32.totalorder %s16, 3
      %p177 = pnand %p175, %p176
      %p178 = pneg %p177
      // Predicated region
      $region29: #{tpu_custom_call.1} parent=5 // pred_check
        _
      $region30: #{tpu_custom_call.1} parent=5 // pred_check_branch
        %180 = sbr.rel (%p177) target = $region32
      $region31: #{tpu_custom_call.1} parent=5 // pred_region
        %s181 = ssub.s32 %s16, 1
        // Predicated region
        $region33: #{tpu_custom_call.1} parent=31 // pred_check
          %p182 = pneg %p37
        $region34: #{tpu_custom_call.1} parent=31 // pred_check_branch
          %184 = sbr.rel (%p182) target = $region36
        $region35: #{tpu_custom_call.1} parent=31 // pred_region
          %185 = dma.done [#allocation4], 512
        $region36: #{tpu_custom_call.1} parent=31 // pred_fallthru
          _
        %s186 = sand.u32 %s21, 1
        %s187 = scalar_lea.sflag [#allocation7], %s186
        %s188 = sand.u32 %s50, 1
        %s189 = smul.addr %s188, 16
        %s190 = scalar_lea.vmem [#allocation6], %s189
        // Predicated region
        $region37: #{tpu_custom_call.1} parent=31 // pred_check
          %p191 = pneg %p63
        $region38: #{tpu_custom_call.1} parent=31 // pred_check_branch
          %193 = sbr.rel (%p191) target = $region40
        $region39: #{tpu_custom_call.1} parent=31 // pred_region
          %194 = dma.done %s187, 256
        $region40: #{tpu_custom_call.1} parent=31 // pred_fallthru
          _
        // Predicated region
        $region41: #{tpu_custom_call.1} parent=31 // pred_check
          %p195 = pneg %p84
        $region42: #{tpu_custom_call.1} parent=31 // pred_check_branch
          %197 = sbr.rel (%p195) target = $region44
        $region43: #{tpu_custom_call.1} parent=31 // pred_region
          %198 = dma.done [#allocation7], 16384
        $region44: #{tpu_custom_call.1} parent=31 // pred_fallthru
          _
        %p199 = pneg %p37
        %p200 = pneg %p34
        %s201 = sand.u32 %s21, 1
        %s202 = scalar_lea.sflag [#allocation7], %s201
        %s203 = sand.u32 %s50, 1
        %s204 = smul.addr %s203, 16
        %s205 = scalar_lea.vmem [#allocation6], %s204
        %p206 = pneg %p63
        %p207 = pneg %p60
        %p208 = pneg %p84
        %p209 = pneg %p81
        %p210 = pneg %p110
        %p211 = pneg %p107
        %s212 = sand.u32 %s97, 1
        %s213 = scalar_lea.sflag [#allocation5], %s212
        %s214 = sand.u32 %s97, 1
        %s215 = smul.addr %s214, 128
        %s216 = scalar_lea.vmem [#allocation9], %s215
        %s217 = smul.u32 4, %s21
        %v219 = vld [vmem:[%s190] sm:$0xf]
        %v220 = vld [vmem:[%s190 + $0x4] sm:$0xf]
        %v221 = vld [vmem:[%s190 + $0x8] sm:$0xf]
        %v222 = vld [vmem:[%s190 + $0xc] sm:$0xf]
        %v223 = vld [vmem:[#allocation3] sm:$0xf]
        %v224 = vld [vmem:[#allocation3 + $0x4] sm:$0xf]
        %v225 = vld [vmem:[#allocation3 + $0x8] sm:$0xf]
        %v226 = vld [vmem:[#allocation3 + $0xc] sm:$0xf]
        %v231 = vunpack.c.l.b16 %v223
        %v232 = vunpack.c.l.b16 %v224
        %v233 = vunpack.c.l.b16 %v225
        %v234 = vunpack.c.l.b16 %v226
        %v235 = vpack.c.b16 %v232, %v231
        %v236 = vpack.c.b16 %v234, %v233
        %v241 = vunpack.c.l.b16 %v219
        %v242 = vunpack.c.l.b16 %v220
        %v243 = vunpack.c.l.b16 %v221
        %v244 = vunpack.c.l.b16 %v222
        %v245 = vpack.c.b16 %v242, %v241
        %v246 = vpack.c.b16 %v244, %v243
        %vm249 = vcmask 261120
        %v251 = vsel %vm249, %v235, 0
        %v254 = vsel %vm249, %v236, 0
        %256 = vmatprep.subr.bf16.mxu0 0
        %257 = vmatpush1.bf16.msra.mxu0 %v245
        %258 = vmatprep.subr.bf16.mxu0 0
        %259 = vmatpush1.bf16.msra.mxu0 %v246
        %260 = vmatprep.subr.bf16.mxu0 0
        %261 = vmatpush1.bf16.msra.mxu0 0
        %262 = vmatprep.subr.bf16.mxu0 0
        %263 = vmatpush1.bf16.msra.mxu0 0
        %264 = vmatprep.subr.bf16.mxu0 0
        %265 = vmatpush1.bf16.msra.mxu0 0
        %266 = vmatprep.subr.bf16.mxu0 0
        %267 = vmatpush1.bf16.msra.mxu0 0
        %268 = vmatprep.subr.bf16.mxu0 0
        %269 = vmatpush1.bf16.msra.mxu0 0
        %270 = vmatprep.subr.bf16.mxu0 0
        %271 = vmatpush1.bf16.msra.mxu0 0
        %272 = vmatprep.subr.bf16.mxu0 0
        %273 = vmatpush1.bf16.msra.mxu0 0
        %274 = vmatprep.subr.bf16.mxu0 0
        %275 = vmatpush1.bf16.msra.mxu0 0
        %276 = vmatprep.subr.bf16.mxu0 0
        %277 = vmatpush1.bf16.msra.mxu0 0
        %278 = vmatprep.subr.bf16.mxu0 0
        %279 = vmatpush1.bf16.msra.mxu0 0
        %280 = vmatprep.subr.bf16.mxu0 0
        %281 = vmatpush1.bf16.msra.mxu0 0
        %282 = vmatprep.subr.bf16.mxu0 0
        %283 = vmatpush1.bf16.msra.mxu0 0
        %284 = vmatprep.subr.bf16.mxu0 0
        %285 = vmatpush1.bf16.msra.mxu0 0
        %286 = vmatprep.subr.bf16.mxu0 0
        %287 = vmatpush1.bf16.msra.mxu0 0
        %288 = vmatprep.mubr.bf16.mxu0 0
        %289 = vmatmul.mubr.bf16.gmra.mrb[0].mxu0 %v251
        %v290 = vpop.f32.mrb[0].mxu0
        %v291 = vadd.f32 0.0, %v290
        %v292 = vpop.f32.mrb[0].mxu0
        %v293 = vpop.f32.mrb[0].mxu0
        %v294 = vadd.f32 0.0, %v293
        %v295 = vpop.f32.mrb[0].mxu0
        %296 = vmatprep.mubr.bf16.mxu0 0
        %297 = vmatmul.mubr.bf16.gmra.mrb[0].mxu0 %v254
        %v298 = vpop.f32.mrb[0].mxu0
        %v299 = vadd.f32 0.0, %v298
        %v300 = vpop.f32.mrb[0].mxu0
        %v301 = vpop.f32.mrb[0].mxu0
        %v302 = vadd.f32 0.0, %v301
        %v303 = vpop.f32.mrb[0].mxu0
        %304 = vdwg.mxu0
        %v305 = vpack.c.bf16 %v294, %v291
        %v306 = vpack.c.bf16 %v302, %v299
        %v307 = vld [vmem:[#allocation8] sm:$0xff]
        %v308 = vld [vmem:[#allocation8 + $0x8] sm:$0xff]
        %v309 = vld [vmem:[#allocation8 + $0x10] sm:$0xff]
        %v310 = vld [vmem:[#allocation8 + $0x18] sm:$0xff]
        %v311 = vld [vmem:[#allocation8 + $0x20] sm:$0xff]
        %v312 = vld [vmem:[#allocation8 + $0x28] sm:$0xff]
        %v313 = vld [vmem:[#allocation8 + $0x30] sm:$0xff]
        %v314 = vld [vmem:[#allocation8 + $0x38] sm:$0xff]
        %v315 = vld [vmem:[#allocation8 + $0x40] sm:$0xff]
        %v316 = vld [vmem:[#allocation8 + $0x48] sm:$0xff]
        %v317 = vld [vmem:[#allocation8 + $0x50] sm:$0xff]
        %v318 = vld [vmem:[#allocation8 + $0x58] sm:$0xff]
        %v319 = vld [vmem:[#allocation8 + $0x60] sm:$0xff]
        %v320 = vld [vmem:[#allocation8 + $0x68] sm:$0xff]
        %v321 = vld [vmem:[#allocation8 + $0x70] sm:$0xff]
        %v322 = vld [vmem:[#allocation8 + $0x78] sm:$0xff]
        %v323 = vld [vmem:[#allocation8 + $0x80] sm:$0xff]
        %v324 = vld [vmem:[#allocation8 + $0x88] sm:$0xff]
        %v325 = vld [vmem:[#allocation8 + $0x90] sm:$0xff]
        %v326 = vld [vmem:[#allocation8 + $0x98] sm:$0xff]
        %v327 = vld [vmem:[#allocation8 + $0xa0] sm:$0xff]
        %v328 = vld [vmem:[#allocation8 + $0xa8] sm:$0xff]
        %v329 = vld [vmem:[#allocation8 + $0xb0] sm:$0xff]
        %v330 = vld [vmem:[#allocation8 + $0xb8] sm:$0xff]
        %v331 = vld [vmem:[#allocation8 + $0xc0] sm:$0xff]
        %v332 = vld [vmem:[#allocation8 + $0xc8] sm:$0xff]
        %v333 = vld [vmem:[#allocation8 + $0xd0] sm:$0xff]
        %v334 = vld [vmem:[#allocation8 + $0xd8] sm:$0xff]
        %v335 = vld [vmem:[#allocation8 + $0xe0] sm:$0xff]
        %v336 = vld [vmem:[#allocation8 + $0xe8] sm:$0xff]
        %v337 = vld [vmem:[#allocation8 + $0xf0] sm:$0xff]
        %v338 = vld [vmem:[#allocation8 + $0xf8] sm:$0xff]
        %v371 = vunpack.c.l.b16 %v307
        %v372 = vunpack.c.h.b16 %v307
        %v373 = vunpack.c.l.b16 %v308
        %v374 = vunpack.c.h.b16 %v308
        %v375 = vunpack.c.l.b16 %v309
        %v376 = vunpack.c.h.b16 %v309
        %v377 = vunpack.c.l.b16 %v310
        %v378 = vunpack.c.h.b16 %v310
        %v379 = vunpack.c.l.b16 %v311
        %v380 = vunpack.c.h.b16 %v311
        %v381 = vunpack.c.l.b16 %v312
        %v382 = vunpack.c.h.b16 %v312
        %v383 = vunpack.c.l.b16 %v313
        %v384 = vunpack.c.h.b16 %v313
        %v385 = vunpack.c.l.b16 %v314
        %v386 = vunpack.c.h.b16 %v314
        %v387 = vunpack.c.l.b16 %v315
        %v388 = vunpack.c.h.b16 %v315
        %v389 = vunpack.c.l.b16 %v316
        %v390 = vunpack.c.h.b16 %v316
        %v391 = vunpack.c.l.b16 %v317
        %v392 = vunpack.c.h.b16 %v317
        %v393 = vunpack.c.l.b16 %v318
        %v394 = vunpack.c.h.b16 %v318
        %v395 = vunpack.c.l.b16 %v319
        %v396 = vunpack.c.h.b16 %v319
        %v397 = vunpack.c.l.b16 %v320
        %v398 = vunpack.c.h.b16 %v320
        %v399 = vunpack.c.l.b16 %v321
        %v400 = vunpack.c.h.b16 %v321
        %v401 = vunpack.c.l.b16 %v322
        %v402 = vunpack.c.h.b16 %v322
        %v403 = vunpack.c.l.b16 %v323
        %v404 = vunpack.c.h.b16 %v323
        %v405 = vunpack.c.l.b16 %v324
        %v406 = vunpack.c.h.b16 %v324
        %v407 = vunpack.c.l.b16 %v325
        %v408 = vunpack.c.h.b16 %v325
        %v409 = vunpack.c.l.b16 %v326
        %v410 = vunpack.c.h.b16 %v326
        %v411 = vunpack.c.l.b16 %v327
        %v412 = vunpack.c.h.b16 %v327
        %v413 = vunpack.c.l.b16 %v328
        %v414 = vunpack.c.h.b16 %v328
        %v415 = vunpack.c.l.b16 %v329
        %v416 = vunpack.c.h.b16 %v329
        %v417 = vunpack.c.l.b16 %v330
        %v418 = vunpack.c.h.b16 %v330
        %v419 = vunpack.c.l.b16 %v331
        %v420 = vunpack.c.h.b16 %v331
        %v421 = vunpack.c.l.b16 %v332
        %v422 = vunpack.c.h.b16 %v332
        %v423 = vunpack.c.l.b16 %v333
        %v424 = vunpack.c.h.b16 %v333
        %v425 = vunpack.c.l.b16 %v334
        %v426 = vunpack.c.h.b16 %v334
        %v427 = vunpack.c.l.b16 %v335
        %v428 = vunpack.c.h.b16 %v335
        %v429 = vunpack.c.l.b16 %v336
        %v430 = vunpack.c.h.b16 %v336
        %v431 = vunpack.c.l.b16 %v337
        %v432 = vunpack.c.h.b16 %v337
        %v433 = vunpack.c.l.b16 %v338
        %v434 = vunpack.c.h.b16 %v338
        %v435 = vpack.c.b16 %v375, %v371
        %v436 = vpack.c.b16 %v376, %v372
        %v437 = vpack.c.b16 %v377, %v373
        %v438 = vpack.c.b16 %v378, %v374
        %v439 = vpack.c.b16 %v383, %v379
        %v440 = vpack.c.b16 %v384, %v380
        %v441 = vpack.c.b16 %v385, %v381
        %v442 = vpack.c.b16 %v386, %v382
        %v443 = vpack.c.b16 %v391, %v387
        %v444 = vpack.c.b16 %v392, %v388
        %v445 = vpack.c.b16 %v393, %v389
        %v446 = vpack.c.b16 %v394, %v390
        %v447 = vpack.c.b16 %v399, %v395
        %v448 = vpack.c.b16 %v400, %v396
        %v449 = vpack.c.b16 %v401, %v397
        %v450 = vpack.c.b16 %v402, %v398
        %v451 = vpack.c.b16 %v407, %v403
        %v452 = vpack.c.b16 %v408, %v404
        %v453 = vpack.c.b16 %v409, %v405
        %v454 = vpack.c.b16 %v410, %v406
        %v455 = vpack.c.b16 %v415, %v411
        %v456 = vpack.c.b16 %v416, %v412
        %v457 = vpack.c.b16 %v417, %v413
        %v458 = vpack.c.b16 %v418, %v414
        %v459 = vpack.c.b16 %v423, %v419
        %v460 = vpack.c.b16 %v424, %v420
        %v461 = vpack.c.b16 %v425, %v421
        %v462 = vpack.c.b16 %v426, %v422
        %v463 = vpack.c.b16 %v431, %v427
        %v464 = vpack.c.b16 %v432, %v428
        %v465 = vpack.c.b16 %v433, %v429
        %v466 = vpack.c.b16 %v434, %v430
        %499 = vmatprep.subr.bf16.mxu0 %v436
        %500 = vmatpush1.bf16.msra.mxu0 %v435
        %501 = vmatprep.subr.bf16.mxu0 %v440
        %502 = vmatpush1.bf16.msra.mxu0 %v439
        %503 = vmatprep.subr.bf16.mxu0 %v444
        %504 = vmatpush1.bf16.msra.mxu0 %v443
        %505 = vmatprep.subr.bf16.mxu0 %v448
        %506 = vmatpush1.bf16.msra.mxu0 %v447
        %507 = vmatprep.subr.bf16.mxu0 %v452
        %508 = vmatpush1.bf16.msra.mxu0 %v451
        %509 = vmatprep.subr.bf16.mxu0 %v456
        %510 = vmatpush1.bf16.msra.mxu0 %v455
        %511 = vmatprep.subr.bf16.mxu0 %v460
        %512 = vmatpush1.bf16.msra.mxu0 %v459
        %513 = vmatprep.subr.bf16.mxu0 %v464
        %514 = vmatpush1.bf16.msra.mxu0 %v463
        %515 = vmatprep.subr.bf16.mxu0 0
        %516 = vmatpush1.bf16.msra.mxu0 0
        %517 = vmatprep.subr.bf16.mxu0 0
        %518 = vmatpush1.bf16.msra.mxu0 0
        %519 = vmatprep.subr.bf16.mxu0 0
        %520 = vmatpush1.bf16.msra.mxu0 0
        %521 = vmatprep.subr.bf16.mxu0 0
        %522 = vmatpush1.bf16.msra.mxu0 0
        %523 = vmatprep.subr.bf16.mxu0 0
        %524 = vmatpush1.bf16.msra.mxu0 0
        %525 = vmatprep.subr.bf16.mxu0 0
        %526 = vmatpush1.bf16.msra.mxu0 0
        %527 = vmatprep.subr.bf16.mxu0 0
        %528 = vmatpush1.bf16.msra.mxu0 0
        %529 = vmatprep.subr.bf16.mxu0 0
        %530 = vmatpush1.bf16.msra.mxu0 0
        %531 = vmatprep.mubr.bf16.mxu0 0
        %532 = vmatmul.mubr.bf16.gmra.mrb[0].mxu0 %v305
        %v533 = vpop.f32.mrb[0].mxu0
        %v534 = vadd.f32 0.0, %v533
        %v535 = vpop.f32.mrb[0].mxu0
        %v536 = vadd.f32 0.0, %v535
        %v537 = vpop.f32.mrb[0].mxu0
        %v538 = vadd.f32 0.0, %v537
        %v539 = vpop.f32.mrb[0].mxu0
        %v540 = vadd.f32 0.0, %v539
        %541 = vmatprep.mubr.bf16.mxu0 0
        %542 = vmatmul.mubr.bf16.gmra.mrb[0].mxu0 %v306
        %v543 = vpop.f32.mrb[0].mxu0
        %v544 = vadd.f32 0.0, %v543
        %v545 = vpop.f32.mrb[0].mxu0
        %v546 = vadd.f32 0.0, %v545
        %v547 = vpop.f32.mrb[0].mxu0
        %v548 = vadd.f32 0.0, %v547
        %v549 = vpop.f32.mrb[0].mxu0
        %v550 = vadd.f32 0.0, %v549
        %551 = vdwg.mxu0
        %552 = vmatprep.subr.bf16.mxu0 %v438
        %553 = vmatpush1.bf16.msra.mxu0 %v437
        %554 = vmatprep.subr.bf16.mxu0 %v442
        %555 = vmatpush1.bf16.msra.mxu0 %v441
        %556 = vmatprep.subr.bf16.mxu0 %v446
        %557 = vmatpush1.bf16.msra.mxu0 %v445
        %558 = vmatprep.subr.bf16.mxu0 %v450
        %559 = vmatpush1.bf16.msra.mxu0 %v449
        %560 = vmatprep.subr.bf16.mxu0 %v454
        %561 = vmatpush1.bf16.msra.mxu0 %v453
        %562 = vmatprep.subr.bf16.mxu0 %v458
        %563 = vmatpush1.bf16.msra.mxu0 %v457
        %564 = vmatprep.subr.bf16.mxu0 %v462
        %565 = vmatpush1.bf16.msra.mxu0 %v461
        %566 = vmatprep.subr.bf16.mxu0 %v466
        %567 = vmatpush1.bf16.msra.mxu0 %v465
        %568 = vmatprep.subr.bf16.mxu0 0
        %569 = vmatpush1.bf16.msra.mxu0 0
        %570 = vmatprep.subr.bf16.mxu0 0
        %571 = vmatpush1.bf16.msra.mxu0 0
        %572 = vmatprep.subr.bf16.mxu0 0
        %573 = vmatpush1.bf16.msra.mxu0 0
        %574 = vmatprep.subr.bf16.mxu0 0
        %575 = vmatpush1.bf16.msra.mxu0 0
        %576 = vmatprep.subr.bf16.mxu0 0
        %577 = vmatpush1.bf16.msra.mxu0 0
        %578 = vmatprep.subr.bf16.mxu0 0
        %579 = vmatpush1.bf16.msra.mxu0 0
        %580 = vmatprep.subr.bf16.mxu0 0
        %581 = vmatpush1.bf16.msra.mxu0 0
        %582 = vmatprep.subr.bf16.mxu0 0
        %583 = vmatpush1.bf16.msra.mxu0 0
        %584 = vmatprep.mubr.bf16.mxu0 0
        %585 = vmatmul.mubr.bf16.gmra.mrb[0].mxu0 %v305
        %v586 = vpop.f32.mrb[0].mxu0
        %v587 = vadd.f32 0.0, %v586
        %v588 = vpop.f32.mrb[0].mxu0
        %v589 = vadd.f32 0.0, %v588
        %v590 = vpop.f32.mrb[0].mxu0
        %v591 = vadd.f32 0.0, %v590
        %v592 = vpop.f32.mrb[0].mxu0
        %v593 = vadd.f32 0.0, %v592
        %594 = vmatprep.mubr.bf16.mxu0 0
        %595 = vmatmul.mubr.bf16.gmra.mrb[0].mxu0 %v306
        %v596 = vpop.f32.mrb[0].mxu0
        %v597 = vadd.f32 0.0, %v596
        %v598 = vpop.f32.mrb[0].mxu0
        %v599 = vadd.f32 0.0, %v598
        %v600 = vpop.f32.mrb[0].mxu0
        %v601 = vadd.f32 0.0, %v600
        %v602 = vpop.f32.mrb[0].mxu0
        %v603 = vadd.f32 0.0, %v602
        %604 = vdwg.mxu0
        %605 = vst [vmem:[#allocation2] sm:$0xff] %v534
        %606 = vst [vmem:[#allocation2 + $0x8] sm:$0xff] %v536
        %607 = vst [vmem:[#allocation2 + $0x10] sm:$0xff] %v587
        %608 = vst [vmem:[#allocation2 + $0x18] sm:$0xff] %v589
        %609 = vst [vmem:[#allocation2 + $0x20] sm:$0xff] %v538
        %610 = vst [vmem:[#allocation2 + $0x28] sm:$0xff] %v540
        %611 = vst [vmem:[#allocation2 + $0x30] sm:$0xff] %v591
        %612 = vst [vmem:[#allocation2 + $0x38] sm:$0xff] %v593
        %613 = vst [vmem:[#allocation2 + $0x40] sm:$0xff] %v544
        %614 = vst [vmem:[#allocation2 + $0x48] sm:$0xff] %v546
        %615 = vst [vmem:[#allocation2 + $0x50] sm:$0xff] %v597
        %616 = vst [vmem:[#allocation2 + $0x58] sm:$0xff] %v599
        %617 = vst [vmem:[#allocation2 + $0x60] sm:$0xff] %v548
        %618 = vst [vmem:[#allocation2 + $0x68] sm:$0xff] %v550
        %619 = vst [vmem:[#allocation2 + $0x70] sm:$0xff] %v601
        %620 = vst [vmem:[#allocation2 + $0x78] sm:$0xff] %v603
        %621 = vmatprep.subr.bf16.mxu0 0
        %622 = vmatpush1.bf16.msra.mxu0 %v305
        %623 = vmatprep.subr.bf16.mxu0 0
        %624 = vmatpush1.bf16.msra.mxu0 %v306
        %625 = vmatprep.subr.bf16.mxu0 0
        %626 = vmatpush1.bf16.msra.mxu0 0
        %627 = vmatprep.subr.bf16.mxu0 0
        %628 = vmatpush1.bf16.msra.mxu0 0
        %629 = vmatprep.subr.bf16.mxu0 0
        %630 = vmatpush1.bf16.msra.mxu0 0
        %631 = vmatprep.subr.bf16.mxu0 0
        %632 = vmatpush1.bf16.msra.mxu0 0
        %633 = vmatprep.subr.bf16.mxu0 0
        %634 = vmatpush1.bf16.msra.mxu0 0
        %635 = vmatprep.subr.bf16.mxu0 0
        %636 = vmatpush1.bf16.msra.mxu0 0
        %637 = vmatprep.subr.bf16.mxu0 0
        %638 = vmatpush1.bf16.msra.mxu0 0
        %639 = vmatprep.subr.bf16.mxu0 0
        %640 = vmatpush1.bf16.msra.mxu0 0
        %641 = vmatprep.subr.bf16.mxu0 0
        %642 = vmatpush1.bf16.msra.mxu0 0
        %643 = vmatprep.subr.bf16.mxu0 0
        %644 = vmatpush1.bf16.msra.mxu0 0
        %645 = vmatprep.subr.bf16.mxu0 0
        %646 = vmatpush1.bf16.msra.mxu0 0
        %647 = vmatprep.subr.bf16.mxu0 0
        %648 = vmatpush1.bf16.msra.mxu0 0
        %649 = vmatprep.subr.bf16.mxu0 0
        %650 = vmatpush1.bf16.msra.mxu0 0
        %651 = vmatprep.subr.bf16.mxu0 0
        %652 = vmatpush1.bf16.msra.mxu0 0
        %653 = vmatprep.mubr.bf16.mxu0 0
        %654 = vmatmul.mubr.bf16.gmra.mrb[0].mxu0 %v251
        %v655 = vpop.f32.mrb[0].mxu0
        %v656 = vadd.f32 0.0, %v655
        %v657 = vpop.f32.mrb[0].mxu0
        %v658 = vpop.f32.mrb[0].mxu0
        %v659 = vadd.f32 0.0, %v658
        %v660 = vpop.f32.mrb[0].mxu0
        %661 = vmatprep.mubr.bf16.mxu0 0
        %662 = vmatmul.mubr.bf16.gmra.mrb[0].mxu0 %v254
        %v663 = vpop.f32.mrb[0].mxu0
        %v664 = vadd.f32 0.0, %v663
        %v665 = vpop.f32.mrb[0].mxu0
        %v666 = vpop.f32.mrb[0].mxu0
        %v667 = vadd.f32 0.0, %v666
        %v668 = vpop.f32.mrb[0].mxu0
        %669 = vdwg.mxu0
        %v670 = vpack.c.bf16 %v659, %v656
        %v671 = vpack.c.bf16 %v667, %v664
        %s672 = scalar_lea.vmem [#allocation8], 256
        %v673 = vld [vmem:[%s672] sm:$0xff]
        %v674 = vld [vmem:[%s672 + $0x8] sm:$0xff]
        %v675 = vld [vmem:[%s672 + $0x10] sm:$0xff]
        %v676 = vld [vmem:[%s672 + $0x18] sm:$0xff]
        %v677 = vld [vmem:[%s672 + $0x20] sm:$0xff]
        %v678 = vld [vmem:[%s672 + $0x28] sm:$0xff]
        %v679 = vld [vmem:[%s672 + $0x30] sm:$0xff]
        %v680 = vld [vmem:[%s672 + $0x38] sm:$0xff]
        %v681 = vld [vmem:[%s672 + $0x40] sm:$0xff]
        %v682 = vld [vmem:[%s672 + $0x48] sm:$0xff]
        %v683 = vld [vmem:[%s672 + $0x50] sm:$0xff]
        %v684 = vld [vmem:[%s672 + $0x58] sm:$0xff]
        %v685 = vld [vmem:[%s672 + $0x60] sm:$0xff]
        %v686 = vld [vmem:[%s672 + $0x68] sm:$0xff]
        %v687 = vld [vmem:[%s672 + $0x70] sm:$0xff]
        %v688 = vld [vmem:[%s672 + $0x78] sm:$0xff]
        %v689 = vld [vmem:[%s672 + $0x80] sm:$0xff]
        %v690 = vld [vmem:[%s672 + $0x88] sm:$0xff]
        %v691 = vld [vmem:[%s672 + $0x90] sm:$0xff]
        %v692 = vld [vmem:[%s672 + $0x98] sm:$0xff]
        %v693 = vld [vmem:[%s672 + $0xa0] sm:$0xff]
        %v694 = vld [vmem:[%s672 + $0xa8] sm:$0xff]
        %v695 = vld [vmem:[%s672 + $0xb0] sm:$0xff]
        %v696 = vld [vmem:[%s672 + $0xb8] sm:$0xff]
        %v697 = vld [vmem:[%s672 + $0xc0] sm:$0xff]
        %v698 = vld [vmem:[%s672 + $0xc8] sm:$0xff]
        %v699 = vld [vmem:[%s672 + $0xd0] sm:$0xff]
        %v700 = vld [vmem:[%s672 + $0xd8] sm:$0xff]
        %v701 = vld [vmem:[%s672 + $0xe0] sm:$0xff]
        %v702 = vld [vmem:[%s672 + $0xe8] sm:$0xff]
        %v703 = vld [vmem:[%s672 + $0xf0] sm:$0xff]
        %v704 = vld [vmem:[%s672 + $0xf8] sm:$0xff]
        %v737 = vunpack.c.l.b16 %v673
        %v738 = vunpack.c.h.b16 %v673
        %v739 = vunpack.c.l.b16 %v674
        %v740 = vunpack.c.h.b16 %v674
        %v741 = vunpack.c.l.b16 %v675
        %v742 = vunpack.c.h.b16 %v675
        %v743 = vunpack.c.l.b16 %v676
        %v744 = vunpack.c.h.b16 %v676
        %v745 = vunpack.c.l.b16 %v677
        %v746 = vunpack.c.h.b16 %v677
        %v747 = vunpack.c.l.b16 %v678
        %v748 = vunpack.c.h.b16 %v678
        %v749 = vunpack.c.l.b16 %v679
        %v750 = vunpack.c.h.b16 %v679
        %v751 = vunpack.c.l.b16 %v680
        %v752 = vunpack.c.h.b16 %v680
        %v753 = vunpack.c.l.b16 %v681
        %v754 = vunpack.c.h.b16 %v681
        %v755 = vunpack.c.l.b16 %v682
        %v756 = vunpack.c.h.b16 %v682
        %v757 = vunpack.c.l.b16 %v683
        %v758 = vunpack.c.h.b16 %v683
        %v759 = vunpack.c.l.b16 %v684
        %v760 = vunpack.c.h.b16 %v684
        %v761 = vunpack.c.l.b16 %v685
        %v762 = vunpack.c.h.b16 %v685
        %v763 = vunpack.c.l.b16 %v686
        %v764 = vunpack.c.h.b16 %v686
        %v765 = vunpack.c.l.b16 %v687
        %v766 = vunpack.c.h.b16 %v687
        %v767 = vunpack.c.l.b16 %v688
        %v768 = vunpack.c.h.b16 %v688
        %v769 = vunpack.c.l.b16 %v689
        %v770 = vunpack.c.h.b16 %v689
        %v771 = vunpack.c.l.b16 %v690
        %v772 = vunpack.c.h.b16 %v690
        %v773 = vunpack.c.l.b16 %v691
        %v774 = vunpack.c.h.b16 %v691
        %v775 = vunpack.c.l.b16 %v692
        %v776 = vunpack.c.h.b16 %v692
        %v777 = vunpack.c.l.b16 %v693
        %v778 = vunpack.c.h.b16 %v693
        %v779 = vunpack.c.l.b16 %v694
        %v780 = vunpack.c.h.b16 %v694
        %v781 = vunpack.c.l.b16 %v695
        %v782 = vunpack.c.h.b16 %v695
        %v783 = vunpack.c.l.b16 %v696
        %v784 = vunpack.c.h.b16 %v696
        %v785 = vunpack.c.l.b16 %v697
        %v786 = vunpack.c.h.b16 %v697
        %v787 = vunpack.c.l.b16 %v698
        %v788 = vunpack.c.h.b16 %v698
        %v789 = vunpack.c.l.b16 %v699
        %v790 = vunpack.c.h.b16 %v699
        %v791 = vunpack.c.l.b16 %v700
        %v792 = vunpack.c.h.b16 %v700
        %v793 = vunpack.c.l.b16 %v701
        %v794 = vunpack.c.h.b16 %v701
        %v795 = vunpack.c.l.b16 %v702
        %v796 = vunpack.c.h.b16 %v702
        %v797 = vunpack.c.l.b16 %v703
        %v798 = vunpack.c.h.b16 %v703
        %v799 = vunpack.c.l.b16 %v704
        %v800 = vunpack.c.h.b16 %v704
        %v801 = vpack.c.b16 %v741, %v737
        %v802 = vpack.c.b16 %v742, %v738
        %v803 = vpack.c.b16 %v743, %v739
        %v804 = vpack.c.b16 %v744, %v740
        %v805 = vpack.c.b16 %v749, %v745
        %v806 = vpack.c.b16 %v750, %v746
        %v807 = vpack.c.b16 %v751, %v747
        %v808 = vpack.c.b16 %v752, %v748
        %v809 = vpack.c.b16 %v757, %v753
        %v810 = vpack.c.b16 %v758, %v754
        %v811 = vpack.c.b16 %v759, %v755
        %v812 = vpack.c.b16 %v760, %v756
        %v813 = vpack.c.b16 %v765, %v761
        %v814 = vpack.c.b16 %v766, %v762
        %v815 = vpack.c.b16 %v767, %v763
        %v816 = vpack.c.b16 %v768, %v764
        %v817 = vpack.c.b16 %v773, %v769
        %v818 = vpack.c.b16 %v774, %v770
        %v819 = vpack.c.b16 %v775, %v771
        %v820 = vpack.c.b16 %v776, %v772
        %v821 = vpack.c.b16 %v781, %v777
        %v822 = vpack.c.b16 %v782, %v778
        %v823 = vpack.c.b16 %v783, %v779
        %v824 = vpack.c.b16 %v784, %v780
        %v825 = vpack.c.b16 %v789, %v785
        %v826 = vpack.c.b16 %v790, %v786
        %v827 = vpack.c.b16 %v791, %v787
        %v828 = vpack.c.b16 %v792, %v788
        %v829 = vpack.c.b16 %v797, %v793
        %v830 = vpack.c.b16 %v798, %v794
        %v831 = vpack.c.b16 %v799, %v795
        %v832 = vpack.c.b16 %v800, %v796
        %865 = vmatprep.subr.bf16.mxu0 %v802
        %866 = vmatpush1.bf16.msra.mxu0 %v801
        %867 = vmatprep.subr.bf16.mxu0 %v806
        %868 = vmatpush1.bf16.msra.mxu0 %v805
        %869 = vmatprep.subr.bf16.mxu0 %v810
        %870 = vmatpush1.bf16.msra.mxu0 %v809
        %871 = vmatprep.subr.bf16.mxu0 %v814
        %872 = vmatpush1.bf16.msra.mxu0 %v813
        %873 = vmatprep.subr.bf16.mxu0 %v818
        %874 = vmatpush1.bf16.msra.mxu0 %v817
        %875 = vmatprep.subr.bf16.mxu0 %v822
        %876 = vmatpush1.bf16.msra.mxu0 %v821
        %877 = vmatprep.subr.bf16.mxu0 %v826
        %878 = vmatpush1.bf16.msra.mxu0 %v825
        %879 = vmatprep.subr.bf16.mxu0 %v830
        %880 = vmatpush1.bf16.msra.mxu0 %v829
        %881 = vmatprep.subr.bf16.mxu0 0
        %882 = vmatpush1.bf16.msra.mxu0 0
        %883 = vmatprep.subr.bf16.mxu0 0
        %884 = vmatpush1.bf16.msra.mxu0 0
        %885 = vmatprep.subr.bf16.mxu0 0
        %886 = vmatpush1.bf16.msra.mxu0 0
        %887 = vmatprep.subr.bf16.mxu0 0
        %888 = vmatpush1.bf16.msra.mxu0 0
        %889 = vmatprep.subr.bf16.mxu0 0
        %890 = vmatpush1.bf16.msra.mxu0 0
        %891 = vmatprep.subr.bf16.mxu0 0
        %892 = vmatpush1.bf16.msra.mxu0 0
        %893 = vmatprep.subr.bf16.mxu0 0
        %894 = vmatpush1.bf16.msra.mxu0 0
        %895 = vmatprep.subr.bf16.mxu0 0
        %896 = vmatpush1.bf16.msra.mxu0 0
        %897 = vmatprep.mubr.bf16.mxu0 0
        %898 = vmatmul.mubr.bf16.gmra.mrb[0].mxu0 %v670
        %v899 = vpop.f32.mrb[0].mxu0
        %v900 = vadd.f32 0.0, %v899
        %v901 = vpop.f32.mrb[0].mxu0
        %v902 = vadd.f32 0.0, %v901
        %v903 = vpop.f32.mrb[0].mxu0
        %v904 = vadd.f32 0.0, %v903
        %v905 = vpop.f32.mrb[0].mxu0
        %v906 = vadd.f32 0.0, %v905
        %907 = vmatprep.mubr.bf16.mxu0 0
        %908 = vmatmul.mubr.bf16.gmra.mrb[0].mxu0 %v671
        %v909 = vpop.f32.mrb[0].mxu0
        %v910 = vadd.f32 0.0, %v909
        %v911 = vpop.f32.mrb[0].mxu0
        %v912 = vadd.f32 0.0, %v911
        %v913 = vpop.f32.mrb[0].mxu0
        %v914 = vadd.f32 0.0, %v913
        %v915 = vpop.f32.mrb[0].mxu0
        %v916 = vadd.f32 0.0, %v915
        %917 = vdwg.mxu0
        %918 = vmatprep.subr.bf16.mxu0 %v804
        %919 = vmatpush1.bf16.msra.mxu0 %v803
        %920 = vmatprep.subr.bf16.mxu0 %v808
        %921 = vmatpush1.bf16.msra.mxu0 %v807
        %922 = vmatprep.subr.bf16.mxu0 %v812
        %923 = vmatpush1.bf16.msra.mxu0 %v811
        %924 = vmatprep.subr.bf16.mxu0 %v816
        %925 = vmatpush1.bf16.msra.mxu0 %v815
        %926 = vmatprep.subr.bf16.mxu0 %v820
        %927 = vmatpush1.bf16.msra.mxu0 %v819
        %928 = vmatprep.subr.bf16.mxu0 %v824
        %929 = vmatpush1.bf16.msra.mxu0 %v823
        %930 = vmatprep.subr.bf16.mxu0 %v828
        %931 = vmatpush1.bf16.msra.mxu0 %v827
        %932 = vmatprep.subr.bf16.mxu0 %v832
        %933 = vmatpush1.bf16.msra.mxu0 %v831
        %934 = vmatprep.subr.bf16.mxu0 0
        %935 = vmatpush1.bf16.msra.mxu0 0
        %936 = vmatprep.subr.bf16.mxu0 0
        %937 = vmatpush1.bf16.msra.mxu0 0
        %938 = vmatprep.subr.bf16.mxu0 0
        %939 = vmatpush1.bf16.msra.mxu0 0
        %940 = vmatprep.subr.bf16.mxu0 0
        %941 = vmatpush1.bf16.msra.mxu0 0
        %942 = vmatprep.subr.bf16.mxu0 0
        %943 = vmatpush1.bf16.msra.mxu0 0
        %944 = vmatprep.subr.bf16.mxu0 0
        %945 = vmatpush1.bf16.msra.mxu0 0
        %946 = vmatprep.subr.bf16.mxu0 0
        %947 = vmatpush1.bf16.msra.mxu0 0
        %948 = vmatprep.subr.bf16.mxu0 0
        %949 = vmatpush1.bf16.msra.mxu0 0
        %950 = vmatprep.mubr.bf16.mxu0 0
        %951 = vmatmul.mubr.bf16.gmra.mrb[0].mxu0 %v670
        %v952 = vpop.f32.mrb[0].mxu0
        %v953 = vadd.f32 0.0, %v952
        %v954 = vpop.f32.mrb[0].mxu0
        %v955 = vadd.f32 0.0, %v954
        %v956 = vpop.f32.mrb[0].mxu0
        %v957 = vadd.f32 0.0, %v956
        %v958 = vpop.f32.mrb[0].mxu0
        %v959 = vadd.f32 0.0, %v958
        %960 = vmatprep.mubr.bf16.mxu0 0
        %961 = vmatmul.mubr.bf16.gmra.mrb[0].mxu0 %v671
        %v962 = vpop.f32.mrb[0].mxu0
        %v963 = vadd.f32 0.0, %v962
        %v964 = vpop.f32.mrb[0].mxu0
        %v965 = vadd.f32 0.0, %v964
        %v966 = vpop.f32.mrb[0].mxu0
        %v967 = vadd.f32 0.0, %v966
        %v968 = vpop.f32.mrb[0].mxu0
        %v969 = vadd.f32 0.0, %v968
        %970 = vdwg.mxu0
        %v971 = vld [vmem:[#allocation2] sm:$0xff]
        %v972 = vld [vmem:[#allocation2 + $0x8] sm:$0xff]
        %v973 = vld [vmem:[#allocation2 + $0x10] sm:$0xff]
        %v974 = vld [vmem:[#allocation2 + $0x18] sm:$0xff]
        %v975 = vld [vmem:[#allocation2 + $0x20] sm:$0xff]
        %v976 = vld [vmem:[#allocation2 + $0x28] sm:$0xff]
        %v977 = vld [vmem:[#allocation2 + $0x30] sm:$0xff]
        %v978 = vld [vmem:[#allocation2 + $0x38] sm:$0xff]
        %v979 = vld [vmem:[#allocation2 + $0x40] sm:$0xff]
        %v980 = vld [vmem:[#allocation2 + $0x48] sm:$0xff]
        %v981 = vld [vmem:[#allocation2 + $0x50] sm:$0xff]
        %v982 = vld [vmem:[#allocation2 + $0x58] sm:$0xff]
        %v983 = vld [vmem:[#allocation2 + $0x60] sm:$0xff]
        %v984 = vld [vmem:[#allocation2 + $0x68] sm:$0xff]
        %v985 = vld [vmem:[#allocation2 + $0x70] sm:$0xff]
        %v986 = vld [vmem:[#allocation2 + $0x78] sm:$0xff]
        %v987 = vadd.f32 %v971, %v900
        %v988 = vadd.f32 %v972, %v902
        %v989 = vadd.f32 %v973, %v953
        %v990 = vadd.f32 %v974, %v955
        %v991 = vadd.f32 %v975, %v904
        %v992 = vadd.f32 %v976, %v906
        %v993 = vadd.f32 %v977, %v957
        %v994 = vadd.f32 %v978, %v959
        %v995 = vadd.f32 %v979, %v910
        %v996 = vadd.f32 %v980, %v912
        %v997 = vadd.f32 %v981, %v963
        %v998 = vadd.f32 %v982, %v965
        %v999 = vadd.f32 %v983, %v914
        %v1000 = vadd.f32 %v984, %v916
        %v1001 = vadd.f32 %v985, %v967
        %v1002 = vadd.f32 %v986, %v969
        %1003 = vst [vmem:[#allocation2] sm:$0xff] %v987
        %1004 = vst [vmem:[#allocation2 + $0x8] sm:$0xff] %v988
        %1005 = vst [vmem:[#allocation2 + $0x10] sm:$0xff] %v989
        %1006 = vst [vmem:[#allocation2 + $0x18] sm:$0xff] %v990
        %1007 = vst [vmem:[#allocation2 + $0x20] sm:$0xff] %v991
        %1008 = vst [vmem:[#allocation2 + $0x28] sm:$0xff] %v992
        %1009 = vst [vmem:[#allocation2 + $0x30] sm:$0xff] %v993
        %1010 = vst [vmem:[#allocation2 + $0x38] sm:$0xff] %v994
        %1011 = vst [vmem:[#allocation2 + $0x40] sm:$0xff] %v995
        %1012 = vst [vmem:[#allocation2 + $0x48] sm:$0xff] %v996
        %1013 = vst [vmem:[#allocation2 + $0x50] sm:$0xff] %v997
        %1014 = vst [vmem:[#allocation2 + $0x58] sm:$0xff] %v998
        %1015 = vst [vmem:[#allocation2 + $0x60] sm:$0xff] %v999
        %1016 = vst [vmem:[#allocation2 + $0x68] sm:$0xff] %v1000
        %1017 = vst [vmem:[#allocation2 + $0x70] sm:$0xff] %v1001
        %1018 = vst [vmem:[#allocation2 + $0x78] sm:$0xff] %v1002
        %s1019 = scalar_lea.vmem [#allocation3], 16
        %v1020 = vld [vmem:[%s1019] sm:$0xf]
        %v1021 = vld [vmem:[%s1019 + $0x4] sm:$0xf]
        %v1022 = vld [vmem:[%s1019 + $0x8] sm:$0xf]
        %v1023 = vld [vmem:[%s1019 + $0xc] sm:$0xf]
        %v1028 = vunpack.c.l.b16 %v1020
        %v1029 = vunpack.c.l.b16 %v1021
        %v1030 = vunpack.c.l.b16 %v1022
        %v1031 = vunpack.c.l.b16 %v1023
        %v1032 = vpack.c.b16 %v1029, %v1028
        %v1033 = vpack.c.b16 %v1031, %v1030
        %v1035 = vsel %vm249, %v1032, 0
        %v1038 = vsel %vm249, %v1033, 0
        %1040 = vmatprep.subr.bf16.mxu0 0
        %1041 = vmatpush1.bf16.msra.mxu0 %v245
        %1042 = vmatprep.subr.bf16.mxu0 0
        %1043 = vmatpush1.bf16.msra.mxu0 %v246
        %1044 = vmatprep.subr.bf16.mxu0 0
        %1045 = vmatpush1.bf16.msra.mxu0 0
        %1046 = vmatprep.subr.bf16.mxu0 0
        %1047 = vmatpush1.bf16.msra.mxu0 0
        %1048 = vmatprep.subr.bf16.mxu0 0
        %1049 = vmatpush1.bf16.msra.mxu0 0
        %1050 = vmatprep.subr.bf16.mxu0 0
        %1051 = vmatpush1.bf16.msra.mxu0 0
        %1052 = vmatprep.subr.bf16.mxu0 0
        %1053 = vmatpush1.bf16.msra.mxu0 0
        %1054 = vmatprep.subr.bf16.mxu0 0
        %1055 = vmatpush1.bf16.msra.mxu0 0
        %1056 = vmatprep.subr.bf16.mxu0 0
        %1057 = vmatpush1.bf16.msra.mxu0 0
        %1058 = vmatprep.subr.bf16.mxu0 0
        %1059 = vmatpush1.bf16.msra.mxu0 0
        %1060 = vmatprep.subr.bf16.mxu0 0
        %1061 = vmatpush1.bf16.msra.mxu0 0
        %1062 = vmatprep.subr.bf16.mxu0 0
        %1063 = vmatpush1.bf16.msra.mxu0 0
        %1064 = vmatprep.subr.bf16.mxu0 0
        %1065 = vmatpush1.bf16.msra.mxu0 0
        %1066 = vmatprep.subr.bf16.mxu0 0
        %1067 = vmatpush1.bf16.msra.mxu0 0
        %1068 = vmatprep.subr.bf16.mxu0 0
        %1069 = vmatpush1.bf16.msra.mxu0 0
        %1070 = vmatprep.subr.bf16.mxu0 0
        %1071 = vmatpush1.bf16.msra.mxu0 0
        %1072 = vmatprep.mubr.bf16.mxu0 0
        %1073 = vmatmul.mubr.bf16.gmra.mrb[0].mxu0 %v1035
        %v1074 = vpop.f32.mrb[0].mxu0
        %v1075 = vadd.f32 0.0, %v1074
        %v1076 = vpop.f32.mrb[0].mxu0
        %v1077 = vpop.f32.mrb[0].mxu0
        %v1078 = vadd.f32 0.0, %v1077
        %v1079 = vpop.f32.mrb[0].mxu0
        %1080 = vmatprep.mubr.bf16.mxu0 0
        %1081 = vmatmul.mubr.bf16.gmra.mrb[0].mxu0 %v1038
        %v1082 = vpop.f32.mrb[0].mxu0
        %v1083 = vadd.f32 0.0, %v1082
        %v1084 = vpop.f32.mrb[0].mxu0
        %v1085 = vpop.f32.mrb[0].mxu0
        %v1086 = vadd.f32 0.0, %v1085
        %v1087 = vpop.f32.mrb[0].mxu0
        %1088 = vdwg.mxu0
        %v1089 = vpack.c.bf16 %v1078, %v1075
        %v1090 = vpack.c.bf16 %v1086, %v1083
        %s1091 = scalar_lea.vmem [#allocation8], 512
        %v1092 = vld [vmem:[%s1091] sm:$0xff]
        %v1093 = vld [vmem:[%s1091 + $0x8] sm:$0xff]
        %v1094 = vld [vmem:[%s1091 + $0x10] sm:$0xff]
        %v1095 = vld [vmem:[%s1091 + $0x18] sm:$0xff]
        %v1096 = vld [vmem:[%s1091 + $0x20] sm:$0xff]
        %v1097 = vld [vmem:[%s1091 + $0x28] sm:$0xff]
        %v1098 = vld [vmem:[%s1091 + $0x30] sm:$0xff]
        %v1099 = vld [vmem:[%s1091 + $0x38] sm:$0xff]
        %v1100 = vld [vmem:[%s1091 + $0x40] sm:$0xff]
        %v1101 = vld [vmem:[%s1091 + $0x48] sm:$0xff]
        %v1102 = vld [vmem:[%s1091 + $0x50] sm:$0xff]
        %v1103 = vld [vmem:[%s1091 + $0x58] sm:$0xff]
        %v1104 = vld [vmem:[%s1091 + $0x60] sm:$0xff]
        %v1105 = vld [vmem:[%s1091 + $0x68] sm:$0xff]
        %v1106 = vld [vmem:[%s1091 + $0x70] sm:$0xff]
        %v1107 = vld [vmem:[%s1091 + $0x78] sm:$0xff]
        %v1108 = vld [vmem:[%s1091 + $0x80] sm:$0xff]
        %v1109 = vld [vmem:[%s1091 + $0x88] sm:$0xff]
        %v1110 = vld [vmem:[%s1091 + $0x90] sm:$0xff]
        %v1111 = vld [vmem:[%s1091 + $0x98] sm:$0xff]
        %v1112 = vld [vmem:[%s1091 + $0xa0] sm:$0xff]
        %v1113 = vld [vmem:[%s1091 + $0xa8] sm:$0xff]
        %v1114 = vld [vmem:[%s1091 + $0xb0] sm:$0xff]
        %v1115 = vld [vmem:[%s1091 + $0xb8] sm:$0xff]
        %v1116 = vld [vmem:[%s1091 + $0xc0] sm:$0xff]
        %v1117 = vld [vmem:[%s1091 + $0xc8] sm:$0xff]
        %v1118 = vld [vmem:[%s1091 + $0xd0] sm:$0xff]
        %v1119 = vld [vmem:[%s1091 + $0xd8] sm:$0xff]
        %v1120 = vld [vmem:[%s1091 + $0xe0] sm:$0xff]
        %v1121 = vld [vmem:[%s1091 + $0xe8] sm:$0xff]
        %v1122 = vld [vmem:[%s1091 + $0xf0] sm:$0xff]
        %v1123 = vld [vmem:[%s1091 + $0xf8] sm:$0xff]
        %v1156 = vunpack.c.l.b16 %v1092
        %v1157 = vunpack.c.h.b16 %v1092
        %v1158 = vunpack.c.l.b16 %v1093
        %v1159 = vunpack.c.h.b16 %v1093
        %v1160 = vunpack.c.l.b16 %v1094
        %v1161 = vunpack.c.h.b16 %v1094
        %v1162 = vunpack.c.l.b16 %v1095
        %v1163 = vunpack.c.h.b16 %v1095
        %v1164 = vunpack.c.l.b16 %v1096
        %v1165 = vunpack.c.h.b16 %v1096
        %v1166 = vunpack.c.l.b16 %v1097
        %v1167 = vunpack.c.h.b16 %v1097
        %v1168 = vunpack.c.l.b16 %v1098
        %v1169 = vunpack.c.h.b16 %v1098
        %v1170 = vunpack.c.l.b16 %v1099
        %v1171 = vunpack.c.h.b16 %v1099
        %v1172 = vunpack.c.l.b16 %v1100
        %v1173 = vunpack.c.h.b16 %v1100
        %v1174 = vunpack.c.l.b16 %v1101
        %v1175 = vunpack.c.h.b16 %v1101
        %v1176 = vunpack.c.l.b16 %v1102
        %v1177 = vunpack.c.h.b16 %v1102
        %v1178 = vunpack.c.l.b16 %v1103
        %v1179 = vunpack.c.h.b16 %v1103
        %v1180 = vunpack.c.l.b16 %v1104
        %v1181 = vunpack.c.h.b16 %v1104
        %v1182 = vunpack.c.l.b16 %v1105
        %v1183 = vunpack.c.h.b16 %v1105
        %v1184 = vunpack.c.l.b16 %v1106
        %v1185 = vunpack.c.h.b16 %v1106
        %v1186 = vunpack.c.l.b16 %v1107
        %v1187 = vunpack.c.h.b16 %v1107
        %v1188 = vunpack.c.l.b16 %v1108
        %v1189 = vunpack.c.h.b16 %v1108
        %v1190 = vunpack.c.l.b16 %v1109
        %v1191 = vunpack.c.h.b16 %v1109
        %v1192 = vunpack.c.l.b16 %v1110
        %v1193 = vunpack.c.h.b16 %v1110
        %v1194 = vunpack.c.l.b16 %v1111
        %v1195 = vunpack.c.h.b16 %v1111
        %v1196 = vunpack.c.l.b16 %v1112
        %v1197 = vunpack.c.h.b16 %v1112
        %v1198 = vunpack.c.l.b16 %v1113
        %v1199 = vunpack.c.h.b16 %v1113
        %v1200 = vunpack.c.l.b16 %v1114
        %v1201 = vunpack.c.h.b16 %v1114
        %v1202 = vunpack.c.l.b16 %v1115
        %v1203 = vunpack.c.h.b16 %v1115
        %v1204 = vunpack.c.l.b16 %v1116
        %v1205 = vunpack.c.h.b16 %v1116
        %v1206 = vunpack.c.l.b16 %v1117
        %v1207 = vunpack.c.h.b16 %v1117
        %v1208 = vunpack.c.l.b16 %v1118
        %v1209 = vunpack.c.h.b16 %v1118
        %v1210 = vunpack.c.l.b16 %v1119
        %v1211 = vunpack.c.h.b16 %v1119
        %v1212 = vunpack.c.l.b16 %v1120
        %v1213 = vunpack.c.h.b16 %v1120
        %v1214 = vunpack.c.l.b16 %v1121
        %v1215 = vunpack.c.h.b16 %v1121
        %v1216 = vunpack.c.l.b16 %v1122
        %v1217 = vunpack.c.h.b16 %v1122
        %v1218 = vunpack.c.l.b16 %v1123
        %v1219 = vunpack.c.h.b16 %v1123
        %v1220 = vpack.c.b16 %v1160, %v1156
        %v1221 = vpack.c.b16 %v1161, %v1157
        %v1222 = vpack.c.b16 %v1162, %v1158
        %v1223 = vpack.c.b16 %v1163, %v1159
        %v1224 = vpack.c.b16 %v1168, %v1164
        %v1225 = vpack.c.b16 %v1169, %v1165
        %v1226 = vpack.c.b16 %v1170, %v1166
        %v1227 = vpack.c.b16 %v1171, %v1167
        %v1228 = vpack.c.b16 %v1176, %v1172
        %v1229 = vpack.c.b16 %v1177, %v1173
        %v1230 = vpack.c.b16 %v1178, %v1174
        %v1231 = vpack.c.b16 %v1179, %v1175
        %v1232 = vpack.c.b16 %v1184, %v1180
        %v1233 = vpack.c.b16 %v1185, %v1181
        %v1234 = vpack.c.b16 %v1186, %v1182
        %v1235 = vpack.c.b16 %v1187, %v1183
        %v1236 = vpack.c.b16 %v1192, %v1188
        %v1237 = vpack.c.b16 %v1193, %v1189
        %v1238 = vpack.c.b16 %v1194, %v1190
        %v1239 = vpack.c.b16 %v1195, %v1191
        %v1240 = vpack.c.b16 %v1200, %v1196
        %v1241 = vpack.c.b16 %v1201, %v1197
        %v1242 = vpack.c.b16 %v1202, %v1198
        %v1243 = vpack.c.b16 %v1203, %v1199
        %v1244 = vpack.c.b16 %v1208, %v1204
        %v1245 = vpack.c.b16 %v1209, %v1205
        %v1246 = vpack.c.b16 %v1210, %v1206
        %v1247 = vpack.c.b16 %v1211, %v1207
        %v1248 = vpack.c.b16 %v1216, %v1212
        %v1249 = vpack.c.b16 %v1217, %v1213
        %v1250 = vpack.c.b16 %v1218, %v1214
        %v1251 = vpack.c.b16 %v1219, %v1215
        %1284 = vmatprep.subr.bf16.mxu0 %v1221
        %1285 = vmatpush1.bf16.msra.mxu0 %v1220
        %1286 = vmatprep.subr.bf16.mxu0 %v1225
        %1287 = vmatpush1.bf16.msra.mxu0 %v1224
        %1288 = vmatprep.subr.bf16.mxu0 %v1229
        %1289 = vmatpush1.bf16.msra.mxu0 %v1228
        %1290 = vmatprep.subr.bf16.mxu0 %v1233
        %1291 = vmatpush1.bf16.msra.mxu0 %v1232
        %1292 = vmatprep.subr.bf16.mxu0 %v1237
        %1293 = vmatpush1.bf16.msra.mxu0 %v1236
        %1294 = vmatprep.subr.bf16.mxu0 %v1241
        %1295 = vmatpush1.bf16.msra.mxu0 %v1240
        %1296 = vmatprep.subr.bf16.mxu0 %v1245
        %1297 = vmatpush1.bf16.msra.mxu0 %v1244
        %1298 = vmatprep.subr.bf16.mxu0 %v1249
        %1299 = vmatpush1.bf16.msra.mxu0 %v1248
        %1300 = vmatprep.subr.bf16.mxu0 0
        %1301 = vmatpush1.bf16.msra.mxu0 0
        %1302 = vmatprep.subr.bf16.mxu0 0
        %1303 = vmatpush1.bf16.msra.mxu0 0
        %1304 = vmatprep.subr.bf16.mxu0 0
        %1305 = vmatpush1.bf16.msra.mxu0 0
        %1306 = vmatprep.subr.bf16.mxu0 0
        %1307 = vmatpush1.bf16.msra.mxu0 0
        %1308 = vmatprep.subr.bf16.mxu0 0
        %1309 = vmatpush1.bf16.msra.mxu0 0
        %1310 = vmatprep.subr.bf16.mxu0 0
        %1311 = vmatpush1.bf16.msra.mxu0 0
        %1312 = vmatprep.subr.bf16.mxu0 0
        %1313 = vmatpush1.bf16.msra.mxu0 0
        %1314 = vmatprep.subr.bf16.mxu0 0
        %1315 = vmatpush1.bf16.msra.mxu0 0
        %1316 = vmatprep.mubr.bf16.mxu0 0
        %1317 = vmatmul.mubr.bf16.gmra.mrb[0].mxu0 %v1089
        %v1318 = vpop.f32.mrb[0].mxu0
        %v1319 = vadd.f32 0.0, %v1318
        %v1320 = vpop.f32.mrb[0].mxu0
        %v1321 = vadd.f32 0.0, %v1320
        %v1322 = vpop.f32.mrb[0].mxu0
        %v1323 = vadd.f32 0.0, %v1322
        %v1324 = vpop.f32.mrb[0].mxu0
        %v1325 = vadd.f32 0.0, %v1324
        %1326 = vmatprep.mubr.bf16.mxu0 0
        %1327 = vmatmul.mubr.bf16.gmra.mrb[0].mxu0 %v1090
        %v1328 = vpop.f32.mrb[0].mxu0
        %v1329 = vadd.f32 0.0, %v1328
        %v1330 = vpop.f32.mrb[0].mxu0
        %v1331 = vadd.f32 0.0, %v1330
        %v1332 = vpop.f32.mrb[0].mxu0
        %v1333 = vadd.f32 0.0, %v1332
        %v1334 = vpop.f32.mrb[0].mxu0
        %v1335 = vadd.f32 0.0, %v1334
        %1336 = vdwg.mxu0
        %1337 = vmatprep.subr.bf16.mxu0 %v1223
        %1338 = vmatpush1.bf16.msra.mxu0 %v1222
        %1339 = vmatprep.subr.bf16.mxu0 %v1227
        %1340 = vmatpush1.bf16.msra.mxu0 %v1226
        %1341 = vmatprep.subr.bf16.mxu0 %v1231
        %1342 = vmatpush1.bf16.msra.mxu0 %v1230
        %1343 = vmatprep.subr.bf16.mxu0 %v1235
        %1344 = vmatpush1.bf16.msra.mxu0 %v1234
        %1345 = vmatprep.subr.bf16.mxu0 %v1239
        %1346 = vmatpush1.bf16.msra.mxu0 %v1238
        %1347 = vmatprep.subr.bf16.mxu0 %v1243
        %1348 = vmatpush1.bf16.msra.mxu0 %v1242
        %1349 = vmatprep.subr.bf16.mxu0 %v1247
        %1350 = vmatpush1.bf16.msra.mxu0 %v1246
        %1351 = vmatprep.subr.bf16.mxu0 %v1251
        %1352 = vmatpush1.bf16.msra.mxu0 %v1250
        %1353 = vmatprep.subr.bf16.mxu0 0
        %1354 = vmatpush1.bf16.msra.mxu0 0
        %1355 = vmatprep.subr.bf16.mxu0 0
        %1356 = vmatpush1.bf16.msra.mxu0 0
        %1357 = vmatprep.subr.bf16.mxu0 0
        %1358 = vmatpush1.bf16.msra.mxu0 0
        %1359 = vmatprep.subr.bf16.mxu0 0
        %1360 = vmatpush1.bf16.msra.mxu0 0
        %1361 = vmatprep.subr.bf16.mxu0 0
        %1362 = vmatpush1.bf16.msra.mxu0 0
        %1363 = vmatprep.subr.bf16.mxu0 0
        %1364 = vmatpush1.bf16.msra.mxu0 0
        %1365 = vmatprep.subr.bf16.mxu0 0
        %1366 = vmatpush1.bf16.msra.mxu0 0
        %1367 = vmatprep.subr.bf16.mxu0 0
        %1368 = vmatpush1.bf16.msra.mxu0 0
        %1369 = vmatprep.mubr.bf16.mxu0 0
        %1370 = vmatmul.mubr.bf16.gmra.mrb[0].mxu0 %v1089
        %v1371 = vpop.f32.mrb[0].mxu0
        %v1372 = vadd.f32 0.0, %v1371
        %v1373 = vpop.f32.mrb[0].mxu0
        %v1374 = vadd.f32 0.0, %v1373
        %v1375 = vpop.f32.mrb[0].mxu0
        %v1376 = vadd.f32 0.0, %v1375
        %v1377 = vpop.f32.mrb[0].mxu0
        %v1378 = vadd.f32 0.0, %v1377
        %1379 = vmatprep.mubr.bf16.mxu0 0
        %1380 = vmatmul.mubr.bf16.gmra.mrb[0].mxu0 %v1090
        %v1381 = vpop.f32.mrb[0].mxu0
        %v1382 = vadd.f32 0.0, %v1381
        %v1383 = vpop.f32.mrb[0].mxu0
        %v1384 = vadd.f32 0.0, %v1383
        %v1385 = vpop.f32.mrb[0].mxu0
        %v1386 = vadd.f32 0.0, %v1385
        %v1387 = vpop.f32.mrb[0].mxu0
        %v1388 = vadd.f32 0.0, %v1387
        %1389 = vdwg.mxu0
        %v1390 = vld [vmem:[#allocation2] sm:$0xff]
        %v1391 = vld [vmem:[#allocation2 + $0x8] sm:$0xff]
        %v1392 = vld [vmem:[#allocation2 + $0x10] sm:$0xff]
        %v1393 = vld [vmem:[#allocation2 + $0x18] sm:$0xff]
        %v1394 = vld [vmem:[#allocation2 + $0x20] sm:$0xff]
        %v1395 = vld [vmem:[#allocation2 + $0x28] sm:$0xff]
        %v1396 = vld [vmem:[#allocation2 + $0x30] sm:$0xff]
        %v1397 = vld [vmem:[#allocation2 + $0x38] sm:$0xff]
        %v1398 = vld [vmem:[#allocation2 + $0x40] sm:$0xff]
        %v1399 = vld [vmem:[#allocation2 + $0x48] sm:$0xff]
        %v1400 = vld [vmem:[#allocation2 + $0x50] sm:$0xff]
        %v1401 = vld [vmem:[#allocation2 + $0x58] sm:$0xff]
        %v1402 = vld [vmem:[#allocation2 + $0x60] sm:$0xff]
        %v1403 = vld [vmem:[#allocation2 + $0x68] sm:$0xff]
        %v1404 = vld [vmem:[#allocation2 + $0x70] sm:$0xff]
        %v1405 = vld [vmem:[#allocation2 + $0x78] sm:$0xff]
        %v1406 = vadd.f32 %v1390, %v1319
        %v1407 = vadd.f32 %v1391, %v1321
        %v1408 = vadd.f32 %v1392, %v1372
        %v1409 = vadd.f32 %v1393, %v1374
        %v1410 = vadd.f32 %v1394, %v1323
        %v1411 = vadd.f32 %v1395, %v1325
        %v1412 = vadd.f32 %v1396, %v1376
        %v1413 = vadd.f32 %v1397, %v1378
        %v1414 = vadd.f32 %v1398, %v1329
        %v1415 = vadd.f32 %v1399, %v1331
        %v1416 = vadd.f32 %v1400, %v1382
        %v1417 = vadd.f32 %v1401, %v1384
        %v1418 = vadd.f32 %v1402, %v1333
        %v1419 = vadd.f32 %v1403, %v1335
        %v1420 = vadd.f32 %v1404, %v1386
        %v1421 = vadd.f32 %v1405, %v1388
        %1422 = vst [vmem:[#allocation2] sm:$0xff] %v1406
        %1423 = vst [vmem:[#allocation2 + $0x8] sm:$0xff] %v1407
        %1424 = vst [vmem:[#allocation2 + $0x10] sm:$0xff] %v1408
        %1425 = vst [vmem:[#allocation2 + $0x18] sm:$0xff] %v1409
        %1426 = vst [vmem:[#allocation2 + $0x20] sm:$0xff] %v1410
        %1427 = vst [vmem:[#allocation2 + $0x28] sm:$0xff] %v1411
        %1428 = vst [vmem:[#allocation2 + $0x30] sm:$0xff] %v1412
        %1429 = vst [vmem:[#allocation2 + $0x38] sm:$0xff] %v1413
        %1430 = vst [vmem:[#allocation2 + $0x40] sm:$0xff] %v1414
        %1431 = vst [vmem:[#allocation2 + $0x48] sm:$0xff] %v1415
        %1432 = vst [vmem:[#allocation2 + $0x50] sm:$0xff] %v1416
        %1433 = vst [vmem:[#allocation2 + $0x58] sm:$0xff] %v1417
        %1434 = vst [vmem:[#allocation2 + $0x60] sm:$0xff] %v1418
        %1435 = vst [vmem:[#allocation2 + $0x68] sm:$0xff] %v1419
        %1436 = vst [vmem:[#allocation2 + $0x70] sm:$0xff] %v1420
        %1437 = vst [vmem:[#allocation2 + $0x78] sm:$0xff] %v1421
        %1438 = vmatprep.subr.bf16.mxu0 0
        %1439 = vmatpush1.bf16.msra.mxu0 %v1089
        %1440 = vmatprep.subr.bf16.mxu0 0
        %1441 = vmatpush1.bf16.msra.mxu0 %v1090
        %1442 = vmatprep.subr.bf16.mxu0 0
        %1443 = vmatpush1.bf16.msra.mxu0 0
        %1444 = vmatprep.subr.bf16.mxu0 0
        %1445 = vmatpush1.bf16.msra.mxu0 0
        %1446 = vmatprep.subr.bf16.mxu0 0
        %1447 = vmatpush1.bf16.msra.mxu0 0
        %1448 = vmatprep.subr.bf16.mxu0 0
        %1449 = vmatpush1.bf16.msra.mxu0 0
        %1450 = vmatprep.subr.bf16.mxu0 0
        %1451 = vmatpush1.bf16.msra.mxu0 0
        %1452 = vmatprep.subr.bf16.mxu0 0
        %1453 = vmatpush1.bf16.msra.mxu0 0
        %1454 = vmatprep.subr.bf16.mxu0 0
        %1455 = vmatpush1.bf16.msra.mxu0 0
        %1456 = vmatprep.subr.bf16.mxu0 0
        %1457 = vmatpush1.bf16.msra.mxu0 0
        %1458 = vmatprep.subr.bf16.mxu0 0
        %1459 = vmatpush1.bf16.msra.mxu0 0
        %1460 = vmatprep.subr.bf16.mxu0 0
        %1461 = vmatpush1.bf16.msra.mxu0 0
        %1462 = vmatprep.subr.bf16.mxu0 0
        %1463 = vmatpush1.bf16.msra.mxu0 0
        %1464 = vmatprep.subr.bf16.mxu0 0
        %1465 = vmatpush1.bf16.msra.mxu0 0
        %1466 = vmatprep.subr.bf16.mxu0 0
        %1467 = vmatpush1.bf16.msra.mxu0 0
        %1468 = vmatprep.subr.bf16.mxu0 0
        %1469 = vmatpush1.bf16.msra.mxu0 0
        %1470 = vmatprep.mubr.bf16.mxu0 0
        %1471 = vmatmul.mubr.bf16.gmra.mrb[0].mxu0 %v1035
        %v1472 = vpop.f32.mrb[0].mxu0
        %v1473 = vadd.f32 0.0, %v1472
        %v1474 = vpop.f32.mrb[0].mxu0
        %v1475 = vpop.f32.mrb[0].mxu0
        %v1476 = vadd.f32 0.0, %v1475
        %v1477 = vpop.f32.mrb[0].mxu0
        %1478 = vmatprep.mubr.bf16.mxu0 0
        %1479 = vmatmul.mubr.bf16.gmra.mrb[0].mxu0 %v1038
        %v1480 = vpop.f32.mrb[0].mxu0
        %v1481 = vadd.f32 0.0, %v1480
        %v1482 = vpop.f32.mrb[0].mxu0
        %v1483 = vpop.f32.mrb[0].mxu0
        %v1484 = vadd.f32 0.0, %v1483
        %v1485 = vpop.f32.mrb[0].mxu0
        %1486 = vdwg.mxu0
        %v1487 = vpack.c.bf16 %v1476, %v1473
        %v1488 = vpack.c.bf16 %v1484, %v1481
        %s1489 = scalar_lea.vmem [#allocation8], 768
        %v1490 = vld [vmem:[%s1489] sm:$0xff]
        %v1491 = vld [vmem:[%s1489 + $0x8] sm:$0xff]
        %v1492 = vld [vmem:[%s1489 + $0x10] sm:$0xff]
        %v1493 = vld [vmem:[%s1489 + $0x18] sm:$0xff]
        %v1494 = vld [vmem:[%s1489 + $0x20] sm:$0xff]
        %v1495 = vld [vmem:[%s1489 + $0x28] sm:$0xff]
        %v1496 = vld [vmem:[%s1489 + $0x30] sm:$0xff]
        %v1497 = vld [vmem:[%s1489 + $0x38] sm:$0xff]
        %v1498 = vld [vmem:[%s1489 + $0x40] sm:$0xff]
        %v1499 = vld [vmem:[%s1489 + $0x48] sm:$0xff]
        %v1500 = vld [vmem:[%s1489 + $0x50] sm:$0xff]
        %v1501 = vld [vmem:[%s1489 + $0x58] sm:$0xff]
        %v1502 = vld [vmem:[%s1489 + $0x60] sm:$0xff]
        %v1503 = vld [vmem:[%s1489 + $0x68] sm:$0xff]
        %v1504 = vld [vmem:[%s1489 + $0x70] sm:$0xff]
        %v1505 = vld [vmem:[%s1489 + $0x78] sm:$0xff]
        %v1506 = vld [vmem:[%s1489 + $0x80] sm:$0xff]
        %v1507 = vld [vmem:[%s1489 + $0x88] sm:$0xff]
        %v1508 = vld [vmem:[%s1489 + $0x90] sm:$0xff]
        %v1509 = vld [vmem:[%s1489 + $0x98] sm:$0xff]
        %v1510 = vld [vmem:[%s1489 + $0xa0] sm:$0xff]
        %v1511 = vld [vmem:[%s1489 + $0xa8] sm:$0xff]
        %v1512 = vld [vmem:[%s1489 + $0xb0] sm:$0xff]
        %v1513 = vld [vmem:[%s1489 + $0xb8] sm:$0xff]
        %v1514 = vld [vmem:[%s1489 + $0xc0] sm:$0xff]
        %v1515 = vld [vmem:[%s1489 + $0xc8] sm:$0xff]
        %v1516 = vld [vmem:[%s1489 + $0xd0] sm:$0xff]
        %v1517 = vld [vmem:[%s1489 + $0xd8] sm:$0xff]
        %v1518 = vld [vmem:[%s1489 + $0xe0] sm:$0xff]
        %v1519 = vld [vmem:[%s1489 + $0xe8] sm:$0xff]
        %v1520 = vld [vmem:[%s1489 + $0xf0] sm:$0xff]
        %v1521 = vld [vmem:[%s1489 + $0xf8] sm:$0xff]
        %v1554 = vunpack.c.l.b16 %v1490
        %v1555 = vunpack.c.h.b16 %v1490
        %v1556 = vunpack.c.l.b16 %v1491
        %v1557 = vunpack.c.h.b16 %v1491
        %v1558 = vunpack.c.l.b16 %v1492
        %v1559 = vunpack.c.h.b16 %v1492
        %v1560 = vunpack.c.l.b16 %v1493
        %v1561 = vunpack.c.h.b16 %v1493
        %v1562 = vunpack.c.l.b16 %v1494
        %v1563 = vunpack.c.h.b16 %v1494
        %v1564 = vunpack.c.l.b16 %v1495
        %v1565 = vunpack.c.h.b16 %v1495
        %v1566 = vunpack.c.l.b16 %v1496
        %v1567 = vunpack.c.h.b16 %v1496
        %v1568 = vunpack.c.l.b16 %v1497
        %v1569 = vunpack.c.h.b16 %v1497
        %v1570 = vunpack.c.l.b16 %v1498
        %v1571 = vunpack.c.h.b16 %v1498
        %v1572 = vunpack.c.l.b16 %v1499
        %v1573 = vunpack.c.h.b16 %v1499
        %v1574 = vunpack.c.l.b16 %v1500
        %v1575 = vunpack.c.h.b16 %v1500
        %v1576 = vunpack.c.l.b16 %v1501
        %v1577 = vunpack.c.h.b16 %v1501
        %v1578 = vunpack.c.l.b16 %v1502
        %v1579 = vunpack.c.h.b16 %v1502
        %v1580 = vunpack.c.l.b16 %v1503
        %v1581 = vunpack.c.h.b16 %v1503
        %v1582 = vunpack.c.l.b16 %v1504
        %v1583 = vunpack.c.h.b16 %v1504
        %v1584 = vunpack.c.l.b16 %v1505
        %v1585 = vunpack.c.h.b16 %v1505
        %v1586 = vunpack.c.l.b16 %v1506
        %v1587 = vunpack.c.h.b16 %v1506
        %v1588 = vunpack.c.l.b16 %v1507
        %v1589 = vunpack.c.h.b16 %v1507
        %v1590 = vunpack.c.l.b16 %v1508
        %v1591 = vunpack.c.h.b16 %v1508
        %v1592 = vunpack.c.l.b16 %v1509
        %v1593 = vunpack.c.h.b16 %v1509
        %v1594 = vunpack.c.l.b16 %v1510
        %v1595 = vunpack.c.h.b16 %v1510
        %v1596 = vunpack.c.l.b16 %v1511
        %v1597 = vunpack.c.h.b16 %v1511
        %v1598 = vunpack.c.l.b16 %v1512
        %v1599 = vunpack.c.h.b16 %v1512
        %v1600 = vunpack.c.l.b16 %v1513
        %v1601 = vunpack.c.h.b16 %v1513
        %v1602 = vunpack.c.l.b16 %v1514
        %v1603 = vunpack.c.h.b16 %v1514
        %v1604 = vunpack.c.l.b16 %v1515
        %v1605 = vunpack.c.h.b16 %v1515
        %v1606 = vunpack.c.l.b16 %v1516
        %v1607 = vunpack.c.h.b16 %v1516
        %v1608 = vunpack.c.l.b16 %v1517
        %v1609 = vunpack.c.h.b16 %v1517
        %v1610 = vunpack.c.l.b16 %v1518
        %v1611 = vunpack.c.h.b16 %v1518
        %v1612 = vunpack.c.l.b16 %v1519
        %v1613 = vunpack.c.h.b16 %v1519
        %v1614 = vunpack.c.l.b16 %v1520
        %v1615 = vunpack.c.h.b16 %v1520
        %v1616 = vunpack.c.l.b16 %v1521
        %v1617 = vunpack.c.h.b16 %v1521
        %v1618 = vpack.c.b16 %v1558, %v1554
        %v1619 = vpack.c.b16 %v1559, %v1555
        %v1620 = vpack.c.b16 %v1560, %v1556
        %v1621 = vpack.c.b16 %v1561, %v1557
        %v1622 = vpack.c.b16 %v1566, %v1562
        %v1623 = vpack.c.b16 %v1567, %v1563
        %v1624 = vpack.c.b16 %v1568, %v1564
        %v1625 = vpack.c.b16 %v1569, %v1565
        %v1626 = vpack.c.b16 %v1574, %v1570
        %v1627 = vpack.c.b16 %v1575, %v1571
        %v1628 = vpack.c.b16 %v1576, %v1572
        %v1629 = vpack.c.b16 %v1577, %v1573
        %v1630 = vpack.c.b16 %v1582, %v1578
        %v1631 = vpack.c.b16 %v1583, %v1579
        %v1632 = vpack.c.b16 %v1584, %v1580
        %v1633 = vpack.c.b16 %v1585, %v1581
        %v1634 = vpack.c.b16 %v1590, %v1586
        %v1635 = vpack.c.b16 %v1591, %v1587
        %v1636 = vpack.c.b16 %v1592, %v1588
        %v1637 = vpack.c.b16 %v1593, %v1589
        %v1638 = vpack.c.b16 %v1598, %v1594
        %v1639 = vpack.c.b16 %v1599, %v1595
        %v1640 = vpack.c.b16 %v1600, %v1596
        %v1641 = vpack.c.b16 %v1601, %v1597
        %v1642 = vpack.c.b16 %v1606, %v1602
        %v1643 = vpack.c.b16 %v1607, %v1603
        %v1644 = vpack.c.b16 %v1608, %v1604
        %v1645 = vpack.c.b16 %v1609, %v1605
        %v1646 = vpack.c.b16 %v1614, %v1610
        %v1647 = vpack.c.b16 %v1615, %v1611
        %v1648 = vpack.c.b16 %v1616, %v1612
        %v1649 = vpack.c.b16 %v1617, %v1613
        %1682 = vmatprep.subr.bf16.mxu0 %v1619
        %1683 = vmatpush1.bf16.msra.mxu0 %v1618
        %1684 = vmatprep.subr.bf16.mxu0 %v1623
        %1685 = vmatpush1.bf16.msra.mxu0 %v1622
        %1686 = vmatprep.subr.bf16.mxu0 %v1627
        %1687 = vmatpush1.bf16.msra.mxu0 %v1626
        %1688 = vmatprep.subr.bf16.mxu0 %v1631
        %1689 = vmatpush1.bf16.msra.mxu0 %v1630
        %1690 = vmatprep.subr.bf16.mxu0 %v1635
        %1691 = vmatpush1.bf16.msra.mxu0 %v1634
        %1692 = vmatprep.subr.bf16.mxu0 %v1639
        %1693 = vmatpush1.bf16.msra.mxu0 %v1638
        %1694 = vmatprep.subr.bf16.mxu0 %v1643
        %1695 = vmatpush1.bf16.msra.mxu0 %v1642
        %1696 = vmatprep.subr.bf16.mxu0 %v1647
        %1697 = vmatpush1.bf16.msra.mxu0 %v1646
        %1698 = vmatprep.subr.bf16.mxu0 0
        %1699 = vmatpush1.bf16.msra.mxu0 0
        %1700 = vmatprep.subr.bf16.mxu0 0
        %1701 = vmatpush1.bf16.msra.mxu0 0
        %1702 = vmatprep.subr.bf16.mxu0 0
        %1703 = vmatpush1.bf16.msra.mxu0 0
        %1704 = vmatprep.subr.bf16.mxu0 0
        %1705 = vmatpush1.bf16.msra.mxu0 0
        %1706 = vmatprep.subr.bf16.mxu0 0
        %1707 = vmatpush1.bf16.msra.mxu0 0
        %1708 = vmatprep.subr.bf16.mxu0 0
        %1709 = vmatpush1.bf16.msra.mxu0 0
        %1710 = vmatprep.subr.bf16.mxu0 0
        %1711 = vmatpush1.bf16.msra.mxu0 0
        %1712 = vmatprep.subr.bf16.mxu0 0
        %1713 = vmatpush1.bf16.msra.mxu0 0
        %1714 = vmatprep.mubr.bf16.mxu0 0
        %1715 = vmatmul.mubr.bf16.gmra.mrb[0].mxu0 %v1487
        %v1716 = vpop.f32.mrb[0].mxu0
        %v1717 = vadd.f32 0.0, %v1716
        %v1718 = vpop.f32.mrb[0].mxu0
        %v1719 = vadd.f32 0.0, %v1718
        %v1720 = vpop.f32.mrb[0].mxu0
        %v1721 = vadd.f32 0.0, %v1720
        %v1722 = vpop.f32.mrb[0].mxu0
        %v1723 = vadd.f32 0.0, %v1722
        %1724 = vmatprep.mubr.bf16.mxu0 0
        %1725 = vmatmul.mubr.bf16.gmra.mrb[0].mxu0 %v1488
        %v1726 = vpop.f32.mrb[0].mxu0
        %v1727 = vadd.f32 0.0, %v1726
        %v1728 = vpop.f32.mrb[0].mxu0
        %v1729 = vadd.f32 0.0, %v1728
        %v1730 = vpop.f32.mrb[0].mxu0
        %v1731 = vadd.f32 0.0, %v1730
        %v1732 = vpop.f32.mrb[0].mxu0
        %v1733 = vadd.f32 0.0, %v1732
        %1734 = vdwg.mxu0
        %1735 = vmatprep.subr.bf16.mxu0 %v1621
        %1736 = vmatpush1.bf16.msra.mxu0 %v1620
        %1737 = vmatprep.subr.bf16.mxu0 %v1625
        %1738 = vmatpush1.bf16.msra.mxu0 %v1624
        %1739 = vmatprep.subr.bf16.mxu0 %v1629
        %1740 = vmatpush1.bf16.msra.mxu0 %v1628
        %1741 = vmatprep.subr.bf16.mxu0 %v1633
        %1742 = vmatpush1.bf16.msra.mxu0 %v1632
        %1743 = vmatprep.subr.bf16.mxu0 %v1637
        %1744 = vmatpush1.bf16.msra.mxu0 %v1636
        %1745 = vmatprep.subr.bf16.mxu0 %v1641
        %1746 = vmatpush1.bf16.msra.mxu0 %v1640
        %1747 = vmatprep.subr.bf16.mxu0 %v1645
        %1748 = vmatpush1.bf16.msra.mxu0 %v1644
        %1749 = vmatprep.subr.bf16.mxu0 %v1649
        %1750 = vmatpush1.bf16.msra.mxu0 %v1648
        %1751 = vmatprep.subr.bf16.mxu0 0
        %1752 = vmatpush1.bf16.msra.mxu0 0
        %1753 = vmatprep.subr.bf16.mxu0 0
        %1754 = vmatpush1.bf16.msra.mxu0 0
        %1755 = vmatprep.subr.bf16.mxu0 0
        %1756 = vmatpush1.bf16.msra.mxu0 0
        %1757 = vmatprep.subr.bf16.mxu0 0
        %1758 = vmatpush1.bf16.msra.mxu0 0
        %1759 = vmatprep.subr.bf16.mxu0 0
        %1760 = vmatpush1.bf16.msra.mxu0 0
        %1761 = vmatprep.subr.bf16.mxu0 0
        %1762 = vmatpush1.bf16.msra.mxu0 0
        %1763 = vmatprep.subr.bf16.mxu0 0
        %1764 = vmatpush1.bf16.msra.mxu0 0
        %1765 = vmatprep.subr.bf16.mxu0 0
        %1766 = vmatpush1.bf16.msra.mxu0 0
        %1767 = vmatprep.mubr.bf16.mxu0 0
        %1768 = vmatmul.mubr.bf16.gmra.mrb[0].mxu0 %v1487
        %v1769 = vpop.f32.mrb[0].mxu0
        %v1770 = vadd.f32 0.0, %v1769
        %v1771 = vpop.f32.mrb[0].mxu0
        %v1772 = vadd.f32 0.0, %v1771
        %v1773 = vpop.f32.mrb[0].mxu0
        %v1774 = vadd.f32 0.0, %v1773
        %v1775 = vpop.f32.mrb[0].mxu0
        %v1776 = vadd.f32 0.0, %v1775
        %1777 = vmatprep.mubr.bf16.mxu0 0
        %1778 = vmatmul.mubr.bf16.gmra.mrb[0].mxu0 %v1488
        %v1779 = vpop.f32.mrb[0].mxu0
        %v1780 = vadd.f32 0.0, %v1779
        %v1781 = vpop.f32.mrb[0].mxu0
        %v1782 = vadd.f32 0.0, %v1781
        %v1783 = vpop.f32.mrb[0].mxu0
        %v1784 = vadd.f32 0.0, %v1783
        %v1785 = vpop.f32.mrb[0].mxu0
        %v1786 = vadd.f32 0.0, %v1785
        %1787 = vdwg.mxu0
        %v1788 = vld [vmem:[#allocation2] sm:$0xff]
        %v1789 = vld [vmem:[#allocation2 + $0x8] sm:$0xff]
        %v1790 = vld [vmem:[#allocation2 + $0x10] sm:$0xff]
        %v1791 = vld [vmem:[#allocation2 + $0x18] sm:$0xff]
        %v1792 = vld [vmem:[#allocation2 + $0x20] sm:$0xff]
        %v1793 = vld [vmem:[#allocation2 + $0x28] sm:$0xff]
        %v1794 = vld [vmem:[#allocation2 + $0x30] sm:$0xff]
        %v1795 = vld [vmem:[#allocation2 + $0x38] sm:$0xff]
        %v1796 = vld [vmem:[#allocation2 + $0x40] sm:$0xff]
        %v1797 = vld [vmem:[#allocation2 + $0x48] sm:$0xff]
        %v1798 = vld [vmem:[#allocation2 + $0x50] sm:$0xff]
        %v1799 = vld [vmem:[#allocation2 + $0x58] sm:$0xff]
        %v1800 = vld [vmem:[#allocation2 + $0x60] sm:$0xff]
        %v1801 = vld [vmem:[#allocation2 + $0x68] sm:$0xff]
        %v1802 = vld [vmem:[#allocation2 + $0x70] sm:$0xff]
        %v1803 = vld [vmem:[#allocation2 + $0x78] sm:$0xff]
        %v1804 = vadd.f32 %v1788, %v1717
        %v1805 = vadd.f32 %v1789, %v1719
        %v1806 = vadd.f32 %v1790, %v1770
        %v1807 = vadd.f32 %v1791, %v1772
        %v1808 = vadd.f32 %v1792, %v1721
        %v1809 = vadd.f32 %v1793, %v1723
        %v1810 = vadd.f32 %v1794, %v1774
        %v1811 = vadd.f32 %v1795, %v1776
        %v1812 = vadd.f32 %v1796, %v1727
        %v1813 = vadd.f32 %v1797, %v1729
        %v1814 = vadd.f32 %v1798, %v1780
        %v1815 = vadd.f32 %v1799, %v1782
        %v1816 = vadd.f32 %v1800, %v1731
        %v1817 = vadd.f32 %v1801, %v1733
        %v1818 = vadd.f32 %v1802, %v1784
        %v1819 = vadd.f32 %v1803, %v1786
        %1820 = vst [vmem:[#allocation2] sm:$0xff] %v1804
        %1821 = vst [vmem:[#allocation2 + $0x8] sm:$0xff] %v1805
        %1822 = vst [vmem:[#allocation2 + $0x10] sm:$0xff] %v1806
        %1823 = vst [vmem:[#allocation2 + $0x18] sm:$0xff] %v1807
        %1824 = vst [vmem:[#allocation2 + $0x20] sm:$0xff] %v1808
        %1825 = vst [vmem:[#allocation2 + $0x28] sm:$0xff] %v1809
        %1826 = vst [vmem:[#allocation2 + $0x30] sm:$0xff] %v1810
        %1827 = vst [vmem:[#allocation2 + $0x38] sm:$0xff] %v1811
        %1828 = vst [vmem:[#allocation2 + $0x40] sm:$0xff] %v1812
        %1829 = vst [vmem:[#allocation2 + $0x48] sm:$0xff] %v1813
        %1830 = vst [vmem:[#allocation2 + $0x50] sm:$0xff] %v1814
        %1831 = vst [vmem:[#allocation2 + $0x58] sm:$0xff] %v1815
        %1832 = vst [vmem:[#allocation2 + $0x60] sm:$0xff] %v1816
        %1833 = vst [vmem:[#allocation2 + $0x68] sm:$0xff] %v1817
        %1834 = vst [vmem:[#allocation2 + $0x70] sm:$0xff] %v1818
        %1835 = vst [vmem:[#allocation2 + $0x78] sm:$0xff] %v1819
        %v1836 = vld [vmem:[#allocation2] sm:$0xff]
        %v1837 = vld [vmem:[#allocation2 + $0x8] sm:$0xff]
        %v1838 = vld [vmem:[#allocation2 + $0x10] sm:$0xff]
        %v1839 = vld [vmem:[#allocation2 + $0x18] sm:$0xff]
        %v1840 = vld [vmem:[#allocation2 + $0x20] sm:$0xff]
        %v1841 = vld [vmem:[#allocation2 + $0x28] sm:$0xff]
        %v1842 = vld [vmem:[#allocation2 + $0x30] sm:$0xff]
        %v1843 = vld [vmem:[#allocation2 + $0x38] sm:$0xff]
        %v1844 = vld [vmem:[#allocation2 + $0x40] sm:$0xff]
        %v1845 = vld [vmem:[#allocation2 + $0x48] sm:$0xff]
        %v1846 = vld [vmem:[#allocation2 + $0x50] sm:$0xff]
        %v1847 = vld [vmem:[#allocation2 + $0x58] sm:$0xff]
        %v1848 = vld [vmem:[#allocation2 + $0x60] sm:$0xff]
        %v1849 = vld [vmem:[#allocation2 + $0x68] sm:$0xff]
        %v1850 = vld [vmem:[#allocation2 + $0x70] sm:$0xff]
        %v1851 = vld [vmem:[#allocation2 + $0x78] sm:$0xff]
        %1852 = vst [vmem:[%s216] sm:$0xff] %v1836
        %1853 = vst [vmem:[%s216 + $0x8] sm:$0xff] %v1837
        %1854 = vst [vmem:[%s216 + $0x10] sm:$0xff] %v1838
        %1855 = vst [vmem:[%s216 + $0x18] sm:$0xff] %v1839
        %1856 = vst [vmem:[%s216 + $0x20] sm:$0xff] %v1840
        %1857 = vst [vmem:[%s216 + $0x28] sm:$0xff] %v1841
        %1858 = vst [vmem:[%s216 + $0x30] sm:$0xff] %v1842
        %1859 = vst [vmem:[%s216 + $0x38] sm:$0xff] %v1843
        %1860 = vst [vmem:[%s216 + $0x40] sm:$0xff] %v1844
        %1861 = vst [vmem:[%s216 + $0x48] sm:$0xff] %v1845
        %1862 = vst [vmem:[%s216 + $0x50] sm:$0xff] %v1846
        %1863 = vst [vmem:[%s216 + $0x58] sm:$0xff] %v1847
        %1864 = vst [vmem:[%s216 + $0x60] sm:$0xff] %v1848
        %1865 = vst [vmem:[%s216 + $0x68] sm:$0xff] %v1849
        %1866 = vst [vmem:[%s216 + $0x70] sm:$0xff] %v1850
        %1867 = vst [vmem:[%s216 + $0x78] sm:$0xff] %v1851
        %s1868 = sand.u32 %s97, 1
        %s1869 = scalar_lea.sflag [#allocation5], %s1868
        %s1870 = sand.u32 %s97, 1
        %s1871 = smul.addr %s1870, 128
        %s1872 = scalar_lea.vmem [#allocation9], %s1871
        // Predicated region
        $region45: #{tpu_custom_call.1} parent=31 // pred_check
          %p1873 = pneg %p107
        $region46: #{tpu_custom_call.1} parent=31 // pred_check_branch
          %1875 = sbr.rel (%p1873) target = $region48
        $region47: #{tpu_custom_call.1} parent=31 // pred_region
          %s1876 = smul.u32 4, %s21
          %s1878 = ssub.s32 2048, 2048
          %1879 = vsyncadd %s1869, %s1878
          %s1880 = smul.addr %s1876, 128
          %s1881 = scalar_lea.hbm %s3, %s1880
          %s1882 = sshll.u32 %s1872, 4
          %s1883 = int_to_ptr.vmem [resolvable:$true] %s1882
          %1888 = dma.vmem_to_hbm [thread:$0]  %s1883, 2048, %s1881, %s1869, 512, 1024, 32
        $region48: #{tpu_custom_call.1} parent=31 // pred_fallthru
          _
      $region32: #{tpu_custom_call.1} parent=5 // pred_fallthru
        _
      %p1889 = scmp.le.s32.totalorder 2, %s16
      // Predicated region
      $region49: #{tpu_custom_call.1} parent=5 // pred_check
        %p1890 = pneg %p1889
      $region50: #{tpu_custom_call.1} parent=5 // pred_check_branch
        %1892 = sbr.rel (%p1890) target = $region52
      $region51: #{tpu_custom_call.1} parent=5 // pred_region
        %s1893 = ssub.s32 %s16, 2
        // Predicated region
        $region53: #{tpu_custom_call.1} parent=51 // pred_check
          %p1894 = pneg %p113
        $region54: #{tpu_custom_call.1} parent=51 // pred_check_branch
          %1896 = sbr.rel (%p1894) target = $region56
        $region55: #{tpu_custom_call.1} parent=51 // pred_region
          %s1897 = sand.u32 %s98, 1
          %s1898 = scalar_lea.sflag [#allocation5], %s1897
          %s1899 = sand.u32 %s98, 1
          %s1900 = smul.addr %s1899, 128
          %s1901 = scalar_lea.vmem [#allocation9], %s1900
          %1902 = dma.done %s1898, 2048
        $region56: #{tpu_custom_call.1} parent=51 // pred_fallthru
          _
      $region52: #{tpu_custom_call.1} parent=5 // pred_fallthru
        _
    $region6: #{tpu_custom_call.1} parent=1 // loop_footer
      %s20 = sadd.s32 1, %s16
    $region7: #{tpu_custom_call.1} parent=1 // loop_footer_branch
      %15 = sbr.rel target = $region3
    $region8: #{tpu_custom_call.1} parent=1 // loop_exit
      _
    %1903 = vsyncpa [#allocation4], 1
    %s1904 = scalar_lea.sflag [#allocation4], 1
    %1905 = vsyncpa %s1904, 1
    %1906 = vsyncpa [#allocation7], 1
    %s1907 = scalar_lea.sflag [#allocation7], 1
    %1908 = vsyncpa %s1907, 1
    %1909 = vsyncpa [#allocation5], 1
    %s1910 = scalar_lea.sflag [#allocation5], 1
    %1911 = vsyncpa %s1910, 1

</llo_original>
